<compile_context>
chip_gen: v7x
topology: tpu7x:2x2x1
jax: 0.10.0
libtpu: 0.0.40
codegen_flags: <defaults>
</compile_context>

<pallas_src>
import math

import jax
import jax.numpy as jnp
from jax.experimental import pallas as pl
from jax.experimental.pallas import tpu as pltpu

# ----- hyperparameters (small, consistent with the module) -----
B = 2           # batch
S = 8           # sequence length
H = 32          # hid_dim
NH = 4          # n_heads
HD = H // NH    # head_dim
NEG_BIG = 1e10  # magnitude of the masked_fill value (-1e10 in the module)


def mha_kernel(q_ref, k_ref, v_ref, mask_ref, wqkv_ref, bqkv_ref, wo_ref,
               bo_ref, x_out_ref, attn_out_ref):
    """
    q_ref/k_ref/v_ref: (B, S, H)      activations
    mask_ref:          (B, 1, S)      1.0 = attend, 0.0 = masked
    wqkv_ref:          (3*NH, H, HD)  per-head weights [wq*inv_scale | wk | wv]
    bqkv_ref:          (3*NH, 1, HD)  per-head biases  [bq*inv_scale | bk | bv]
    wo_ref:            (NH, HD, H)    fc_o weights regrouped per head
    bo_ref:            (1, H)
    x_out_ref:         (B, S, H)
    attn_out_ref:      (B, NH, S, S)
    """
    # Hoist parameter loads out of the (unrolled) batch loop.
    w_qkv = wqkv_ref[...]
    b_qkv = bqkv_ref[...]
    w_o = wo_ref[...]
    b_o = bo_ref[...]

    for b in range(B):  # static unroll, B == 2 (review: keep short static loop)
        # Head-batched LHS: rows [0:NH)=query, [NH:2NH)=key, [2NH:3NH)=value,
        # each broadcast over the head axis (matches wqkv_ref packing order).
        xh = jnp.concatenate(
            [jnp.broadcast_to(q_ref[b][None, :, :], (NH, S, H)),
             jnp.broadcast_to(k_ref[b][None, :, :], (NH, S, H)),
             jnp.broadcast_to(v_ref[b][None, :, :], (NH, S, H))], axis=0)

        # One batched projection: (3NH, S, H) x (3NH, H, HD) -> (3NH, S, HD).
        # 1/sqrt(HD) is already folded into the wq / bq slots of the weights.
        proj = jax.lax.dot_general(
            xh, w_qkv, (((2,), (1,)), ((0,), (0,))),
            preferred_element_type=jnp.float32) + b_qkv

        qh = proj[0:NH]            # (NH, S, HD)  (leading-axis slices: cheap)
        kh = proj[NH:2 * NH]       # (NH, S, HD)
        vh = proj[2 * NH:3 * NH]   # (NH, S, HD)

        # Head-batched Q @ K^T: contract head_dim, no materialized transpose.
        energy = jax.lax.dot_general(
            qh, kh, (((2,), (2,)), ((0,), (0,))),
            preferred_element_type=jnp.float32)          # (NH, S, S)

        # masked_fill(mask == 0, -1e10), one select for all heads.
        mask_b = jnp.broadcast_to(mask_ref[b].reshape(1, 1, S), (NH, S, S))
        energy = jnp.where(mask_b > 0.0, energy, -NEG_BIG)

        # Numerically-stable softmax over keys, exact division.
        energy = energy - jnp.max(energy, axis=-1, keepdims=True)
        p = jnp.exp(energy)
        attn = p / jnp.sum(p, axis=-1, keepdims=True)    # (NH, S, S)

        # One coalesced attention store per batch element.
        attn_out_ref[b] = attn

        # Head-batched attn @ V -> (NH, S, HD).
        ctx = jax.lax.dot_general(
            attn, vh, (((2,), (1,)), ((0,), (0,))),
            preferred_element_type=jnp.float32)

        # fc_o folded per head: (NH, S, HD) x (NH, HD, H) -> (NH, S, H),
        # then a cheap sum over the head axis (no lane concat of heads).
        out_h = jax.lax.dot_general(
            ctx, w_o, (((2,), (1,)), ((0,), (0,))),
            preferred_element_type=jnp.float32)
        x_out_ref[b] = jnp.sum(out_h, axis=0) + b_o


def pack_params(p):
    """One-time (parameter-init-time) repacking into head-batched layouts.

    Runs once outside the forward path, so it costs nothing per call.
    """
    inv_scale = 1.0 / math.sqrt(HD)

    def per_head_w(w):   # (H, H) -> (NH, H, HD): out column h*HD+d -> [h,:,d]
        return w.reshape(H, NH, HD).transpose(1, 0, 2)

    def per_head_b(bias):  # (1, H) -> (NH, 1, HD)
        return bias.reshape(1, NH, HD).transpose(1, 0, 2)

    wqkv = jnp.concatenate([per_head_w(p["wq"] * inv_scale),
                            per_head_w(p["wk"]),
                            per_head_w(p["wv"])], axis=0)      # (3NH, H, HD)
    bqkv = jnp.concatenate([per_head_b(p["bq"] * inv_scale),
                            per_head_b(p["bk"]),
                            per_head_b(p["bv"])], axis=0)      # (3NH, 1, HD)
    wo_h = p["wo"].reshape(NH, HD, H)                          # (NH, HD, H)
    return {"wqkv": wqkv, "bqkv": bqkv, "wo_h": wo_h, "bo": p["bo"]}


def mha_forward(query, key, value, mask, packed):
    """query/key/value: (B,S,H) f32; mask: (B,1,S) f32 (1 keep / 0 mask)."""
    out_shape = (jax.ShapeDtypeStruct((B, S, H), jnp.float32),
                 jax.ShapeDtypeStruct((B, NH, S, S), jnp.float32))

    # Single grid step: the whole problem (< 100 KB) lives in VMEM at once.
    # Every block equals the full array, so the (8,128) divisibility rule is
    # satisfied trivially and there is no per-step pipeline overhead.
    grid_spec = pltpu.PrefetchScalarGridSpec(
        num_scalar_prefetch=0,
        grid=(1,),
        in_specs=[
            pl.BlockSpec((B, S, H), lambda i: (0, 0, 0)),         # query
            pl.BlockSpec((B, S, H), lambda i: (0, 0, 0)),         # key
            pl.BlockSpec((B, S, H), lambda i: (0, 0, 0)),         # value
            pl.BlockSpec((B, 1, S), lambda i: (0, 0, 0)),         # mask
            pl.BlockSpec((3 * NH, H, HD), lambda i: (0, 0, 0)),   # wq|wk|wv per head
            pl.BlockSpec((3 * NH, 1, HD), lambda i: (0, 0, 0)),   # bq|bk|bv per head
            pl.BlockSpec((NH, HD, H), lambda i: (0, 0, 0)),       # wo per head
            pl.BlockSpec((1, H), lambda i: (0, 0)),               # bo
        ],
        out_specs=[
            pl.BlockSpec((B, S, H), lambda i: (0, 0, 0)),
            pl.BlockSpec((B, NH, S, S), lambda i: (0, 0, 0, 0)),
        ],
    )

    return pl.pallas_call(
        mha_kernel,
        out_shape=out_shape,
        grid_spec=grid_spec,
        compiler_params=pltpu.CompilerParams(
            dimension_semantics=("arbitrary",)),
    )(query, key, value, mask,
      packed["wqkv"], packed["bqkv"], packed["wo_h"], packed["bo"])


# ----- plain-JAX reference (matches the PyTorch module) -----
def ref_forward(query, key, value, mask, p):
    Q = query @ p["wq"] + p["bq"]
    K = key @ p["wk"] + p["bk"]
    V = value @ p["wv"] + p["bv"]
    Q = Q.reshape(B, S, NH, HD).transpose(0, 2, 1, 3)
    K = K.reshape(B, S, NH, HD).transpose(0, 2, 1, 3)
    V = V.reshape(B, S, NH, HD).transpose(0, 2, 1, 3)
    energy = jnp.einsum("bhqd,bhkd->bhqk", Q, K) / jnp.sqrt(jnp.float32(HD))
    energy = jnp.where(mask[:, :, None, :] > 0.0, energy, -NEG_BIG)
    attention = jax.nn.softmax(energy, axis=-1)
    x = jnp.einsum("bhqk,bhkd->bhqd", attention, V)
    x = x.transpose(0, 2, 1, 3).reshape(B, S, H)
    x = x @ p["wo"] + p["bo"]
    return x, attention


if __name__ == "__main__":
    key = jax.random.PRNGKey(0)
    ks = jax.random.split(key, 12)

    def nrm(k, shape, scale=0.05):
        return jax.random.normal(k, shape, jnp.float32) * scale

    params = {
        "wq": nrm(ks[0], (H, H)), "bq": nrm(ks[1], (1, H)),
        "wk": nrm(ks[2], (H, H)), "bk": nrm(ks[3], (1, H)),
        "wv": nrm(ks[4], (H, H)), "bv": nrm(ks[5], (1, H)),
        "wo": nrm(ks[6], (H, H)), "bo": nrm(ks[7], (1, H)),
    }
    # Init-time packing (runs exactly once; not part of the forward path).
    packed = pack_params(params)

    query = jax.random.normal(ks[8], (B, S, H), jnp.float32)
    key_in = jax.random.normal(ks[9], (B, S, H), jnp.float32)
    value = jax.random.normal(ks[10], (B, S, H), jnp.float32)

    # mask: 1 = attend, 0 = masked. Mask the last 2 key positions of batch 1.
    mask = jnp.ones((B, 1, S), jnp.float32)
    mask = mask.at[1, 0, S - 2:].set(0.0)

    x_out, attn_out = mha_forward(query, key_in, value, mask, packed)
    x_out = jax.block_until_ready(x_out)
    attn_out = jax.block_until_ready(attn_out)

    x_ref, attn_ref = ref_forward(query, key_in, value, mask, params)
    # The kernel softmax uses exact division; the tolerance only covers MXU
    # precision-mode differences between the in-kernel dots and the XLA
    # reference einsums (both f32 inputs, default matmul precision).
    assert jnp.allclose(x_out, x_ref, atol=1e-3, rtol=1e-3), (
        f"x max abs err {jnp.max(jnp.abs(x_out - x_ref))}")
    assert jnp.allclose(attn_out, attn_ref, atol=1e-3, rtol=1e-3), (
        f"attn max abs err {jnp.max(jnp.abs(attn_out - attn_ref))}")
    print("KERNEL_OK")
</pallas_src>

<mosaic_0001>
module attributes {stable_mosaic.version = 11 : i64} {
  func.func @mha_kernel(%arg0: i32, %arg1: memref<2x8x32xf32, #tpu.memory_space<vmem>>, %arg2: memref<2x8x32xf32, #tpu.memory_space<vmem>>, %arg3: memref<2x8x32xf32, #tpu.memory_space<vmem>>, %arg4: memref<2x1x8xf32, #tpu.memory_space<vmem>>, %arg5: memref<12x32x8xf32, #tpu.memory_space<vmem>>, %arg6: memref<12x1x8xf32, #tpu.memory_space<vmem>>, %arg7: memref<4x8x32xf32, #tpu.memory_space<vmem>>, %arg8: memref<1x32xf32, #tpu.memory_space<vmem>>, %arg9: memref<2x8x32xf32, #tpu.memory_space<vmem>>, %arg10: memref<2x4x8x8xf32, #tpu.memory_space<vmem>>) attributes {dimension_semantics = [#tpu.dimension_semantics<arbitrary>], iteration_bounds = array<i64: 1>, scalar_prefetch = 0 : i64, scratch_operands = 0 : i64, tpu.core_type = #tpu.core_type<tc>, window_params = [{pipeline_mode = #tpu.pipeline_mode<synchronous>, transform_indices = @transform_0, window_bounds = array<i64: 2, 8, 32>}, {pipeline_mode = #tpu.pipeline_mode<synchronous>, transform_indices = @transform_1, window_bounds = array<i64: 2, 8, 32>}, {pipeline_mode = #tpu.pipeline_mode<synchronous>, transform_indices = @transform_2, window_bounds = array<i64: 2, 8, 32>}, {pipeline_mode = #tpu.pipeline_mode<synchronous>, transform_indices = @transform_3, window_bounds = array<i64: 2, 1, 8>}, {pipeline_mode = #tpu.pipeline_mode<synchronous>, transform_indices = @transform_4, window_bounds = array<i64: 12, 32, 8>}, {pipeline_mode = #tpu.pipeline_mode<synchronous>, transform_indices = @transform_5, window_bounds = array<i64: 12, 1, 8>}, {pipeline_mode = #tpu.pipeline_mode<synchronous>, transform_indices = @transform_6, window_bounds = array<i64: 4, 8, 32>}, {pipeline_mode = #tpu.pipeline_mode<synchronous>, transform_indices = @transform_7, window_bounds = array<i64: 1, 32>}, {pipeline_mode = #tpu.pipeline_mode<synchronous>, transform_indices = @transform_8, window_bounds = array<i64: 2, 8, 32>}, {pipeline_mode = #tpu.pipeline_mode<synchronous>, transform_indices = @transform_9, window_bounds = array<i64: 2, 4, 8, 8>}]} {
    %c0 = arith.constant 0 : index
    %c0_0 = arith.constant 0 : index
    %c0_1 = arith.constant 0 : index
    %0 = vector.load %arg5[%c0, %c0_0, %c0_1] : memref<12x32x8xf32, #tpu.memory_space<vmem>>, vector<12x32x8xf32>
    %c0_2 = arith.constant 0 : index
    %c0_3 = arith.constant 0 : index
    %c0_4 = arith.constant 0 : index
    %1 = vector.load %arg6[%c0_2, %c0_3, %c0_4] : memref<12x1x8xf32, #tpu.memory_space<vmem>>, vector<12x1x8xf32>
    %c0_5 = arith.constant 0 : index
    %c0_6 = arith.constant 0 : index
    %c0_7 = arith.constant 0 : index
    %2 = vector.load %arg7[%c0_5, %c0_6, %c0_7] : memref<4x8x32xf32, #tpu.memory_space<vmem>>, vector<4x8x32xf32>
    %c0_8 = arith.constant 0 : index
    %c0_9 = arith.constant 0 : index
    %3 = vector.load %arg8[%c0_8, %c0_9] : memref<1x32xf32, #tpu.memory_space<vmem>>, vector<1x32xf32>
    %c0_10 = arith.constant 0 : index
    %c0_11 = arith.constant 0 : index
    %c0_12 = arith.constant 0 : index
    %4 = vector.load %arg1[%c0_10, %c0_11, %c0_12] : memref<2x8x32xf32, #tpu.memory_space<vmem>>, vector<1x8x32xf32>
    %5 = vector.shape_cast %4 : vector<1x8x32xf32> to vector<8x32xf32>
    %6 = vector.shape_cast %5 : vector<8x32xf32> to vector<1x8x32xf32>
    %7 = vector.shape_cast %6 : vector<1x8x32xf32> to vector<1x8x32xf32>
    %8 = vector.broadcast %7 : vector<1x8x32xf32> to vector<4x8x32xf32>
    %c0_13 = arith.constant 0 : index
    %c0_14 = arith.constant 0 : index
    %c0_15 = arith.constant 0 : index
    %9 = vector.load %arg2[%c0_13, %c0_14, %c0_15] : memref<2x8x32xf32, #tpu.memory_space<vmem>>, vector<1x8x32xf32>
    %10 = vector.shape_cast %9 : vector<1x8x32xf32> to vector<8x32xf32>
    %11 = vector.shape_cast %10 : vector<8x32xf32> to vector<1x8x32xf32>
    %12 = vector.shape_cast %11 : vector<1x8x32xf32> to vector<1x8x32xf32>
    %13 = vector.broadcast %12 : vector<1x8x32xf32> to vector<4x8x32xf32>
    %c0_16 = arith.constant 0 : index
    %c0_17 = arith.constant 0 : index
    %c0_18 = arith.constant 0 : index
    %14 = vector.load %arg3[%c0_16, %c0_17, %c0_18] : memref<2x8x32xf32, #tpu.memory_space<vmem>>, vector<1x8x32xf32>
    %15 = vector.shape_cast %14 : vector<1x8x32xf32> to vector<8x32xf32>
    %16 = vector.shape_cast %15 : vector<8x32xf32> to vector<1x8x32xf32>
    %17 = vector.shape_cast %16 : vector<1x8x32xf32> to vector<1x8x32xf32>
    %18 = vector.broadcast %17 : vector<1x8x32xf32> to vector<4x8x32xf32>
    %19 = tpu.concatenate %8, %13, %18 in 0 : vector<4x8x32xf32>, vector<4x8x32xf32>, vector<4x8x32xf32> -> vector<12x8x32xf32>
    %cst = arith.constant dense<0.000000e+00> : vector<12x8x8xf32>
    %20 = tpu.matmul %19, %0, %cst {dimension_numbers = #tpu.dot_dimension_numbers<[2], [1], [1], [2], [0, 0, 0, 1, 1, 2], [0], [0]>} : vector<12x8x32xf32>, vector<12x32x8xf32>, vector<12x8x8xf32> -> vector<12x8x8xf32>
    %21 = vector.broadcast %1 : vector<12x1x8xf32> to vector<12x8x8xf32>
    %22 = arith.addf %20, %21 : vector<12x8x8xf32>
    %23 = vector.extract_strided_slice %22 {offsets = [0, 0, 0], sizes = [4, 8, 8], strides = [1, 1, 1]} : vector<12x8x8xf32> to vector<4x8x8xf32>
    %24 = vector.extract_strided_slice %22 {offsets = [4, 0, 0], sizes = [4, 8, 8], strides = [1, 1, 1]} : vector<12x8x8xf32> to vector<4x8x8xf32>
    %25 = vector.extract_strided_slice %22 {offsets = [8, 0, 0], sizes = [4, 8, 8], strides = [1, 1, 1]} : vector<12x8x8xf32> to vector<4x8x8xf32>
    %cst_19 = arith.constant dense<0.000000e+00> : vector<4x8x8xf32>
    %26 = tpu.matmul %23, %24, %cst_19 {dimension_numbers = #tpu.dot_dimension_numbers<[2], [2], [1], [1], [0, 0, 0, 1, 1, 1], [0], [0]>} : vector<4x8x8xf32>, vector<4x8x8xf32>, vector<4x8x8xf32> -> vector<4x8x8xf32>
    %c0_20 = arith.constant 0 : index
    %c0_21 = arith.constant 0 : index
    %c0_22 = arith.constant 0 : index
    %27 = vector.load %arg4[%c0_20, %c0_21, %c0_22] : memref<2x1x8xf32, #tpu.memory_space<vmem>>, vector<1x1x8xf32>
    %28 = vector.shape_cast %27 : vector<1x1x8xf32> to vector<1x8xf32>
    %29 = vector.shape_cast %28 : vector<1x8xf32> to vector<1x1x8xf32>
    %30 = vector.shape_cast %29 : vector<1x1x8xf32> to vector<1x1x8xf32>
    %31 = vector.broadcast %30 : vector<1x1x8xf32> to vector<4x8x8xf32>
    %cst_23 = arith.constant 0.000000e+00 : f32
    %32 = vector.broadcast %cst_23 : f32 to vector<4x8x8xf32>
    %33 = arith.cmpf ogt, %31, %32 : vector<4x8x8xf32>
    %cst_24 = arith.constant -1.000000e+10 : f32
    %34 = vector.broadcast %cst_24 : f32 to vector<4x8x8xf32>
    %35 = arith.select %33, %26, %34 : vector<4x8x8xi1>, vector<4x8x8xf32>
    %cst_25 = arith.constant dense<0xFF800000> : vector<4x8xf32>
    %36 = vector.multi_reduction <maximumf>, %35, %cst_25 [2] : vector<4x8x8xf32> to vector<4x8xf32>
    %37 = vector.shape_cast %36 : vector<4x8xf32> to vector<4x8x1xf32>
    %38 = vector.broadcast %37 : vector<4x8x1xf32> to vector<4x8x8xf32>
    %39 = arith.subf %35, %38 : vector<4x8x8xf32>
    %40 = math.exp %39 : vector<4x8x8xf32>
    %cst_26 = arith.constant dense<0.000000e+00> : vector<4x8xf32>
    %41 = vector.multi_reduction <add>, %40, %cst_26 [2] : vector<4x8x8xf32> to vector<4x8xf32>
    %42 = vector.shape_cast %41 : vector<4x8xf32> to vector<4x8x1xf32>
    %43 = vector.broadcast %42 : vector<4x8x1xf32> to vector<4x8x8xf32>
    %44 = arith.divf %40, %43 : vector<4x8x8xf32>
    %c0_27 = arith.constant 0 : index
    %c0_28 = arith.constant 0 : index
    %c0_29 = arith.constant 0 : index
    %c0_30 = arith.constant 0 : index
    %45 = vector.load %arg10[%c0_27, %c0_28, %c0_29, %c0_30] : memref<2x4x8x8xf32, #tpu.memory_space<vmem>>, vector<1x4x8x8xf32>
    %46 = vector.shape_cast %45 : vector<1x4x8x8xf32> to vector<4x8x8xf32>
    %47 = vector.shape_cast %44 : vector<4x8x8xf32> to vector<1x4x8x8xf32>
    tpu.vector_store %arg10[%c0_27, %c0_28, %c0_29, %c0_30], %47 {strides = array<i32>} : memref<2x4x8x8xf32, #tpu.memory_space<vmem>>, vector<1x4x8x8xf32>,
    %cst_31 = arith.constant dense<0.000000e+00> : vector<4x8x8xf32>
    %48 = tpu.matmul %44, %25, %cst_31 {dimension_numbers = #tpu.dot_dimension_numbers<[2], [1], [1], [2], [0, 0, 0, 1, 1, 2], [0], [0]>} : vector<4x8x8xf32>, vector<4x8x8xf32>, vector<4x8x8xf32> -> vector<4x8x8xf32>
    %cst_32 = arith.constant dense<0.000000e+00> : vector<4x8x32xf32>
    %49 = tpu.matmul %48, %2, %cst_32 {dimension_numbers = #tpu.dot_dimension_numbers<[2], [1], [1], [2], [0, 0, 0, 1, 1, 2], [0], [0]>} : vector<4x8x8xf32>, vector<4x8x32xf32>, vector<4x8x32xf32> -> vector<4x8x32xf32>
    %cst_33 = arith.constant dense<0.000000e+00> : vector<8x32xf32>
    %50 = vector.multi_reduction <add>, %49, %cst_33 [0] : vector<4x8x32xf32> to vector<8x32xf32>
    %51 = vector.broadcast %3 : vector<1x32xf32> to vector<8x32xf32>
    %52 = arith.addf %50, %51 : vector<8x32xf32>
    %c0_34 = arith.constant 0 : index
    %c0_35 = arith.constant 0 : index
    %c0_36 = arith.constant 0 : index
    %53 = vector.load %arg9[%c0_34, %c0_35, %c0_36] : memref<2x8x32xf32, #tpu.memory_space<vmem>>, vector<1x8x32xf32>
    %54 = vector.shape_cast %53 : vector<1x8x32xf32> to vector<8x32xf32>
    %55 = vector.shape_cast %52 : vector<8x32xf32> to vector<1x8x32xf32>
    tpu.vector_store %arg9[%c0_34, %c0_35, %c0_36], %55 {strides = array<i32>} : memref<2x8x32xf32, #tpu.memory_space<vmem>>, vector<1x8x32xf32>,
    %c1 = arith.constant 1 : index
    %c0_37 = arith.constant 0 : index
    %c0_38 = arith.constant 0 : index
    %56 = vector.load %arg1[%c1, %c0_37, %c0_38] : memref<2x8x32xf32, #tpu.memory_space<vmem>>, vector<1x8x32xf32>
    %57 = vector.shape_cast %56 : vector<1x8x32xf32> to vector<8x32xf32>
    %58 = vector.shape_cast %57 : vector<8x32xf32> to vector<1x8x32xf32>
    %59 = vector.shape_cast %58 : vector<1x8x32xf32> to vector<1x8x32xf32>
    %60 = vector.broadcast %59 : vector<1x8x32xf32> to vector<4x8x32xf32>
    %c1_39 = arith.constant 1 : index
    %c0_40 = arith.constant 0 : index
    %c0_41 = arith.constant 0 : index
    %61 = vector.load %arg2[%c1_39, %c0_40, %c0_41] : memref<2x8x32xf32, #tpu.memory_space<vmem>>, vector<1x8x32xf32>
    %62 = vector.shape_cast %61 : vector<1x8x32xf32> to vector<8x32xf32>
    %63 = vector.shape_cast %62 : vector<8x32xf32> to vector<1x8x32xf32>
    %64 = vector.shape_cast %63 : vector<1x8x32xf32> to vector<1x8x32xf32>
    %65 = vector.broadcast %64 : vector<1x8x32xf32> to vector<4x8x32xf32>
    %c1_42 = arith.constant 1 : index
    %c0_43 = arith.constant 0 : index
    %c0_44 = arith.constant 0 : index
    %66 = vector.load %arg3[%c1_42, %c0_43, %c0_44] : memref<2x8x32xf32, #tpu.memory_space<vmem>>, vector<1x8x32xf32>
    %67 = vector.shape_cast %66 : vector<1x8x32xf32> to vector<8x32xf32>
    %68 = vector.shape_cast %67 : vector<8x32xf32> to vector<1x8x32xf32>
    %69 = vector.shape_cast %68 : vector<1x8x32xf32> to vector<1x8x32xf32>
    %70 = vector.broadcast %69 : vector<1x8x32xf32> to vector<4x8x32xf32>
    %71 = tpu.concatenate %60, %65, %70 in 0 : vector<4x8x32xf32>, vector<4x8x32xf32>, vector<4x8x32xf32> -> vector<12x8x32xf32>
    %cst_45 = arith.constant dense<0.000000e+00> : vector<12x8x8xf32>
    %72 = tpu.matmul %71, %0, %cst_45 {dimension_numbers = #tpu.dot_dimension_numbers<[2], [1], [1], [2], [0, 0, 0, 1, 1, 2], [0], [0]>} : vector<12x8x32xf32>, vector<12x32x8xf32>, vector<12x8x8xf32> -> vector<12x8x8xf32>
    %73 = vector.broadcast %1 : vector<12x1x8xf32> to vector<12x8x8xf32>
    %74 = arith.addf %72, %73 : vector<12x8x8xf32>
    %75 = vector.extract_strided_slice %74 {offsets = [0, 0, 0], sizes = [4, 8, 8], strides = [1, 1, 1]} : vector<12x8x8xf32> to vector<4x8x8xf32>
    %76 = vector.extract_strided_slice %74 {offsets = [4, 0, 0], sizes = [4, 8, 8], strides = [1, 1, 1]} : vector<12x8x8xf32> to vector<4x8x8xf32>
    %77 = vector.extract_strided_slice %74 {offsets = [8, 0, 0], sizes = [4, 8, 8], strides = [1, 1, 1]} : vector<12x8x8xf32> to vector<4x8x8xf32>
    %cst_46 = arith.constant dense<0.000000e+00> : vector<4x8x8xf32>
    %78 = tpu.matmul %75, %76, %cst_46 {dimension_numbers = #tpu.dot_dimension_numbers<[2], [2], [1], [1], [0, 0, 0, 1, 1, 1], [0], [0]>} : vector<4x8x8xf32>, vector<4x8x8xf32>, vector<4x8x8xf32> -> vector<4x8x8xf32>
    %c1_47 = arith.constant 1 : index
    %c0_48 = arith.constant 0 : index
    %c0_49 = arith.constant 0 : index
    %79 = vector.load %arg4[%c1_47, %c0_48, %c0_49] : memref<2x1x8xf32, #tpu.memory_space<vmem>>, vector<1x1x8xf32>
    %80 = vector.shape_cast %79 : vector<1x1x8xf32> to vector<1x8xf32>
    %81 = vector.shape_cast %80 : vector<1x8xf32> to vector<1x1x8xf32>
    %82 = vector.shape_cast %81 : vector<1x1x8xf32> to vector<1x1x8xf32>
    %83 = vector.broadcast %82 : vector<1x1x8xf32> to vector<4x8x8xf32>
    %cst_50 = arith.constant 0.000000e+00 : f32
    %84 = vector.broadcast %cst_50 : f32 to vector<4x8x8xf32>
    %85 = arith.cmpf ogt, %83, %84 : vector<4x8x8xf32>
    %cst_51 = arith.constant -1.000000e+10 : f32
    %86 = vector.broadcast %cst_51 : f32 to vector<4x8x8xf32>
    %87 = arith.select %85, %78, %86 : vector<4x8x8xi1>, vector<4x8x8xf32>
    %cst_52 = arith.constant dense<0xFF800000> : vector<4x8xf32>
    %88 = vector.multi_reduction <maximumf>, %87, %cst_52 [2] : vector<4x8x8xf32> to vector<4x8xf32>
    %89 = vector.shape_cast %88 : vector<4x8xf32> to vector<4x8x1xf32>
    %90 = vector.broadcast %89 : vector<4x8x1xf32> to vector<4x8x8xf32>
    %91 = arith.subf %87, %90 : vector<4x8x8xf32>
    %92 = math.exp %91 : vector<4x8x8xf32>
    %cst_53 = arith.constant dense<0.000000e+00> : vector<4x8xf32>
    %93 = vector.multi_reduction <add>, %92, %cst_53 [2] : vector<4x8x8xf32> to vector<4x8xf32>
    %94 = vector.shape_cast %93 : vector<4x8xf32> to vector<4x8x1xf32>
    %95 = vector.broadcast %94 : vector<4x8x1xf32> to vector<4x8x8xf32>
    %96 = arith.divf %92, %95 : vector<4x8x8xf32>
    %c1_54 = arith.constant 1 : index
    %c0_55 = arith.constant 0 : index
    %c0_56 = arith.constant 0 : index
    %c0_57 = arith.constant 0 : index
    %97 = vector.load %arg10[%c1_54, %c0_55, %c0_56, %c0_57] : memref<2x4x8x8xf32, #tpu.memory_space<vmem>>, vector<1x4x8x8xf32>
    %98 = vector.shape_cast %97 : vector<1x4x8x8xf32> to vector<4x8x8xf32>
    %99 = vector.shape_cast %96 : vector<4x8x8xf32> to vector<1x4x8x8xf32>
    tpu.vector_store %arg10[%c1_54, %c0_55, %c0_56, %c0_57], %99 {strides = array<i32>} : memref<2x4x8x8xf32, #tpu.memory_space<vmem>>, vector<1x4x8x8xf32>,
    %cst_58 = arith.constant dense<0.000000e+00> : vector<4x8x8xf32>
    %100 = tpu.matmul %96, %77, %cst_58 {dimension_numbers = #tpu.dot_dimension_numbers<[2], [1], [1], [2], [0, 0, 0, 1, 1, 2], [0], [0]>} : vector<4x8x8xf32>, vector<4x8x8xf32>, vector<4x8x8xf32> -> vector<4x8x8xf32>
    %cst_59 = arith.constant dense<0.000000e+00> : vector<4x8x32xf32>
    %101 = tpu.matmul %100, %2, %cst_59 {dimension_numbers = #tpu.dot_dimension_numbers<[2], [1], [1], [2], [0, 0, 0, 1, 1, 2], [0], [0]>} : vector<4x8x8xf32>, vector<4x8x32xf32>, vector<4x8x32xf32> -> vector<4x8x32xf32>
    %cst_60 = arith.constant dense<0.000000e+00> : vector<8x32xf32>
    %102 = vector.multi_reduction <add>, %101, %cst_60 [0] : vector<4x8x32xf32> to vector<8x32xf32>
    %103 = vector.broadcast %3 : vector<1x32xf32> to vector<8x32xf32>
    %104 = arith.addf %102, %103 : vector<8x32xf32>
    %c1_61 = arith.constant 1 : index
    %c0_62 = arith.constant 0 : index
    %c0_63 = arith.constant 0 : index
    %105 = vector.load %arg9[%c1_61, %c0_62, %c0_63] : memref<2x8x32xf32, #tpu.memory_space<vmem>>, vector<1x8x32xf32>
    %106 = vector.shape_cast %105 : vector<1x8x32xf32> to vector<8x32xf32>
    %107 = vector.shape_cast %104 : vector<8x32xf32> to vector<1x8x32xf32>
    tpu.vector_store %arg9[%c1_61, %c0_62, %c0_63], %107 {strides = array<i32>} : memref<2x8x32xf32, #tpu.memory_space<vmem>>, vector<1x8x32xf32>,
    return
  }
  func.func @transform_0(%arg0: i32) -> (i32, i32, i32) {
    %c0_i32 = arith.constant 0 : i32
    %c0_i32_0 = arith.constant 0 : i32
    %c0_i32_1 = arith.constant 0 : i32
    %c0_i32_2 = arith.constant 0 : i32
    return %c0_i32, %c0_i32_0, %c0_i32_1 : i32, i32, i32
  }
  func.func @transform_1(%arg0: i32) -> (i32, i32, i32) {
    %c0_i32 = arith.constant 0 : i32
    %c0_i32_0 = arith.constant 0 : i32
    %c0_i32_1 = arith.constant 0 : i32
    %c0_i32_2 = arith.constant 0 : i32
    return %c0_i32, %c0_i32_0, %c0_i32_1 : i32, i32, i32
  }
  func.func @transform_2(%arg0: i32) -> (i32, i32, i32) {
    %c0_i32 = arith.constant 0 : i32
    %c0_i32_0 = arith.constant 0 : i32
    %c0_i32_1 = arith.constant 0 : i32
    %c0_i32_2 = arith.constant 0 : i32
    return %c0_i32, %c0_i32_0, %c0_i32_1 : i32, i32, i32
  }
  func.func @transform_3(%arg0: i32) -> (i32, i32, i32) {
    %c0_i32 = arith.constant 0 : i32
    %c0_i32_0 = arith.constant 0 : i32
    %c0_i32_1 = arith.constant 0 : i32
    %c0_i32_2 = arith.constant 0 : i32
    return %c0_i32, %c0_i32_0, %c0_i32_1 : i32, i32, i32
  }
  func.func @transform_4(%arg0: i32) -> (i32, i32, i32) {
    %c0_i32 = arith.constant 0 : i32
    %c0_i32_0 = arith.constant 0 : i32
    %c0_i32_1 = arith.constant 0 : i32
    %c0_i32_2 = arith.constant 0 : i32
    return %c0_i32, %c0_i32_0, %c0_i32_1 : i32, i32, i32
  }
  func.func @transform_5(%arg0: i32) -> (i32, i32, i32) {
    %c0_i32 = arith.constant 0 : i32
    %c0_i32_0 = arith.constant 0 : i32
    %c0_i32_1 = arith.constant 0 : i32
    %c0_i32_2 = arith.constant 0 : i32
    return %c0_i32, %c0_i32_0, %c0_i32_1 : i32, i32, i32
  }
  func.func @transform_6(%arg0: i32) -> (i32, i32, i32) {
    %c0_i32 = arith.constant 0 : i32
    %c0_i32_0 = arith.constant 0 : i32
    %c0_i32_1 = arith.constant 0 : i32
    %c0_i32_2 = arith.constant 0 : i32
    return %c0_i32, %c0_i32_0, %c0_i32_1 : i32, i32, i32
  }
  func.func @transform_7(%arg0: i32) -> (i32, i32) {
    %c0_i32 = arith.constant 0 : i32
    %c0_i32_0 = arith.constant 0 : i32
    %c0_i32_1 = arith.constant 0 : i32
    return %c0_i32, %c0_i32_0 : i32, i32
  }
  func.func @transform_8(%arg0: i32) -> (i32, i32, i32) {
    %c0_i32 = arith.constant 0 : i32
    %c0_i32_0 = arith.constant 0 : i32
    %c0_i32_1 = arith.constant 0 : i32
    %c0_i32_2 = arith.constant 0 : i32
    return %c0_i32, %c0_i32_0, %c0_i32_1 : i32, i32, i32
  }
  func.func @transform_9(%arg0: i32) -> (i32, i32, i32, i32) {
    %c0_i32 = arith.constant 0 : i32
    %c0_i32_0 = arith.constant 0 : i32
    %c0_i32_1 = arith.constant 0 : i32
    %c0_i32_2 = arith.constant 0 : i32
    %c0_i32_3 = arith.constant 0 : i32
    return %c0_i32, %c0_i32_0, %c0_i32_1, %c0_i32_2 : i32, i32, i32, i32
  }
}

</mosaic_0001>

<llo_original>
// kernel: tpu_custom_call.1
$region0: #{tpu_custom_call.1}
  #allocation0 [shape = 'u32[]', space=smem, size = 0x4, offset = 0x4, fixed_abs, tag = 'smem constant byte address 0x4 - core index']
  #allocation1 [shape = 'u32[144,128]{1,0:T(1,128)}', space=vmem, size = 0x12000, scoped, tag = 'internal scratch']
  %s0 = inlined_call_operand.vmem [shape: f32[2,8,32], index: 0, kind: input, shape index: {}]
  %s1 = inlined_call_operand.vmem [shape: f32[2,8,32], index: 1, kind: input, shape index: {}]
  %s2 = inlined_call_operand.vmem [shape: f32[2,8,32], index: 2, kind: input, shape index: {}]
  %s3 = inlined_call_operand.vmem [shape: f32[2,1,8], index: 3, kind: input, shape index: {}]
  %s4 = inlined_call_operand.vmem [shape: f32[12,32,8], index: 4, kind: input, shape index: {}]
  %s5 = inlined_call_operand.vmem [shape: f32[12,1,8], index: 5, kind: input, shape index: {}]
  %s6 = inlined_call_operand.vmem [shape: f32[4,8,32], index: 6, kind: input, shape index: {}]
  %s7 = inlined_call_operand.vmem [shape: f32[1,32], index: 7, kind: input, shape index: {}]
  %s8 = inlined_call_operand.hbm [shape: f32[2,8,32], index: 8, kind: output, shape index: {0}]
  %s9 = inlined_call_operand.hbm [shape: f32[2,4,8,8], index: 9, kind: output, shape index: {1}]
  %10 = xla_tuple %s8, %s9
  %s11 = sld [smem:[#allocation0]]
  $region50: #{tpu_custom_call.1} parent=0
    _
  %s13 = ssub.s32 1, %s11
  %s14 = scalar_select 0, %s13, %s11
  $region1: #{tpu_custom_call.1} parent=0
    #allocation2 [shape = 'u8[8192]{0}', space=vmem, size = 0x2000, scoped, tag = 'output window, operand 0, single buffered']
    #allocation3 [shape = 's32[1]{0}', space=sflag, size = 0x4, scoped, tag = 'scoped memory for tpu_custom_call.1']
    #allocation4 [shape = 'u8[32768]{0}', space=vmem, size = 0x8000, scoped, tag = 'output window, operand 1, single buffered']
    #allocation5 [shape = 's32[1]{0}', space=sflag, size = 0x4, scoped, tag = 'scoped memory for tpu_custom_call.1']
    %15 = vsyncpa [#allocation3], 0
    %16 = vsyncpa [#allocation5], 0
    // Predicated region
    $region2: #{tpu_custom_call.1} parent=1 // pred_check
      _
    $region3: #{tpu_custom_call.1} parent=1 // pred_check_branch
      %18 = sbr.rel (0) target = $region5
    $region4: #{tpu_custom_call.1} parent=1 // pred_region
      _
    $region5: #{tpu_custom_call.1} parent=1 // pred_fallthru
      _
    // Predicated region
    $region6: #{tpu_custom_call.1} parent=1 // pred_check
      _
    $region7: #{tpu_custom_call.1} parent=1 // pred_check_branch
      %20 = sbr.rel (0) target = $region9
    $region8: #{tpu_custom_call.1} parent=1 // pred_region
      _
    $region9: #{tpu_custom_call.1} parent=1 // pred_fallthru
      _
    // Predicated region
    $region10: #{tpu_custom_call.1} parent=1 // pred_check
      _
    $region11: #{tpu_custom_call.1} parent=1 // pred_check_branch
      %22 = sbr.rel (0) target = $region13
    $region12: #{tpu_custom_call.1} parent=1 // pred_region
      _
    $region13: #{tpu_custom_call.1} parent=1 // pred_fallthru
      _
    // Predicated region
    $region14: #{tpu_custom_call.1} parent=1 // pred_check
      _
    $region15: #{tpu_custom_call.1} parent=1 // pred_check_branch
      %24 = sbr.rel (0) target = $region17
    $region16: #{tpu_custom_call.1} parent=1 // pred_region
      _
    $region17: #{tpu_custom_call.1} parent=1 // pred_fallthru
      _
    // Predicated region
    $region18: #{tpu_custom_call.1} parent=1 // pred_check
      _
    $region19: #{tpu_custom_call.1} parent=1 // pred_check_branch
      %26 = sbr.rel (0) target = $region21
    $region20: #{tpu_custom_call.1} parent=1 // pred_region
      _
    $region21: #{tpu_custom_call.1} parent=1 // pred_fallthru
      _
    // Predicated region
    $region22: #{tpu_custom_call.1} parent=1 // pred_check
      _
    $region23: #{tpu_custom_call.1} parent=1 // pred_check_branch
      %28 = sbr.rel (0) target = $region25
    $region24: #{tpu_custom_call.1} parent=1 // pred_region
      _
    $region25: #{tpu_custom_call.1} parent=1 // pred_fallthru
      _
    // Predicated region
    $region26: #{tpu_custom_call.1} parent=1 // pred_check
      _
    $region27: #{tpu_custom_call.1} parent=1 // pred_check_branch
      %30 = sbr.rel (0) target = $region29
    $region28: #{tpu_custom_call.1} parent=1 // pred_region
      _
    $region29: #{tpu_custom_call.1} parent=1 // pred_fallthru
      _
    // Predicated region
    $region30: #{tpu_custom_call.1} parent=1 // pred_check
      _
    $region31: #{tpu_custom_call.1} parent=1 // pred_check_branch
      %32 = sbr.rel (0) target = $region33
    $region32: #{tpu_custom_call.1} parent=1 // pred_region
      _
    $region33: #{tpu_custom_call.1} parent=1 // pred_fallthru
      _
    %v33 = vld [vmem:[%s4] sm:$0xff]
    %v34 = vld [vmem:[%s4 + $0x8] sm:$0xff]
    %v35 = vld [vmem:[%s4 + $0x10] sm:$0xff]
    %v36 = vld [vmem:[%s4 + $0x18] sm:$0xff]
    %v37 = vld [vmem:[%s4 + $0x20] sm:$0xff]
    %v38 = vld [vmem:[%s4 + $0x28] sm:$0xff]
    %v39 = vld [vmem:[%s4 + $0x30] sm:$0xff]
    %v40 = vld [vmem:[%s4 + $0x38] sm:$0xff]
    %v41 = vld [vmem:[%s4 + $0x40] sm:$0xff]
    %v42 = vld [vmem:[%s4 + $0x48] sm:$0xff]
    %v43 = vld [vmem:[%s4 + $0x50] sm:$0xff]
    %v44 = vld [vmem:[%s4 + $0x58] sm:$0xff]
    %v45 = vld [vmem:[%s4 + $0x60] sm:$0xff]
    %v46 = vld [vmem:[%s4 + $0x68] sm:$0xff]
    %v47 = vld [vmem:[%s4 + $0x70] sm:$0xff]
    %v48 = vld [vmem:[%s4 + $0x78] sm:$0xff]
    %v49 = vld [vmem:[%s4 + $0x80] sm:$0xff]
    %v50 = vld [vmem:[%s4 + $0x88] sm:$0xff]
    %v51 = vld [vmem:[%s4 + $0x90] sm:$0xff]
    %v52 = vld [vmem:[%s4 + $0x98] sm:$0xff]
    %v53 = vld [vmem:[%s4 + $0xa0] sm:$0xff]
    %v54 = vld [vmem:[%s4 + $0xa8] sm:$0xff]
    %v55 = vld [vmem:[%s4 + $0xb0] sm:$0xff]
    %v56 = vld [vmem:[%s4 + $0xb8] sm:$0xff]
    %v57 = vld [vmem:[%s4 + $0xc0] sm:$0xff]
    %v58 = vld [vmem:[%s4 + $0xc8] sm:$0xff]
    %v59 = vld [vmem:[%s4 + $0xd0] sm:$0xff]
    %v60 = vld [vmem:[%s4 + $0xd8] sm:$0xff]
    %v61 = vld [vmem:[%s4 + $0xe0] sm:$0xff]
    %v62 = vld [vmem:[%s4 + $0xe8] sm:$0xff]
    %v63 = vld [vmem:[%s4 + $0xf0] sm:$0xff]
    %v64 = vld [vmem:[%s4 + $0xf8] sm:$0xff]
    %v65 = vld [vmem:[%s4 + $0x100] sm:$0xff]
    %v66 = vld [vmem:[%s4 + $0x108] sm:$0xff]
    %v67 = vld [vmem:[%s4 + $0x110] sm:$0xff]
    %v68 = vld [vmem:[%s4 + $0x118] sm:$0xff]
    %v69 = vld [vmem:[%s4 + $0x120] sm:$0xff]
    %v70 = vld [vmem:[%s4 + $0x128] sm:$0xff]
    %v71 = vld [vmem:[%s4 + $0x130] sm:$0xff]
    %v72 = vld [vmem:[%s4 + $0x138] sm:$0xff]
    %v73 = vld [vmem:[%s4 + $0x140] sm:$0xff]
    %v74 = vld [vmem:[%s4 + $0x148] sm:$0xff]
    %v75 = vld [vmem:[%s4 + $0x150] sm:$0xff]
    %v76 = vld [vmem:[%s4 + $0x158] sm:$0xff]
    %v77 = vld [vmem:[%s4 + $0x160] sm:$0xff]
    %v78 = vld [vmem:[%s4 + $0x168] sm:$0xff]
    %v79 = vld [vmem:[%s4 + $0x170] sm:$0xff]
    %v80 = vld [vmem:[%s4 + $0x178] sm:$0xff]
    %v81 = vld [vmem:[%s5] sm:$0x1]
    %v82 = vld [vmem:[%s5 + $0x1] sm:$0x1]
    %v83 = vld [vmem:[%s5 + $0x2] sm:$0x1]
    %v84 = vld [vmem:[%s5 + $0x3] sm:$0x1]
    %v85 = vld [vmem:[%s5 + $0x4] sm:$0x1]
    %v86 = vld [vmem:[%s5 + $0x5] sm:$0x1]
    %v87 = vld [vmem:[%s5 + $0x6] sm:$0x1]
    %v88 = vld [vmem:[%s5 + $0x7] sm:$0x1]
    %v89 = vld [vmem:[%s5 + $0x8] sm:$0x1]
    %v90 = vld [vmem:[%s5 + $0x9] sm:$0x1]
    %v91 = vld [vmem:[%s5 + $0xa] sm:$0x1]
    %v92 = vld [vmem:[%s5 + $0xb] sm:$0x1]
    %v93 = vld [vmem:[%s6] sm:$0xff]
    %v94 = vld [vmem:[%s6 + $0x8] sm:$0xff]
    %v95 = vld [vmem:[%s6 + $0x10] sm:$0xff]
    %v96 = vld [vmem:[%s6 + $0x18] sm:$0xff]
    %v97 = vld [vmem:[%s7] sm:$0x1]
    %v98 = vld [vmem:[%s0] sm:$0xff]
    %v99 = vld [vmem:[%s1] sm:$0xff]
    %v100 = vld [vmem:[%s2] sm:$0xff]
    %v113 = vlaneseq
    %v114 = vshrl.u32 %v113, 7
    %v115 = vsub.s32 0, %v114
    %v116 = vrot.slane %v81, %v115
    %v117 = vlaneseq
    %v118 = vshrl.u32 %v117, 7
    %v119 = vsub.s32 0, %v118
    %v120 = vrot.slane %v82, %v119
    %v121 = vlaneseq
    %v122 = vshrl.u32 %v121, 7
    %v123 = vsub.s32 0, %v122
    %v124 = vrot.slane %v83, %v123
    %v125 = vlaneseq
    %v126 = vshrl.u32 %v125, 7
    %v127 = vsub.s32 0, %v126
    %v128 = vrot.slane %v84, %v127
    %v129 = vlaneseq
    %v130 = vshrl.u32 %v129, 7
    %v131 = vsub.s32 0, %v130
    %v132 = vrot.slane %v85, %v131
    %v133 = vlaneseq
    %v134 = vshrl.u32 %v133, 7
    %v135 = vsub.s32 0, %v134
    %v136 = vrot.slane %v86, %v135
    %v137 = vlaneseq
    %v138 = vshrl.u32 %v137, 7
    %v139 = vsub.s32 0, %v138
    %v140 = vrot.slane %v87, %v139
    %v141 = vlaneseq
    %v142 = vshrl.u32 %v141, 7
    %v143 = vsub.s32 0, %v142
    %v144 = vrot.slane %v88, %v143
    %v145 = vlaneseq
    %v146 = vshrl.u32 %v145, 7
    %v147 = vsub.s32 0, %v146
    %v148 = vrot.slane %v89, %v147
    %v149 = vlaneseq
    %v150 = vshrl.u32 %v149, 7
    %v151 = vsub.s32 0, %v150
    %v152 = vrot.slane %v90, %v151
    %v153 = vlaneseq
    %v154 = vshrl.u32 %v153, 7
    %v155 = vsub.s32 0, %v154
    %v156 = vrot.slane %v91, %v155
    %v157 = vlaneseq
    %v158 = vshrl.u32 %v157, 7
    %v159 = vsub.s32 0, %v158
    %v160 = vrot.slane %v92, %v159
    %vm173 = vcmask 261120
    %v175 = vsel %vm173, %v98, 0
    %177 = vmatprep.subr.mxu0 0.0
    %178 = vmatpush1.msra.mxu0 %v33
    %179 = vmatprep.subr.mxu0 0.0
    %180 = vmatpush1.msra.mxu0 %v34
    %181 = vmatprep.subr.mxu0 0.0
    %182 = vmatpush1.msra.mxu0 %v35
    %183 = vmatprep.subr.mxu0 0.0
    %184 = vmatpush1.msra.mxu0 %v36
    %185 = vmatprep.subr.mxu0 0.0
    %186 = vmatpush1.msra.mxu0 0.0
    %187 = vmatprep.subr.mxu0 0.0
    %188 = vmatpush1.msra.mxu0 0.0
    %189 = vmatprep.subr.mxu0 0.0
    %190 = vmatpush1.msra.mxu0 0.0
    %191 = vmatprep.subr.mxu0 0.0
    %192 = vmatpush1.msra.mxu0 0.0
    %193 = vmatprep.subr.mxu0 0.0
    %194 = vmatpush1.msra.mxu0 0.0
    %195 = vmatprep.subr.mxu0 0.0
    %196 = vmatpush1.msra.mxu0 0.0
    %197 = vmatprep.subr.mxu0 0.0
    %198 = vmatpush1.msra.mxu0 0.0
    %199 = vmatprep.subr.mxu0 0.0
    %200 = vmatpush1.msra.mxu0 0.0
    %201 = vmatprep.subr.mxu0 0.0
    %202 = vmatpush1.msra.mxu0 0.0
    %203 = vmatprep.subr.mxu0 0.0
    %204 = vmatpush1.msra.mxu0 0.0
    %205 = vmatprep.subr.mxu0 0.0
    %206 = vmatpush1.msra.mxu0 0.0
    %207 = vmatprep.subr.mxu0 0.0
    %208 = vmatpush1.msra.mxu0 0.0
    %209 = vmatprep.subr.mxu0 0.0
    %210 = vmatpush1.msra.mxu0 0.0
    %211 = vmatprep.subr.mxu0 0.0
    %212 = vmatpush1.msra.mxu0 0.0
    %213 = vmatprep.subr.mxu0 0.0
    %214 = vmatpush1.msra.mxu0 0.0
    %215 = vmatprep.subr.mxu0 0.0
    %216 = vmatpush1.msra.mxu0 0.0
    %217 = vmatprep.subr.mxu0 0.0
    %218 = vmatpush1.msra.mxu0 0.0
    %219 = vmatprep.subr.mxu0 0.0
    %220 = vmatpush1.msra.mxu0 0.0
    %221 = vmatprep.subr.mxu0 0.0
    %222 = vmatpush1.msra.mxu0 0.0
    %223 = vmatprep.subr.mxu0 0.0
    %224 = vmatpush1.msra.mxu0 0.0
    %225 = vmatprep.subr.mxu0 0.0
    %226 = vmatpush1.msra.mxu0 0.0
    %227 = vmatprep.subr.mxu0 0.0
    %228 = vmatpush1.msra.mxu0 0.0
    %229 = vmatprep.subr.mxu0 0.0
    %230 = vmatpush1.msra.mxu0 0.0
    %231 = vmatprep.subr.mxu0 0.0
    %232 = vmatpush1.msra.mxu0 0.0
    %233 = vmatprep.subr.mxu0 0.0
    %234 = vmatpush1.msra.mxu0 0.0
    %235 = vmatprep.subr.mxu0 0.0
    %236 = vmatpush1.msra.mxu0 0.0
    %237 = vmatprep.subr.mxu0 0.0
    %238 = vmatpush1.msra.mxu0 0.0
    %239 = vmatprep.subr.mxu0 0.0
    %240 = vmatpush1.msra.mxu0 0.0
    %241 = vmatprep.mubr.f32.mxu0 0.0
    %242 = vmatmul.mubr.f32.gmra.mrb[0].mxu0 %v175
    %v243 = vpop.f32.mrb[0].mxu0
    %v244 = vadd.f32 %v116, %v243
    %v245 = vpop.f32.mrb[0].mxu0
    %246 = vdwg.mxu0
    %247 = vmatprep.subr.mxu0 0.0
    %248 = vmatpush1.msra.mxu0 %v37
    %249 = vmatprep.subr.mxu0 0.0
    %250 = vmatpush1.msra.mxu0 %v38
    %251 = vmatprep.subr.mxu0 0.0
    %252 = vmatpush1.msra.mxu0 %v39
    %253 = vmatprep.subr.mxu0 0.0
    %254 = vmatpush1.msra.mxu0 %v40
    %255 = vmatprep.subr.mxu0 0.0
    %256 = vmatpush1.msra.mxu0 0.0
    %257 = vmatprep.subr.mxu0 0.0
    %258 = vmatpush1.msra.mxu0 0.0
    %259 = vmatprep.subr.mxu0 0.0
    %260 = vmatpush1.msra.mxu0 0.0
    %261 = vmatprep.subr.mxu0 0.0
    %262 = vmatpush1.msra.mxu0 0.0
    %263 = vmatprep.subr.mxu0 0.0
    %264 = vmatpush1.msra.mxu0 0.0
    %265 = vmatprep.subr.mxu0 0.0
    %266 = vmatpush1.msra.mxu0 0.0
    %267 = vmatprep.subr.mxu0 0.0
    %268 = vmatpush1.msra.mxu0 0.0
    %269 = vmatprep.subr.mxu0 0.0
    %270 = vmatpush1.msra.mxu0 0.0
    %271 = vmatprep.subr.mxu0 0.0
    %272 = vmatpush1.msra.mxu0 0.0
    %273 = vmatprep.subr.mxu0 0.0
    %274 = vmatpush1.msra.mxu0 0.0
    %275 = vmatprep.subr.mxu0 0.0
    %276 = vmatpush1.msra.mxu0 0.0
    %277 = vmatprep.subr.mxu0 0.0
    %278 = vmatpush1.msra.mxu0 0.0
    %279 = vmatprep.subr.mxu0 0.0
    %280 = vmatpush1.msra.mxu0 0.0
    %281 = vmatprep.subr.mxu0 0.0
    %282 = vmatpush1.msra.mxu0 0.0
    %283 = vmatprep.subr.mxu0 0.0
    %284 = vmatpush1.msra.mxu0 0.0
    %285 = vmatprep.subr.mxu0 0.0
    %286 = vmatpush1.msra.mxu0 0.0
    %287 = vmatprep.subr.mxu0 0.0
    %288 = vmatpush1.msra.mxu0 0.0
    %289 = vmatprep.subr.mxu0 0.0
    %290 = vmatpush1.msra.mxu0 0.0
    %291 = vmatprep.subr.mxu0 0.0
    %292 = vmatpush1.msra.mxu0 0.0
    %293 = vmatprep.subr.mxu0 0.0
    %294 = vmatpush1.msra.mxu0 0.0
    %295 = vmatprep.subr.mxu0 0.0
    %296 = vmatpush1.msra.mxu0 0.0
    %297 = vmatprep.subr.mxu0 0.0
    %298 = vmatpush1.msra.mxu0 0.0
    %299 = vmatprep.subr.mxu0 0.0
    %300 = vmatpush1.msra.mxu0 0.0
    %301 = vmatprep.subr.mxu0 0.0
    %302 = vmatpush1.msra.mxu0 0.0
    %303 = vmatprep.subr.mxu0 0.0
    %304 = vmatpush1.msra.mxu0 0.0
    %305 = vmatprep.subr.mxu0 0.0
    %306 = vmatpush1.msra.mxu0 0.0
    %307 = vmatprep.subr.mxu0 0.0
    %308 = vmatpush1.msra.mxu0 0.0
    %309 = vmatprep.subr.mxu0 0.0
    %310 = vmatpush1.msra.mxu0 0.0
    %311 = vmatprep.mubr.f32.mxu0 0.0
    %312 = vmatmul.mubr.f32.gmra.mrb[0].mxu0 %v175
    %v313 = vpop.f32.mrb[0].mxu0
    %v314 = vadd.f32 %v120, %v313
    %v315 = vpop.f32.mrb[0].mxu0
    %316 = vdwg.mxu0
    %317 = vmatprep.subr.mxu0 0.0
    %318 = vmatpush1.msra.mxu0 %v41
    %319 = vmatprep.subr.mxu0 0.0
    %320 = vmatpush1.msra.mxu0 %v42
    %321 = vmatprep.subr.mxu0 0.0
    %322 = vmatpush1.msra.mxu0 %v43
    %323 = vmatprep.subr.mxu0 0.0
    %324 = vmatpush1.msra.mxu0 %v44
    %325 = vmatprep.subr.mxu0 0.0
    %326 = vmatpush1.msra.mxu0 0.0
    %327 = vmatprep.subr.mxu0 0.0
    %328 = vmatpush1.msra.mxu0 0.0
    %329 = vmatprep.subr.mxu0 0.0
    %330 = vmatpush1.msra.mxu0 0.0
    %331 = vmatprep.subr.mxu0 0.0
    %332 = vmatpush1.msra.mxu0 0.0
    %333 = vmatprep.subr.mxu0 0.0
    %334 = vmatpush1.msra.mxu0 0.0
    %335 = vmatprep.subr.mxu0 0.0
    %336 = vmatpush1.msra.mxu0 0.0
    %337 = vmatprep.subr.mxu0 0.0
    %338 = vmatpush1.msra.mxu0 0.0
    %339 = vmatprep.subr.mxu0 0.0
    %340 = vmatpush1.msra.mxu0 0.0
    %341 = vmatprep.subr.mxu0 0.0
    %342 = vmatpush1.msra.mxu0 0.0
    %343 = vmatprep.subr.mxu0 0.0
    %344 = vmatpush1.msra.mxu0 0.0
    %345 = vmatprep.subr.mxu0 0.0
    %346 = vmatpush1.msra.mxu0 0.0
    %347 = vmatprep.subr.mxu0 0.0
    %348 = vmatpush1.msra.mxu0 0.0
    %349 = vmatprep.subr.mxu0 0.0
    %350 = vmatpush1.msra.mxu0 0.0
    %351 = vmatprep.subr.mxu0 0.0
    %352 = vmatpush1.msra.mxu0 0.0
    %353 = vmatprep.subr.mxu0 0.0
    %354 = vmatpush1.msra.mxu0 0.0
    %355 = vmatprep.subr.mxu0 0.0
    %356 = vmatpush1.msra.mxu0 0.0
    %357 = vmatprep.subr.mxu0 0.0
    %358 = vmatpush1.msra.mxu0 0.0
    %359 = vmatprep.subr.mxu0 0.0
    %360 = vmatpush1.msra.mxu0 0.0
    %361 = vmatprep.subr.mxu0 0.0
    %362 = vmatpush1.msra.mxu0 0.0
    %363 = vmatprep.subr.mxu0 0.0
    %364 = vmatpush1.msra.mxu0 0.0
    %365 = vmatprep.subr.mxu0 0.0
    %366 = vmatpush1.msra.mxu0 0.0
    %367 = vmatprep.subr.mxu0 0.0
    %368 = vmatpush1.msra.mxu0 0.0
    %369 = vmatprep.subr.mxu0 0.0
    %370 = vmatpush1.msra.mxu0 0.0
    %371 = vmatprep.subr.mxu0 0.0
    %372 = vmatpush1.msra.mxu0 0.0
    %373 = vmatprep.subr.mxu0 0.0
    %374 = vmatpush1.msra.mxu0 0.0
    %375 = vmatprep.subr.mxu0 0.0
    %376 = vmatpush1.msra.mxu0 0.0
    %377 = vmatprep.subr.mxu0 0.0
    %378 = vmatpush1.msra.mxu0 0.0
    %379 = vmatprep.subr.mxu0 0.0
    %380 = vmatpush1.msra.mxu0 0.0
    %381 = vmatprep.mubr.f32.mxu0 0.0
    %382 = vmatmul.mubr.f32.gmra.mrb[0].mxu0 %v175
    %v383 = vpop.f32.mrb[0].mxu0
    %v384 = vadd.f32 %v124, %v383
    %v385 = vpop.f32.mrb[0].mxu0
    %386 = vdwg.mxu0
    %387 = vmatprep.subr.mxu0 0.0
    %388 = vmatpush1.msra.mxu0 %v45
    %389 = vmatprep.subr.mxu0 0.0
    %390 = vmatpush1.msra.mxu0 %v46
    %391 = vmatprep.subr.mxu0 0.0
    %392 = vmatpush1.msra.mxu0 %v47
    %393 = vmatprep.subr.mxu0 0.0
    %394 = vmatpush1.msra.mxu0 %v48
    %395 = vmatprep.subr.mxu0 0.0
    %396 = vmatpush1.msra.mxu0 0.0
    %397 = vmatprep.subr.mxu0 0.0
    %398 = vmatpush1.msra.mxu0 0.0
    %399 = vmatprep.subr.mxu0 0.0
    %400 = vmatpush1.msra.mxu0 0.0
    %401 = vmatprep.subr.mxu0 0.0
    %402 = vmatpush1.msra.mxu0 0.0
    %403 = vmatprep.subr.mxu0 0.0
    %404 = vmatpush1.msra.mxu0 0.0
    %405 = vmatprep.subr.mxu0 0.0
    %406 = vmatpush1.msra.mxu0 0.0
    %407 = vmatprep.subr.mxu0 0.0
    %408 = vmatpush1.msra.mxu0 0.0
    %409 = vmatprep.subr.mxu0 0.0
    %410 = vmatpush1.msra.mxu0 0.0
    %411 = vmatprep.subr.mxu0 0.0
    %412 = vmatpush1.msra.mxu0 0.0
    %413 = vmatprep.subr.mxu0 0.0
    %414 = vmatpush1.msra.mxu0 0.0
    %415 = vmatprep.subr.mxu0 0.0
    %416 = vmatpush1.msra.mxu0 0.0
    %417 = vmatprep.subr.mxu0 0.0
    %418 = vmatpush1.msra.mxu0 0.0
    %419 = vmatprep.subr.mxu0 0.0
    %420 = vmatpush1.msra.mxu0 0.0
    %421 = vmatprep.subr.mxu0 0.0
    %422 = vmatpush1.msra.mxu0 0.0
    %423 = vmatprep.subr.mxu0 0.0
    %424 = vmatpush1.msra.mxu0 0.0
    %425 = vmatprep.subr.mxu0 0.0
    %426 = vmatpush1.msra.mxu0 0.0
    %427 = vmatprep.subr.mxu0 0.0
    %428 = vmatpush1.msra.mxu0 0.0
    %429 = vmatprep.subr.mxu0 0.0
    %430 = vmatpush1.msra.mxu0 0.0
    %431 = vmatprep.subr.mxu0 0.0
    %432 = vmatpush1.msra.mxu0 0.0
    %433 = vmatprep.subr.mxu0 0.0
    %434 = vmatpush1.msra.mxu0 0.0
    %435 = vmatprep.subr.mxu0 0.0
    %436 = vmatpush1.msra.mxu0 0.0
    %437 = vmatprep.subr.mxu0 0.0
    %438 = vmatpush1.msra.mxu0 0.0
    %439 = vmatprep.subr.mxu0 0.0
    %440 = vmatpush1.msra.mxu0 0.0
    %441 = vmatprep.subr.mxu0 0.0
    %442 = vmatpush1.msra.mxu0 0.0
    %443 = vmatprep.subr.mxu0 0.0
    %444 = vmatpush1.msra.mxu0 0.0
    %445 = vmatprep.subr.mxu0 0.0
    %446 = vmatpush1.msra.mxu0 0.0
    %447 = vmatprep.subr.mxu0 0.0
    %448 = vmatpush1.msra.mxu0 0.0
    %449 = vmatprep.subr.mxu0 0.0
    %450 = vmatpush1.msra.mxu0 0.0
    %451 = vmatprep.mubr.f32.mxu0 0.0
    %452 = vmatmul.mubr.f32.gmra.mrb[0].mxu0 %v175
    %v453 = vpop.f32.mrb[0].mxu0
    %v454 = vadd.f32 %v128, %v453
    %v455 = vpop.f32.mrb[0].mxu0
    %456 = vdwg.mxu0
    %v458 = vsel %vm173, %v99, 0
    %460 = vmatprep.subr.mxu0 0.0
    %461 = vmatpush1.msra.mxu0 %v49
    %462 = vmatprep.subr.mxu0 0.0
    %463 = vmatpush1.msra.mxu0 %v50
    %464 = vmatprep.subr.mxu0 0.0
    %465 = vmatpush1.msra.mxu0 %v51
    %466 = vmatprep.subr.mxu0 0.0
    %467 = vmatpush1.msra.mxu0 %v52
    %468 = vmatprep.subr.mxu0 0.0
    %469 = vmatpush1.msra.mxu0 0.0
    %470 = vmatprep.subr.mxu0 0.0
    %471 = vmatpush1.msra.mxu0 0.0
    %472 = vmatprep.subr.mxu0 0.0
    %473 = vmatpush1.msra.mxu0 0.0
    %474 = vmatprep.subr.mxu0 0.0
    %475 = vmatpush1.msra.mxu0 0.0
    %476 = vmatprep.subr.mxu0 0.0
    %477 = vmatpush1.msra.mxu0 0.0
    %478 = vmatprep.subr.mxu0 0.0
    %479 = vmatpush1.msra.mxu0 0.0
    %480 = vmatprep.subr.mxu0 0.0
    %481 = vmatpush1.msra.mxu0 0.0
    %482 = vmatprep.subr.mxu0 0.0
    %483 = vmatpush1.msra.mxu0 0.0
    %484 = vmatprep.subr.mxu0 0.0
    %485 = vmatpush1.msra.mxu0 0.0
    %486 = vmatprep.subr.mxu0 0.0
    %487 = vmatpush1.msra.mxu0 0.0
    %488 = vmatprep.subr.mxu0 0.0
    %489 = vmatpush1.msra.mxu0 0.0
    %490 = vmatprep.subr.mxu0 0.0
    %491 = vmatpush1.msra.mxu0 0.0
    %492 = vmatprep.subr.mxu0 0.0
    %493 = vmatpush1.msra.mxu0 0.0
    %494 = vmatprep.subr.mxu0 0.0
    %495 = vmatpush1.msra.mxu0 0.0
    %496 = vmatprep.subr.mxu0 0.0
    %497 = vmatpush1.msra.mxu0 0.0
    %498 = vmatprep.subr.mxu0 0.0
    %499 = vmatpush1.msra.mxu0 0.0
    %500 = vmatprep.subr.mxu0 0.0
    %501 = vmatpush1.msra.mxu0 0.0
    %502 = vmatprep.subr.mxu0 0.0
    %503 = vmatpush1.msra.mxu0 0.0
    %504 = vmatprep.subr.mxu0 0.0
    %505 = vmatpush1.msra.mxu0 0.0
    %506 = vmatprep.subr.mxu0 0.0
    %507 = vmatpush1.msra.mxu0 0.0
    %508 = vmatprep.subr.mxu0 0.0
    %509 = vmatpush1.msra.mxu0 0.0
    %510 = vmatprep.subr.mxu0 0.0
    %511 = vmatpush1.msra.mxu0 0.0
    %512 = vmatprep.subr.mxu0 0.0
    %513 = vmatpush1.msra.mxu0 0.0
    %514 = vmatprep.subr.mxu0 0.0
    %515 = vmatpush1.msra.mxu0 0.0
    %516 = vmatprep.subr.mxu0 0.0
    %517 = vmatpush1.msra.mxu0 0.0
    %518 = vmatprep.subr.mxu0 0.0
    %519 = vmatpush1.msra.mxu0 0.0
    %520 = vmatprep.subr.mxu0 0.0
    %521 = vmatpush1.msra.mxu0 0.0
    %522 = vmatprep.subr.mxu0 0.0
    %523 = vmatpush1.msra.mxu0 0.0
    %524 = vmatprep.mubr.f32.mxu0 0.0
    %525 = vmatmul.mubr.f32.gmra.mrb[0].mxu0 %v458
    %v526 = vpop.f32.mrb[0].mxu0
    %v527 = vadd.f32 %v132, %v526
    %v528 = vpop.f32.mrb[0].mxu0
    %529 = vdwg.mxu0
    %530 = vmatprep.subr.mxu0 0.0
    %531 = vmatpush1.msra.mxu0 %v53
    %532 = vmatprep.subr.mxu0 0.0
    %533 = vmatpush1.msra.mxu0 %v54
    %534 = vmatprep.subr.mxu0 0.0
    %535 = vmatpush1.msra.mxu0 %v55
    %536 = vmatprep.subr.mxu0 0.0
    %537 = vmatpush1.msra.mxu0 %v56
    %538 = vmatprep.subr.mxu0 0.0
    %539 = vmatpush1.msra.mxu0 0.0
    %540 = vmatprep.subr.mxu0 0.0
    %541 = vmatpush1.msra.mxu0 0.0
    %542 = vmatprep.subr.mxu0 0.0
    %543 = vmatpush1.msra.mxu0 0.0
    %544 = vmatprep.subr.mxu0 0.0
    %545 = vmatpush1.msra.mxu0 0.0
    %546 = vmatprep.subr.mxu0 0.0
    %547 = vmatpush1.msra.mxu0 0.0
    %548 = vmatprep.subr.mxu0 0.0
    %549 = vmatpush1.msra.mxu0 0.0
    %550 = vmatprep.subr.mxu0 0.0
    %551 = vmatpush1.msra.mxu0 0.0
    %552 = vmatprep.subr.mxu0 0.0
    %553 = vmatpush1.msra.mxu0 0.0
    %554 = vmatprep.subr.mxu0 0.0
    %555 = vmatpush1.msra.mxu0 0.0
    %556 = vmatprep.subr.mxu0 0.0
    %557 = vmatpush1.msra.mxu0 0.0
    %558 = vmatprep.subr.mxu0 0.0
    %559 = vmatpush1.msra.mxu0 0.0
    %560 = vmatprep.subr.mxu0 0.0
    %561 = vmatpush1.msra.mxu0 0.0
    %562 = vmatprep.subr.mxu0 0.0
    %563 = vmatpush1.msra.mxu0 0.0
    %564 = vmatprep.subr.mxu0 0.0
    %565 = vmatpush1.msra.mxu0 0.0
    %566 = vmatprep.subr.mxu0 0.0
    %567 = vmatpush1.msra.mxu0 0.0
    %568 = vmatprep.subr.mxu0 0.0
    %569 = vmatpush1.msra.mxu0 0.0
    %570 = vmatprep.subr.mxu0 0.0
    %571 = vmatpush1.msra.mxu0 0.0
    %572 = vmatprep.subr.mxu0 0.0
    %573 = vmatpush1.msra.mxu0 0.0
    %574 = vmatprep.subr.mxu0 0.0
    %575 = vmatpush1.msra.mxu0 0.0
    %576 = vmatprep.subr.mxu0 0.0
    %577 = vmatpush1.msra.mxu0 0.0
    %578 = vmatprep.subr.mxu0 0.0
    %579 = vmatpush1.msra.mxu0 0.0
    %580 = vmatprep.subr.mxu0 0.0
    %581 = vmatpush1.msra.mxu0 0.0
    %582 = vmatprep.subr.mxu0 0.0
    %583 = vmatpush1.msra.mxu0 0.0
    %584 = vmatprep.subr.mxu0 0.0
    %585 = vmatpush1.msra.mxu0 0.0
    %586 = vmatprep.subr.mxu0 0.0
    %587 = vmatpush1.msra.mxu0 0.0
    %588 = vmatprep.subr.mxu0 0.0
    %589 = vmatpush1.msra.mxu0 0.0
    %590 = vmatprep.subr.mxu0 0.0
    %591 = vmatpush1.msra.mxu0 0.0
    %592 = vmatprep.subr.mxu0 0.0
    %593 = vmatpush1.msra.mxu0 0.0
    %594 = vmatprep.mubr.f32.mxu0 0.0
    %595 = vmatmul.mubr.f32.gmra.mrb[0].mxu0 %v458
    %v596 = vpop.f32.mrb[0].mxu0
    %v597 = vadd.f32 %v136, %v596
    %v598 = vpop.f32.mrb[0].mxu0
    %599 = vdwg.mxu0
    %600 = vmatprep.subr.mxu0 0.0
    %601 = vmatpush1.msra.mxu0 %v57
    %602 = vmatprep.subr.mxu0 0.0
    %603 = vmatpush1.msra.mxu0 %v58
    %604 = vmatprep.subr.mxu0 0.0
    %605 = vmatpush1.msra.mxu0 %v59
    %606 = vmatprep.subr.mxu0 0.0
    %607 = vmatpush1.msra.mxu0 %v60
    %608 = vmatprep.subr.mxu0 0.0
    %609 = vmatpush1.msra.mxu0 0.0
    %610 = vmatprep.subr.mxu0 0.0
    %611 = vmatpush1.msra.mxu0 0.0
    %612 = vmatprep.subr.mxu0 0.0
    %613 = vmatpush1.msra.mxu0 0.0
    %614 = vmatprep.subr.mxu0 0.0
    %615 = vmatpush1.msra.mxu0 0.0
    %616 = vmatprep.subr.mxu0 0.0
    %617 = vmatpush1.msra.mxu0 0.0
    %618 = vmatprep.subr.mxu0 0.0
    %619 = vmatpush1.msra.mxu0 0.0
    %620 = vmatprep.subr.mxu0 0.0
    %621 = vmatpush1.msra.mxu0 0.0
    %622 = vmatprep.subr.mxu0 0.0
    %623 = vmatpush1.msra.mxu0 0.0
    %624 = vmatprep.subr.mxu0 0.0
    %625 = vmatpush1.msra.mxu0 0.0
    %626 = vmatprep.subr.mxu0 0.0
    %627 = vmatpush1.msra.mxu0 0.0
    %628 = vmatprep.subr.mxu0 0.0
    %629 = vmatpush1.msra.mxu0 0.0
    %630 = vmatprep.subr.mxu0 0.0
    %631 = vmatpush1.msra.mxu0 0.0
    %632 = vmatprep.subr.mxu0 0.0
    %633 = vmatpush1.msra.mxu0 0.0
    %634 = vmatprep.subr.mxu0 0.0
    %635 = vmatpush1.msra.mxu0 0.0
    %636 = vmatprep.subr.mxu0 0.0
    %637 = vmatpush1.msra.mxu0 0.0
    %638 = vmatprep.subr.mxu0 0.0
    %639 = vmatpush1.msra.mxu0 0.0
    %640 = vmatprep.subr.mxu0 0.0
    %641 = vmatpush1.msra.mxu0 0.0
    %642 = vmatprep.subr.mxu0 0.0
    %643 = vmatpush1.msra.mxu0 0.0
    %644 = vmatprep.subr.mxu0 0.0
    %645 = vmatpush1.msra.mxu0 0.0
    %646 = vmatprep.subr.mxu0 0.0
    %647 = vmatpush1.msra.mxu0 0.0
    %648 = vmatprep.subr.mxu0 0.0
    %649 = vmatpush1.msra.mxu0 0.0
    %650 = vmatprep.subr.mxu0 0.0
    %651 = vmatpush1.msra.mxu0 0.0
    %652 = vmatprep.subr.mxu0 0.0
    %653 = vmatpush1.msra.mxu0 0.0
    %654 = vmatprep.subr.mxu0 0.0
    %655 = vmatpush1.msra.mxu0 0.0
    %656 = vmatprep.subr.mxu0 0.0
    %657 = vmatpush1.msra.mxu0 0.0
    %658 = vmatprep.subr.mxu0 0.0
    %659 = vmatpush1.msra.mxu0 0.0
    %660 = vmatprep.subr.mxu0 0.0
    %661 = vmatpush1.msra.mxu0 0.0
    %662 = vmatprep.subr.mxu0 0.0
    %663 = vmatpush1.msra.mxu0 0.0
    %664 = vmatprep.mubr.f32.mxu0 0.0
    %665 = vmatmul.mubr.f32.gmra.mrb[0].mxu0 %v458
    %v666 = vpop.f32.mrb[0].mxu0
    %v667 = vadd.f32 %v140, %v666
    %v668 = vpop.f32.mrb[0].mxu0
    %669 = vdwg.mxu0
    %670 = vmatprep.subr.mxu0 0.0
    %671 = vmatpush1.msra.mxu0 %v61
    %672 = vmatprep.subr.mxu0 0.0
    %673 = vmatpush1.msra.mxu0 %v62
    %674 = vmatprep.subr.mxu0 0.0
    %675 = vmatpush1.msra.mxu0 %v63
    %676 = vmatprep.subr.mxu0 0.0
    %677 = vmatpush1.msra.mxu0 %v64
    %678 = vmatprep.subr.mxu0 0.0
    %679 = vmatpush1.msra.mxu0 0.0
    %680 = vmatprep.subr.mxu0 0.0
    %681 = vmatpush1.msra.mxu0 0.0
    %682 = vmatprep.subr.mxu0 0.0
    %683 = vmatpush1.msra.mxu0 0.0
    %684 = vmatprep.subr.mxu0 0.0
    %685 = vmatpush1.msra.mxu0 0.0
    %686 = vmatprep.subr.mxu0 0.0
    %687 = vmatpush1.msra.mxu0 0.0
    %688 = vmatprep.subr.mxu0 0.0
    %689 = vmatpush1.msra.mxu0 0.0
    %690 = vmatprep.subr.mxu0 0.0
    %691 = vmatpush1.msra.mxu0 0.0
    %692 = vmatprep.subr.mxu0 0.0
    %693 = vmatpush1.msra.mxu0 0.0
    %694 = vmatprep.subr.mxu0 0.0
    %695 = vmatpush1.msra.mxu0 0.0
    %696 = vmatprep.subr.mxu0 0.0
    %697 = vmatpush1.msra.mxu0 0.0
    %698 = vmatprep.subr.mxu0 0.0
    %699 = vmatpush1.msra.mxu0 0.0
    %700 = vmatprep.subr.mxu0 0.0
    %701 = vmatpush1.msra.mxu0 0.0
    %702 = vmatprep.subr.mxu0 0.0
    %703 = vmatpush1.msra.mxu0 0.0
    %704 = vmatprep.subr.mxu0 0.0
    %705 = vmatpush1.msra.mxu0 0.0
    %706 = vmatprep.subr.mxu0 0.0
    %707 = vmatpush1.msra.mxu0 0.0
    %708 = vmatprep.subr.mxu0 0.0
    %709 = vmatpush1.msra.mxu0 0.0
    %710 = vmatprep.subr.mxu0 0.0
    %711 = vmatpush1.msra.mxu0 0.0
    %712 = vmatprep.subr.mxu0 0.0
    %713 = vmatpush1.msra.mxu0 0.0
    %714 = vmatprep.subr.mxu0 0.0
    %715 = vmatpush1.msra.mxu0 0.0
    %716 = vmatprep.subr.mxu0 0.0
    %717 = vmatpush1.msra.mxu0 0.0
    %718 = vmatprep.subr.mxu0 0.0
    %719 = vmatpush1.msra.mxu0 0.0
    %720 = vmatprep.subr.mxu0 0.0
    %721 = vmatpush1.msra.mxu0 0.0
    %722 = vmatprep.subr.mxu0 0.0
    %723 = vmatpush1.msra.mxu0 0.0
    %724 = vmatprep.subr.mxu0 0.0
    %725 = vmatpush1.msra.mxu0 0.0
    %726 = vmatprep.subr.mxu0 0.0
    %727 = vmatpush1.msra.mxu0 0.0
    %728 = vmatprep.subr.mxu0 0.0
    %729 = vmatpush1.msra.mxu0 0.0
    %730 = vmatprep.subr.mxu0 0.0
    %731 = vmatpush1.msra.mxu0 0.0
    %732 = vmatprep.subr.mxu0 0.0
    %733 = vmatpush1.msra.mxu0 0.0
    %734 = vmatprep.mubr.f32.mxu0 0.0
    %735 = vmatmul.mubr.f32.gmra.mrb[0].mxu0 %v458
    %v736 = vpop.f32.mrb[0].mxu0
    %v737 = vadd.f32 %v144, %v736
    %v738 = vpop.f32.mrb[0].mxu0
    %739 = vdwg.mxu0
    %v741 = vsel %vm173, %v100, 0
    %743 = vmatprep.subr.mxu0 0.0
    %744 = vmatpush1.msra.mxu0 %v65
    %745 = vmatprep.subr.mxu0 0.0
    %746 = vmatpush1.msra.mxu0 %v66
    %747 = vmatprep.subr.mxu0 0.0
    %748 = vmatpush1.msra.mxu0 %v67
    %749 = vmatprep.subr.mxu0 0.0
    %750 = vmatpush1.msra.mxu0 %v68
    %751 = vmatprep.subr.mxu0 0.0
    %752 = vmatpush1.msra.mxu0 0.0
    %753 = vmatprep.subr.mxu0 0.0
    %754 = vmatpush1.msra.mxu0 0.0
    %755 = vmatprep.subr.mxu0 0.0
    %756 = vmatpush1.msra.mxu0 0.0
    %757 = vmatprep.subr.mxu0 0.0
    %758 = vmatpush1.msra.mxu0 0.0
    %759 = vmatprep.subr.mxu0 0.0
    %760 = vmatpush1.msra.mxu0 0.0
    %761 = vmatprep.subr.mxu0 0.0
    %762 = vmatpush1.msra.mxu0 0.0
    %763 = vmatprep.subr.mxu0 0.0
    %764 = vmatpush1.msra.mxu0 0.0
    %765 = vmatprep.subr.mxu0 0.0
    %766 = vmatpush1.msra.mxu0 0.0
    %767 = vmatprep.subr.mxu0 0.0
    %768 = vmatpush1.msra.mxu0 0.0
    %769 = vmatprep.subr.mxu0 0.0
    %770 = vmatpush1.msra.mxu0 0.0
    %771 = vmatprep.subr.mxu0 0.0
    %772 = vmatpush1.msra.mxu0 0.0
    %773 = vmatprep.subr.mxu0 0.0
    %774 = vmatpush1.msra.mxu0 0.0
    %775 = vmatprep.subr.mxu0 0.0
    %776 = vmatpush1.msra.mxu0 0.0
    %777 = vmatprep.subr.mxu0 0.0
    %778 = vmatpush1.msra.mxu0 0.0
    %779 = vmatprep.subr.mxu0 0.0
    %780 = vmatpush1.msra.mxu0 0.0
    %781 = vmatprep.subr.mxu0 0.0
    %782 = vmatpush1.msra.mxu0 0.0
    %783 = vmatprep.subr.mxu0 0.0
    %784 = vmatpush1.msra.mxu0 0.0
    %785 = vmatprep.subr.mxu0 0.0
    %786 = vmatpush1.msra.mxu0 0.0
    %787 = vmatprep.subr.mxu0 0.0
    %788 = vmatpush1.msra.mxu0 0.0
    %789 = vmatprep.subr.mxu0 0.0
    %790 = vmatpush1.msra.mxu0 0.0
    %791 = vmatprep.subr.mxu0 0.0
    %792 = vmatpush1.msra.mxu0 0.0
    %793 = vmatprep.subr.mxu0 0.0
    %794 = vmatpush1.msra.mxu0 0.0
    %795 = vmatprep.subr.mxu0 0.0
    %796 = vmatpush1.msra.mxu0 0.0
    %797 = vmatprep.subr.mxu0 0.0
    %798 = vmatpush1.msra.mxu0 0.0
    %799 = vmatprep.subr.mxu0 0.0
    %800 = vmatpush1.msra.mxu0 0.0
    %801 = vmatprep.subr.mxu0 0.0
    %802 = vmatpush1.msra.mxu0 0.0
    %803 = vmatprep.subr.mxu0 0.0
    %804 = vmatpush1.msra.mxu0 0.0
    %805 = vmatprep.subr.mxu0 0.0
    %806 = vmatpush1.msra.mxu0 0.0
    %807 = vmatprep.mubr.f32.mxu0 0.0
    %808 = vmatmul.mubr.f32.gmra.mrb[0].mxu0 %v741
    %v809 = vpop.f32.mrb[0].mxu0
    %v810 = vadd.f32 %v148, %v809
    %v811 = vpop.f32.mrb[0].mxu0
    %812 = vdwg.mxu0
    %813 = vmatprep.subr.mxu0 0.0
    %814 = vmatpush1.msra.mxu0 %v69
    %815 = vmatprep.subr.mxu0 0.0
    %816 = vmatpush1.msra.mxu0 %v70
    %817 = vmatprep.subr.mxu0 0.0
    %818 = vmatpush1.msra.mxu0 %v71
    %819 = vmatprep.subr.mxu0 0.0
    %820 = vmatpush1.msra.mxu0 %v72
    %821 = vmatprep.subr.mxu0 0.0
    %822 = vmatpush1.msra.mxu0 0.0
    %823 = vmatprep.subr.mxu0 0.0
    %824 = vmatpush1.msra.mxu0 0.0
    %825 = vmatprep.subr.mxu0 0.0
    %826 = vmatpush1.msra.mxu0 0.0
    %827 = vmatprep.subr.mxu0 0.0
    %828 = vmatpush1.msra.mxu0 0.0
    %829 = vmatprep.subr.mxu0 0.0
    %830 = vmatpush1.msra.mxu0 0.0
    %831 = vmatprep.subr.mxu0 0.0
    %832 = vmatpush1.msra.mxu0 0.0
    %833 = vmatprep.subr.mxu0 0.0
    %834 = vmatpush1.msra.mxu0 0.0
    %835 = vmatprep.subr.mxu0 0.0
    %836 = vmatpush1.msra.mxu0 0.0
    %837 = vmatprep.subr.mxu0 0.0
    %838 = vmatpush1.msra.mxu0 0.0
    %839 = vmatprep.subr.mxu0 0.0
    %840 = vmatpush1.msra.mxu0 0.0
    %841 = vmatprep.subr.mxu0 0.0
    %842 = vmatpush1.msra.mxu0 0.0
    %843 = vmatprep.subr.mxu0 0.0
    %844 = vmatpush1.msra.mxu0 0.0
    %845 = vmatprep.subr.mxu0 0.0
    %846 = vmatpush1.msra.mxu0 0.0
    %847 = vmatprep.subr.mxu0 0.0
    %848 = vmatpush1.msra.mxu0 0.0
    %849 = vmatprep.subr.mxu0 0.0
    %850 = vmatpush1.msra.mxu0 0.0
    %851 = vmatprep.subr.mxu0 0.0
    %852 = vmatpush1.msra.mxu0 0.0
    %853 = vmatprep.subr.mxu0 0.0
    %854 = vmatpush1.msra.mxu0 0.0
    %855 = vmatprep.subr.mxu0 0.0
    %856 = vmatpush1.msra.mxu0 0.0
    %857 = vmatprep.subr.mxu0 0.0
    %858 = vmatpush1.msra.mxu0 0.0
    %859 = vmatprep.subr.mxu0 0.0
    %860 = vmatpush1.msra.mxu0 0.0
    %861 = vmatprep.subr.mxu0 0.0
    %862 = vmatpush1.msra.mxu0 0.0
    %863 = vmatprep.subr.mxu0 0.0
    %864 = vmatpush1.msra.mxu0 0.0
    %865 = vmatprep.subr.mxu0 0.0
    %866 = vmatpush1.msra.mxu0 0.0
    %867 = vmatprep.subr.mxu0 0.0
    %868 = vmatpush1.msra.mxu0 0.0
    %869 = vmatprep.subr.mxu0 0.0
    %870 = vmatpush1.msra.mxu0 0.0
    %871 = vmatprep.subr.mxu0 0.0
    %872 = vmatpush1.msra.mxu0 0.0
    %873 = vmatprep.subr.mxu0 0.0
    %874 = vmatpush1.msra.mxu0 0.0
    %875 = vmatprep.subr.mxu0 0.0
    %876 = vmatpush1.msra.mxu0 0.0
    %877 = vmatprep.mubr.f32.mxu0 0.0
    %878 = vmatmul.mubr.f32.gmra.mrb[0].mxu0 %v741
    %v879 = vpop.f32.mrb[0].mxu0
    %v880 = vadd.f32 %v152, %v879
    %v881 = vpop.f32.mrb[0].mxu0
    %882 = vdwg.mxu0
    %883 = vmatprep.subr.mxu0 0.0
    %884 = vmatpush1.msra.mxu0 %v73
    %885 = vmatprep.subr.mxu0 0.0
    %886 = vmatpush1.msra.mxu0 %v74
    %887 = vmatprep.subr.mxu0 0.0
    %888 = vmatpush1.msra.mxu0 %v75
    %889 = vmatprep.subr.mxu0 0.0
    %890 = vmatpush1.msra.mxu0 %v76
    %891 = vmatprep.subr.mxu0 0.0
    %892 = vmatpush1.msra.mxu0 0.0
    %893 = vmatprep.subr.mxu0 0.0
    %894 = vmatpush1.msra.mxu0 0.0
    %895 = vmatprep.subr.mxu0 0.0
    %896 = vmatpush1.msra.mxu0 0.0
    %897 = vmatprep.subr.mxu0 0.0
    %898 = vmatpush1.msra.mxu0 0.0
    %899 = vmatprep.subr.mxu0 0.0
    %900 = vmatpush1.msra.mxu0 0.0
    %901 = vmatprep.subr.mxu0 0.0
    %902 = vmatpush1.msra.mxu0 0.0
    %903 = vmatprep.subr.mxu0 0.0
    %904 = vmatpush1.msra.mxu0 0.0
    %905 = vmatprep.subr.mxu0 0.0
    %906 = vmatpush1.msra.mxu0 0.0
    %907 = vmatprep.subr.mxu0 0.0
    %908 = vmatpush1.msra.mxu0 0.0
    %909 = vmatprep.subr.mxu0 0.0
    %910 = vmatpush1.msra.mxu0 0.0
    %911 = vmatprep.subr.mxu0 0.0
    %912 = vmatpush1.msra.mxu0 0.0
    %913 = vmatprep.subr.mxu0 0.0
    %914 = vmatpush1.msra.mxu0 0.0
    %915 = vmatprep.subr.mxu0 0.0
    %916 = vmatpush1.msra.mxu0 0.0
    %917 = vmatprep.subr.mxu0 0.0
    %918 = vmatpush1.msra.mxu0 0.0
    %919 = vmatprep.subr.mxu0 0.0
    %920 = vmatpush1.msra.mxu0 0.0
    %921 = vmatprep.subr.mxu0 0.0
    %922 = vmatpush1.msra.mxu0 0.0
    %923 = vmatprep.subr.mxu0 0.0
    %924 = vmatpush1.msra.mxu0 0.0
    %925 = vmatprep.subr.mxu0 0.0
    %926 = vmatpush1.msra.mxu0 0.0
    %927 = vmatprep.subr.mxu0 0.0
    %928 = vmatpush1.msra.mxu0 0.0
    %929 = vmatprep.subr.mxu0 0.0
    %930 = vmatpush1.msra.mxu0 0.0
    %931 = vmatprep.subr.mxu0 0.0
    %932 = vmatpush1.msra.mxu0 0.0
    %933 = vmatprep.subr.mxu0 0.0
    %934 = vmatpush1.msra.mxu0 0.0
    %935 = vmatprep.subr.mxu0 0.0
    %936 = vmatpush1.msra.mxu0 0.0
    %937 = vmatprep.subr.mxu0 0.0
    %938 = vmatpush1.msra.mxu0 0.0
    %939 = vmatprep.subr.mxu0 0.0
    %940 = vmatpush1.msra.mxu0 0.0
    %941 = vmatprep.subr.mxu0 0.0
    %942 = vmatpush1.msra.mxu0 0.0
    %943 = vmatprep.subr.mxu0 0.0
    %944 = vmatpush1.msra.mxu0 0.0
    %945 = vmatprep.subr.mxu0 0.0
    %946 = vmatpush1.msra.mxu0 0.0
    %947 = vmatprep.mubr.f32.mxu0 0.0
    %948 = vmatmul.mubr.f32.gmra.mrb[0].mxu0 %v741
    %v949 = vpop.f32.mrb[0].mxu0
    %v950 = vadd.f32 %v156, %v949
    %v951 = vpop.f32.mrb[0].mxu0
    %952 = vdwg.mxu0
    %953 = vmatprep.subr.mxu0 0.0
    %954 = vmatpush1.msra.mxu0 %v77
    %955 = vmatprep.subr.mxu0 0.0
    %956 = vmatpush1.msra.mxu0 %v78
    %957 = vmatprep.subr.mxu0 0.0
    %958 = vmatpush1.msra.mxu0 %v79
    %959 = vmatprep.subr.mxu0 0.0
    %960 = vmatpush1.msra.mxu0 %v80
    %961 = vmatprep.subr.mxu0 0.0
    %962 = vmatpush1.msra.mxu0 0.0
    %963 = vmatprep.subr.mxu0 0.0
    %964 = vmatpush1.msra.mxu0 0.0
    %965 = vmatprep.subr.mxu0 0.0
    %966 = vmatpush1.msra.mxu0 0.0
    %967 = vmatprep.subr.mxu0 0.0
    %968 = vmatpush1.msra.mxu0 0.0
    %969 = vmatprep.subr.mxu0 0.0
    %970 = vmatpush1.msra.mxu0 0.0
    %971 = vmatprep.subr.mxu0 0.0
    %972 = vmatpush1.msra.mxu0 0.0
    %973 = vmatprep.subr.mxu0 0.0
    %974 = vmatpush1.msra.mxu0 0.0
    %975 = vmatprep.subr.mxu0 0.0
    %976 = vmatpush1.msra.mxu0 0.0
    %977 = vmatprep.subr.mxu0 0.0
    %978 = vmatpush1.msra.mxu0 0.0
    %979 = vmatprep.subr.mxu0 0.0
    %980 = vmatpush1.msra.mxu0 0.0
    %981 = vmatprep.subr.mxu0 0.0
    %982 = vmatpush1.msra.mxu0 0.0
    %983 = vmatprep.subr.mxu0 0.0
    %984 = vmatpush1.msra.mxu0 0.0
    %985 = vmatprep.subr.mxu0 0.0
    %986 = vmatpush1.msra.mxu0 0.0
    %987 = vmatprep.subr.mxu0 0.0
    %988 = vmatpush1.msra.mxu0 0.0
    %989 = vmatprep.subr.mxu0 0.0
    %990 = vmatpush1.msra.mxu0 0.0
    %991 = vmatprep.subr.mxu0 0.0
    %992 = vmatpush1.msra.mxu0 0.0
    %993 = vmatprep.subr.mxu0 0.0
    %994 = vmatpush1.msra.mxu0 0.0
    %995 = vmatprep.subr.mxu0 0.0
    %996 = vmatpush1.msra.mxu0 0.0
    %997 = vmatprep.subr.mxu0 0.0
    %998 = vmatpush1.msra.mxu0 0.0
    %999 = vmatprep.subr.mxu0 0.0
    %1000 = vmatpush1.msra.mxu0 0.0
    %1001 = vmatprep.subr.mxu0 0.0
    %1002 = vmatpush1.msra.mxu0 0.0
    %1003 = vmatprep.subr.mxu0 0.0
    %1004 = vmatpush1.msra.mxu0 0.0
    %1005 = vmatprep.subr.mxu0 0.0
    %1006 = vmatpush1.msra.mxu0 0.0
    %1007 = vmatprep.subr.mxu0 0.0
    %1008 = vmatpush1.msra.mxu0 0.0
    %1009 = vmatprep.subr.mxu0 0.0
    %1010 = vmatpush1.msra.mxu0 0.0
    %1011 = vmatprep.subr.mxu0 0.0
    %1012 = vmatpush1.msra.mxu0 0.0
    %1013 = vmatprep.subr.mxu0 0.0
    %1014 = vmatpush1.msra.mxu0 0.0
    %1015 = vmatprep.subr.mxu0 0.0
    %1016 = vmatpush1.msra.mxu0 0.0
    %1017 = vmatprep.mubr.f32.mxu0 0.0
    %1018 = vmatmul.mubr.f32.gmra.mrb[0].mxu0 %v741
    %v1019 = vpop.f32.mrb[0].mxu0
    %v1020 = vadd.f32 %v160, %v1019
    %v1021 = vpop.f32.mrb[0].mxu0
    %1022 = vdwg.mxu0
    %vm1023 = vcmask 64512
    %v1025 = vsel %vm1023, %v244, 0
    %v1028 = vsel %vm1023, %v527, 0
    %1030 = vmatprep.subr.mxu0 0.0
    %1031 = vmatpush1.xpose.msra.mxu0 %v1028
    %1032 = vmatprep.subr.mxu0 0.0
    %1033 = vmatpush1.xpose.msra.mxu0 0.0
    %1034 = vmatprep.subr.mxu0 0.0
    %1035 = vmatpush1.xpose.msra.mxu0 0.0
    %1036 = vmatprep.subr.mxu0 0.0
    %1037 = vmatpush1.xpose.msra.mxu0 0.0
    %1038 = vmatprep.subr.mxu0 0.0
    %1039 = vmatpush1.xpose.msra.mxu0 0.0
    %1040 = vmatprep.subr.mxu0 0.0
    %1041 = vmatpush1.xpose.msra.mxu0 0.0
    %1042 = vmatprep.subr.mxu0 0.0
    %1043 = vmatpush1.xpose.msra.mxu0 0.0
    %1044 = vmatprep.subr.mxu0 0.0
    %1045 = vmatpush1.xpose.msra.mxu0 0.0
    %1046 = vmatprep.subr.mxu0 0.0
    %1047 = vmatpush1.xpose.msra.mxu0 0.0
    %1048 = vmatprep.subr.mxu0 0.0
    %1049 = vmatpush1.xpose.msra.mxu0 0.0
    %1050 = vmatprep.subr.mxu0 0.0
    %1051 = vmatpush1.xpose.msra.mxu0 0.0
    %1052 = vmatprep.subr.mxu0 0.0
    %1053 = vmatpush1.xpose.msra.mxu0 0.0
    %1054 = vmatprep.subr.mxu0 0.0
    %1055 = vmatpush1.xpose.msra.mxu0 0.0
    %1056 = vmatprep.subr.mxu0 0.0
    %1057 = vmatpush1.xpose.msra.mxu0 0.0
    %1058 = vmatprep.subr.mxu0 0.0
    %1059 = vmatpush1.xpose.msra.mxu0 0.0
    %1060 = vmatprep.subr.mxu0 0.0
    %1061 = vmatpush1.xpose.msra.mxu0 0.0
    %1062 = vmatprep.subr.mxu0 0.0
    %1063 = vmatpush1.xpose.msra.mxu0 0.0
    %1064 = vmatprep.subr.mxu0 0.0
    %1065 = vmatpush1.xpose.msra.mxu0 0.0
    %1066 = vmatprep.subr.mxu0 0.0
    %1067 = vmatpush1.xpose.msra.mxu0 0.0
    %1068 = vmatprep.subr.mxu0 0.0
    %1069 = vmatpush1.xpose.msra.mxu0 0.0
    %1070 = vmatprep.subr.mxu0 0.0
    %1071 = vmatpush1.xpose.msra.mxu0 0.0
    %1072 = vmatprep.subr.mxu0 0.0
    %1073 = vmatpush1.xpose.msra.mxu0 0.0
    %1074 = vmatprep.subr.mxu0 0.0
    %1075 = vmatpush1.xpose.msra.mxu0 0.0
    %1076 = vmatprep.subr.mxu0 0.0
    %1077 = vmatpush1.xpose.msra.mxu0 0.0
    %1078 = vmatprep.subr.mxu0 0.0
    %1079 = vmatpush1.xpose.msra.mxu0 0.0
    %1080 = vmatprep.subr.mxu0 0.0
    %1081 = vmatpush1.xpose.msra.mxu0 0.0
    %1082 = vmatprep.subr.mxu0 0.0
    %1083 = vmatpush1.xpose.msra.mxu0 0.0
    %1084 = vmatprep.subr.mxu0 0.0
    %1085 = vmatpush1.xpose.msra.mxu0 0.0
    %1086 = vmatprep.subr.mxu0 0.0
    %1087 = vmatpush1.xpose.msra.mxu0 0.0
    %1088 = vmatprep.subr.mxu0 0.0
    %1089 = vmatpush1.xpose.msra.mxu0 0.0
    %1090 = vmatprep.subr.mxu0 0.0
    %1091 = vmatpush1.xpose.msra.mxu0 0.0
    %1092 = vmatprep.subr.mxu0 0.0
    %1093 = vmatpush1.xpose.msra.mxu0 0.0
    %1094 = vmatprep.mubr.f32.mxu0 0.0
    %1095 = vmatmul.mubr.f32.gmra.mrb[0].mxu0 %v1025
    %v1096 = vpop.f32.mrb[0].mxu0
    %v1097 = vadd.f32 0.0, %v1096
    %v1098 = vpop.f32.mrb[0].mxu0
    %1099 = vdwg.mxu0
    %v1101 = vsel %vm1023, %v314, 0
    %v1104 = vsel %vm1023, %v597, 0
    %1106 = vmatprep.subr.mxu0 0.0
    %1107 = vmatpush1.xpose.msra.mxu0 %v1104
    %1108 = vmatprep.subr.mxu0 0.0
    %1109 = vmatpush1.xpose.msra.mxu0 0.0
    %1110 = vmatprep.subr.mxu0 0.0
    %1111 = vmatpush1.xpose.msra.mxu0 0.0
    %1112 = vmatprep.subr.mxu0 0.0
    %1113 = vmatpush1.xpose.msra.mxu0 0.0
    %1114 = vmatprep.subr.mxu0 0.0
    %1115 = vmatpush1.xpose.msra.mxu0 0.0
    %1116 = vmatprep.subr.mxu0 0.0
    %1117 = vmatpush1.xpose.msra.mxu0 0.0
    %1118 = vmatprep.subr.mxu0 0.0
    %1119 = vmatpush1.xpose.msra.mxu0 0.0
    %1120 = vmatprep.subr.mxu0 0.0
    %1121 = vmatpush1.xpose.msra.mxu0 0.0
    %1122 = vmatprep.subr.mxu0 0.0
    %1123 = vmatpush1.xpose.msra.mxu0 0.0
    %1124 = vmatprep.subr.mxu0 0.0
    %1125 = vmatpush1.xpose.msra.mxu0 0.0
    %1126 = vmatprep.subr.mxu0 0.0
    %1127 = vmatpush1.xpose.msra.mxu0 0.0
    %1128 = vmatprep.subr.mxu0 0.0
    %1129 = vmatpush1.xpose.msra.mxu0 0.0
    %1130 = vmatprep.subr.mxu0 0.0
    %1131 = vmatpush1.xpose.msra.mxu0 0.0
    %1132 = vmatprep.subr.mxu0 0.0
    %1133 = vmatpush1.xpose.msra.mxu0 0.0
    %1134 = vmatprep.subr.mxu0 0.0
    %1135 = vmatpush1.xpose.msra.mxu0 0.0
    %1136 = vmatprep.subr.mxu0 0.0
    %1137 = vmatpush1.xpose.msra.mxu0 0.0
    %1138 = vmatprep.subr.mxu0 0.0
    %1139 = vmatpush1.xpose.msra.mxu0 0.0
    %1140 = vmatprep.subr.mxu0 0.0
    %1141 = vmatpush1.xpose.msra.mxu0 0.0
    %1142 = vmatprep.subr.mxu0 0.0
    %1143 = vmatpush1.xpose.msra.mxu0 0.0
    %1144 = vmatprep.subr.mxu0 0.0
    %1145 = vmatpush1.xpose.msra.mxu0 0.0
    %1146 = vmatprep.subr.mxu0 0.0
    %1147 = vmatpush1.xpose.msra.mxu0 0.0
    %1148 = vmatprep.subr.mxu0 0.0
    %1149 = vmatpush1.xpose.msra.mxu0 0.0
    %1150 = vmatprep.subr.mxu0 0.0
    %1151 = vmatpush1.xpose.msra.mxu0 0.0
    %1152 = vmatprep.subr.mxu0 0.0
    %1153 = vmatpush1.xpose.msra.mxu0 0.0
    %1154 = vmatprep.subr.mxu0 0.0
    %1155 = vmatpush1.xpose.msra.mxu0 0.0
    %1156 = vmatprep.subr.mxu0 0.0
    %1157 = vmatpush1.xpose.msra.mxu0 0.0
    %1158 = vmatprep.subr.mxu0 0.0
    %1159 = vmatpush1.xpose.msra.mxu0 0.0
    %1160 = vmatprep.subr.mxu0 0.0
    %1161 = vmatpush1.xpose.msra.mxu0 0.0
    %1162 = vmatprep.subr.mxu0 0.0
    %1163 = vmatpush1.xpose.msra.mxu0 0.0
    %1164 = vmatprep.subr.mxu0 0.0
    %1165 = vmatpush1.xpose.msra.mxu0 0.0
    %1166 = vmatprep.subr.mxu0 0.0
    %1167 = vmatpush1.xpose.msra.mxu0 0.0
    %1168 = vmatprep.subr.mxu0 0.0
    %1169 = vmatpush1.xpose.msra.mxu0 0.0
    %1170 = vmatprep.mubr.f32.mxu0 0.0
    %1171 = vmatmul.mubr.f32.gmra.mrb[0].mxu0 %v1101
    %v1172 = vpop.f32.mrb[0].mxu0
    %v1173 = vadd.f32 0.0, %v1172
    %v1174 = vpop.f32.mrb[0].mxu0
    %1175 = vdwg.mxu0
    %v1177 = vsel %vm1023, %v384, 0
    %v1180 = vsel %vm1023, %v667, 0
    %1182 = vmatprep.subr.mxu0 0.0
    %1183 = vmatpush1.xpose.msra.mxu0 %v1180
    %1184 = vmatprep.subr.mxu0 0.0
    %1185 = vmatpush1.xpose.msra.mxu0 0.0
    %1186 = vmatprep.subr.mxu0 0.0
    %1187 = vmatpush1.xpose.msra.mxu0 0.0
    %1188 = vmatprep.subr.mxu0 0.0
    %1189 = vmatpush1.xpose.msra.mxu0 0.0
    %1190 = vmatprep.subr.mxu0 0.0
    %1191 = vmatpush1.xpose.msra.mxu0 0.0
    %1192 = vmatprep.subr.mxu0 0.0
    %1193 = vmatpush1.xpose.msra.mxu0 0.0
    %1194 = vmatprep.subr.mxu0 0.0
    %1195 = vmatpush1.xpose.msra.mxu0 0.0
    %1196 = vmatprep.subr.mxu0 0.0
    %1197 = vmatpush1.xpose.msra.mxu0 0.0
    %1198 = vmatprep.subr.mxu0 0.0
    %1199 = vmatpush1.xpose.msra.mxu0 0.0
    %1200 = vmatprep.subr.mxu0 0.0
    %1201 = vmatpush1.xpose.msra.mxu0 0.0
    %1202 = vmatprep.subr.mxu0 0.0
    %1203 = vmatpush1.xpose.msra.mxu0 0.0
    %1204 = vmatprep.subr.mxu0 0.0
    %1205 = vmatpush1.xpose.msra.mxu0 0.0
    %1206 = vmatprep.subr.mxu0 0.0
    %1207 = vmatpush1.xpose.msra.mxu0 0.0
    %1208 = vmatprep.subr.mxu0 0.0
    %1209 = vmatpush1.xpose.msra.mxu0 0.0
    %1210 = vmatprep.subr.mxu0 0.0
    %1211 = vmatpush1.xpose.msra.mxu0 0.0
    %1212 = vmatprep.subr.mxu0 0.0
    %1213 = vmatpush1.xpose.msra.mxu0 0.0
    %1214 = vmatprep.subr.mxu0 0.0
    %1215 = vmatpush1.xpose.msra.mxu0 0.0
    %1216 = vmatprep.subr.mxu0 0.0
    %1217 = vmatpush1.xpose.msra.mxu0 0.0
    %1218 = vmatprep.subr.mxu0 0.0
    %1219 = vmatpush1.xpose.msra.mxu0 0.0
    %1220 = vmatprep.subr.mxu0 0.0
    %1221 = vmatpush1.xpose.msra.mxu0 0.0
    %1222 = vmatprep.subr.mxu0 0.0
    %1223 = vmatpush1.xpose.msra.mxu0 0.0
    %1224 = vmatprep.subr.mxu0 0.0
    %1225 = vmatpush1.xpose.msra.mxu0 0.0
    %1226 = vmatprep.subr.mxu0 0.0
    %1227 = vmatpush1.xpose.msra.mxu0 0.0
    %1228 = vmatprep.subr.mxu0 0.0
    %1229 = vmatpush1.xpose.msra.mxu0 0.0
    %1230 = vmatprep.subr.mxu0 0.0
    %1231 = vmatpush1.xpose.msra.mxu0 0.0
    %1232 = vmatprep.subr.mxu0 0.0
    %1233 = vmatpush1.xpose.msra.mxu0 0.0
    %1234 = vmatprep.subr.mxu0 0.0
    %1235 = vmatpush1.xpose.msra.mxu0 0.0
    %1236 = vmatprep.subr.mxu0 0.0
    %1237 = vmatpush1.xpose.msra.mxu0 0.0
    %1238 = vmatprep.subr.mxu0 0.0
    %1239 = vmatpush1.xpose.msra.mxu0 0.0
    %1240 = vmatprep.subr.mxu0 0.0
    %1241 = vmatpush1.xpose.msra.mxu0 0.0
    %1242 = vmatprep.subr.mxu0 0.0
    %1243 = vmatpush1.xpose.msra.mxu0 0.0
    %1244 = vmatprep.subr.mxu0 0.0
    %1245 = vmatpush1.xpose.msra.mxu0 0.0
    %1246 = vmatprep.mubr.f32.mxu0 0.0
    %1247 = vmatmul.mubr.f32.gmra.mrb[0].mxu0 %v1177
    %v1248 = vpop.f32.mrb[0].mxu0
    %v1249 = vadd.f32 0.0, %v1248
    %v1250 = vpop.f32.mrb[0].mxu0
    %1251 = vdwg.mxu0
    %v1253 = vsel %vm1023, %v454, 0
    %v1256 = vsel %vm1023, %v737, 0
    %1258 = vmatprep.subr.mxu0 0.0
    %1259 = vmatpush1.xpose.msra.mxu0 %v1256
    %1260 = vmatprep.subr.mxu0 0.0
    %1261 = vmatpush1.xpose.msra.mxu0 0.0
    %1262 = vmatprep.subr.mxu0 0.0
    %1263 = vmatpush1.xpose.msra.mxu0 0.0
    %1264 = vmatprep.subr.mxu0 0.0
    %1265 = vmatpush1.xpose.msra.mxu0 0.0
    %1266 = vmatprep.subr.mxu0 0.0
    %1267 = vmatpush1.xpose.msra.mxu0 0.0
    %1268 = vmatprep.subr.mxu0 0.0
    %1269 = vmatpush1.xpose.msra.mxu0 0.0
    %1270 = vmatprep.subr.mxu0 0.0
    %1271 = vmatpush1.xpose.msra.mxu0 0.0
    %1272 = vmatprep.subr.mxu0 0.0
    %1273 = vmatpush1.xpose.msra.mxu0 0.0
    %1274 = vmatprep.subr.mxu0 0.0
    %1275 = vmatpush1.xpose.msra.mxu0 0.0
    %1276 = vmatprep.subr.mxu0 0.0
    %1277 = vmatpush1.xpose.msra.mxu0 0.0
    %1278 = vmatprep.subr.mxu0 0.0
    %1279 = vmatpush1.xpose.msra.mxu0 0.0
    %1280 = vmatprep.subr.mxu0 0.0
    %1281 = vmatpush1.xpose.msra.mxu0 0.0
    %1282 = vmatprep.subr.mxu0 0.0
    %1283 = vmatpush1.xpose.msra.mxu0 0.0
    %1284 = vmatprep.subr.mxu0 0.0
    %1285 = vmatpush1.xpose.msra.mxu0 0.0
    %1286 = vmatprep.subr.mxu0 0.0
    %1287 = vmatpush1.xpose.msra.mxu0 0.0
    %1288 = vmatprep.subr.mxu0 0.0
    %1289 = vmatpush1.xpose.msra.mxu0 0.0
    %1290 = vmatprep.subr.mxu0 0.0
    %1291 = vmatpush1.xpose.msra.mxu0 0.0
    %1292 = vmatprep.subr.mxu0 0.0
    %1293 = vmatpush1.xpose.msra.mxu0 0.0
    %1294 = vmatprep.subr.mxu0 0.0
    %1295 = vmatpush1.xpose.msra.mxu0 0.0
    %1296 = vmatprep.subr.mxu0 0.0
    %1297 = vmatpush1.xpose.msra.mxu0 0.0
    %1298 = vmatprep.subr.mxu0 0.0
    %1299 = vmatpush1.xpose.msra.mxu0 0.0
    %1300 = vmatprep.subr.mxu0 0.0
    %1301 = vmatpush1.xpose.msra.mxu0 0.0
    %1302 = vmatprep.subr.mxu0 0.0
    %1303 = vmatpush1.xpose.msra.mxu0 0.0
    %1304 = vmatprep.subr.mxu0 0.0
    %1305 = vmatpush1.xpose.msra.mxu0 0.0
    %1306 = vmatprep.subr.mxu0 0.0
    %1307 = vmatpush1.xpose.msra.mxu0 0.0
    %1308 = vmatprep.subr.mxu0 0.0
    %1309 = vmatpush1.xpose.msra.mxu0 0.0
    %1310 = vmatprep.subr.mxu0 0.0
    %1311 = vmatpush1.xpose.msra.mxu0 0.0
    %1312 = vmatprep.subr.mxu0 0.0
    %1313 = vmatpush1.xpose.msra.mxu0 0.0
    %1314 = vmatprep.subr.mxu0 0.0
    %1315 = vmatpush1.xpose.msra.mxu0 0.0
    %1316 = vmatprep.subr.mxu0 0.0
    %1317 = vmatpush1.xpose.msra.mxu0 0.0
    %1318 = vmatprep.subr.mxu0 0.0
    %1319 = vmatpush1.xpose.msra.mxu0 0.0
    %1320 = vmatprep.subr.mxu0 0.0
    %1321 = vmatpush1.xpose.msra.mxu0 0.0
    %1322 = vmatprep.mubr.f32.mxu0 0.0
    %1323 = vmatmul.mubr.f32.gmra.mrb[0].mxu0 %v1253
    %v1324 = vpop.f32.mrb[0].mxu0
    %v1325 = vadd.f32 0.0, %v1324
    %v1326 = vpop.f32.mrb[0].mxu0
    %1327 = vdwg.mxu0
    %v1328 = vld [vmem:[%s3] sm:$0x1]
    %v1330 = vlaneseq
    %v1331 = vshrl.u32 %v1330, 7
    %v1332 = vsub.s32 0, %v1331
    %v1333 = vrot.slane %v1328, %v1332
    %vm1335 = vcmp.gt.f32.partialorder %v1333, 0.0
    %v1336 = vsel %vm1335, %v1097, -1e+10
    %v1337 = vsel %vm1335, %v1173, -1e+10
    %v1338 = vsel %vm1335, %v1249, -1e+10
    %v1339 = vsel %vm1335, %v1325, -1e+10
    %v1340 = vsel %vm1023, %v1336, -inf
    %1341 = vmax.xlane.f32.xlu0 %v1340
    %v1342 = vpop.xlane.xlu0 %1341
    %v1343 = vsel %vm1023, %v1337, -inf
    %1344 = vmax.xlane.f32.xlu0 %v1343
    %v1345 = vpop.xlane.xlu0 %1344
    %v1346 = vsel %vm1023, %v1338, -inf
    %1347 = vmax.xlane.f32.xlu0 %v1346
    %v1348 = vpop.xlane.xlu0 %1347
    %v1349 = vsel %vm1023, %v1339, -inf
    %1350 = vmax.xlane.f32.xlu0 %v1349
    %v1351 = vpop.xlane.xlu0 %1350
    %v1352 = vsub.f32 %v1336, %v1342
    %v1353 = vsub.f32 %v1337, %v1345
    %v1354 = vsub.f32 %v1338, %v1348
    %v1355 = vsub.f32 %v1339, %v1351
    %v1356 = vmul.f32 %v1352, 1.442695
    %v1357 = vpow.pop %v1356
    %v1358 = vmul.f32 %v1353, 1.442695
    %v1359 = vpow.pop %v1358
    %v1360 = vmul.f32 %v1354, 1.442695
    %v1361 = vpow.pop %v1360
    %v1362 = vmul.f32 %v1355, 1.442695
    %v1363 = vpow.pop %v1362
    %v1364 = vsel %vm1023, %v1357, 0.0
    %1365 = vadd.xlane.f32.xlu0 %v1364
    %v1366 = vpop.xlane.xlu0 %1365
    %v1367 = vsel %vm1023, %v1359, 0.0
    %1368 = vadd.xlane.f32.xlu0 %v1367
    %v1369 = vpop.xlane.xlu0 %1368
    %v1370 = vsel %vm1023, %v1361, 0.0
    %1371 = vadd.xlane.f32.xlu0 %v1370
    %v1372 = vpop.xlane.xlu0 %1371
    %v1373 = vsel %vm1023, %v1363, 0.0
    %1374 = vadd.xlane.f32.xlu0 %v1373
    %v1375 = vpop.xlane.xlu0 %1374
    %v1376 = vrcp.pop %v1366
    %v1377 = vmul.f32 %v1357, %v1376
    %v1378 = vrcp.pop %v1369
    %v1379 = vmul.f32 %v1359, %v1378
    %v1380 = vrcp.pop %v1372
    %v1381 = vmul.f32 %v1361, %v1380
    %v1382 = vrcp.pop %v1375
    %v1383 = vmul.f32 %v1363, %v1382
    %1384 = vst.msk [vmem:[#allocation4] sm:$0xff] %vm1023, %v1377
    %1385 = vst.msk [vmem:[#allocation4 + $0x8] sm:$0xff] %vm1023, %v1379
    %1386 = vst.msk [vmem:[#allocation4 + $0x10] sm:$0xff] %vm1023, %v1381
    %1387 = vst.msk [vmem:[#allocation4 + $0x18] sm:$0xff] %vm1023, %v1383
    %v1389 = vsel %vm1023, %v1377, 0
    %1391 = vmatprep.subr.mxu0 0.0
    %1392 = vmatpush1.msra.mxu0 %v810
    %1393 = vmatprep.subr.mxu0 0.0
    %1394 = vmatpush1.msra.mxu0 0.0
    %1395 = vmatprep.subr.mxu0 0.0
    %1396 = vmatpush1.msra.mxu0 0.0
    %1397 = vmatprep.subr.mxu0 0.0
    %1398 = vmatpush1.msra.mxu0 0.0
    %1399 = vmatprep.subr.mxu0 0.0
    %1400 = vmatpush1.msra.mxu0 0.0
    %1401 = vmatprep.subr.mxu0 0.0
    %1402 = vmatpush1.msra.mxu0 0.0
    %1403 = vmatprep.subr.mxu0 0.0
    %1404 = vmatpush1.msra.mxu0 0.0
    %1405 = vmatprep.subr.mxu0 0.0
    %1406 = vmatpush1.msra.mxu0 0.0
    %1407 = vmatprep.subr.mxu0 0.0
    %1408 = vmatpush1.msra.mxu0 0.0
    %1409 = vmatprep.subr.mxu0 0.0
    %1410 = vmatpush1.msra.mxu0 0.0
    %1411 = vmatprep.subr.mxu0 0.0
    %1412 = vmatpush1.msra.mxu0 0.0
    %1413 = vmatprep.subr.mxu0 0.0
    %1414 = vmatpush1.msra.mxu0 0.0
    %1415 = vmatprep.subr.mxu0 0.0
    %1416 = vmatpush1.msra.mxu0 0.0
    %1417 = vmatprep.subr.mxu0 0.0
    %1418 = vmatpush1.msra.mxu0 0.0
    %1419 = vmatprep.subr.mxu0 0.0
    %1420 = vmatpush1.msra.mxu0 0.0
    %1421 = vmatprep.subr.mxu0 0.0
    %1422 = vmatpush1.msra.mxu0 0.0
    %1423 = vmatprep.subr.mxu0 0.0
    %1424 = vmatpush1.msra.mxu0 0.0
    %1425 = vmatprep.subr.mxu0 0.0
    %1426 = vmatpush1.msra.mxu0 0.0
    %1427 = vmatprep.subr.mxu0 0.0
    %1428 = vmatpush1.msra.mxu0 0.0
    %1429 = vmatprep.subr.mxu0 0.0
    %1430 = vmatpush1.msra.mxu0 0.0
    %1431 = vmatprep.subr.mxu0 0.0
    %1432 = vmatpush1.msra.mxu0 0.0
    %1433 = vmatprep.subr.mxu0 0.0
    %1434 = vmatpush1.msra.mxu0 0.0
    %1435 = vmatprep.subr.mxu0 0.0
    %1436 = vmatpush1.msra.mxu0 0.0
    %1437 = vmatprep.subr.mxu0 0.0
    %1438 = vmatpush1.msra.mxu0 0.0
    %1439 = vmatprep.subr.mxu0 0.0
    %1440 = vmatpush1.msra.mxu0 0.0
    %1441 = vmatprep.subr.mxu0 0.0
    %1442 = vmatpush1.msra.mxu0 0.0
    %1443 = vmatprep.subr.mxu0 0.0
    %1444 = vmatpush1.msra.mxu0 0.0
    %1445 = vmatprep.subr.mxu0 0.0
    %1446 = vmatpush1.msra.mxu0 0.0
    %1447 = vmatprep.subr.mxu0 0.0
    %1448 = vmatpush1.msra.mxu0 0.0
    %1449 = vmatprep.subr.mxu0 0.0
    %1450 = vmatpush1.msra.mxu0 0.0
    %1451 = vmatprep.subr.mxu0 0.0
    %1452 = vmatpush1.msra.mxu0 0.0
    %1453 = vmatprep.subr.mxu0 0.0
    %1454 = vmatpush1.msra.mxu0 0.0
    %1455 = vmatprep.mubr.f32.mxu0 0.0
    %1456 = vmatmul.mubr.f32.gmra.mrb[0].mxu0 %v1389
    %v1457 = vpop.f32.mrb[0].mxu0
    %v1458 = vadd.f32 0.0, %v1457
    %v1459 = vpop.f32.mrb[0].mxu0
    %1460 = vdwg.mxu0
    %v1462 = vsel %vm1023, %v1379, 0
    %1464 = vmatprep.subr.mxu0 0.0
    %1465 = vmatpush1.msra.mxu0 %v880
    %1466 = vmatprep.subr.mxu0 0.0
    %1467 = vmatpush1.msra.mxu0 0.0
    %1468 = vmatprep.subr.mxu0 0.0
    %1469 = vmatpush1.msra.mxu0 0.0
    %1470 = vmatprep.subr.mxu0 0.0
    %1471 = vmatpush1.msra.mxu0 0.0
    %1472 = vmatprep.subr.mxu0 0.0
    %1473 = vmatpush1.msra.mxu0 0.0
    %1474 = vmatprep.subr.mxu0 0.0
    %1475 = vmatpush1.msra.mxu0 0.0
    %1476 = vmatprep.subr.mxu0 0.0
    %1477 = vmatpush1.msra.mxu0 0.0
    %1478 = vmatprep.subr.mxu0 0.0
    %1479 = vmatpush1.msra.mxu0 0.0
    %1480 = vmatprep.subr.mxu0 0.0
    %1481 = vmatpush1.msra.mxu0 0.0
    %1482 = vmatprep.subr.mxu0 0.0
    %1483 = vmatpush1.msra.mxu0 0.0
    %1484 = vmatprep.subr.mxu0 0.0
    %1485 = vmatpush1.msra.mxu0 0.0
    %1486 = vmatprep.subr.mxu0 0.0
    %1487 = vmatpush1.msra.mxu0 0.0
    %1488 = vmatprep.subr.mxu0 0.0
    %1489 = vmatpush1.msra.mxu0 0.0
    %1490 = vmatprep.subr.mxu0 0.0
    %1491 = vmatpush1.msra.mxu0 0.0
    %1492 = vmatprep.subr.mxu0 0.0
    %1493 = vmatpush1.msra.mxu0 0.0
    %1494 = vmatprep.subr.mxu0 0.0
    %1495 = vmatpush1.msra.mxu0 0.0
    %1496 = vmatprep.subr.mxu0 0.0
    %1497 = vmatpush1.msra.mxu0 0.0
    %1498 = vmatprep.subr.mxu0 0.0
    %1499 = vmatpush1.msra.mxu0 0.0
    %1500 = vmatprep.subr.mxu0 0.0
    %1501 = vmatpush1.msra.mxu0 0.0
    %1502 = vmatprep.subr.mxu0 0.0
    %1503 = vmatpush1.msra.mxu0 0.0
    %1504 = vmatprep.subr.mxu0 0.0
    %1505 = vmatpush1.msra.mxu0 0.0
    %1506 = vmatprep.subr.mxu0 0.0
    %1507 = vmatpush1.msra.mxu0 0.0
    %1508 = vmatprep.subr.mxu0 0.0
    %1509 = vmatpush1.msra.mxu0 0.0
    %1510 = vmatprep.subr.mxu0 0.0
    %1511 = vmatpush1.msra.mxu0 0.0
    %1512 = vmatprep.subr.mxu0 0.0
    %1513 = vmatpush1.msra.mxu0 0.0
    %1514 = vmatprep.subr.mxu0 0.0
    %1515 = vmatpush1.msra.mxu0 0.0
    %1516 = vmatprep.subr.mxu0 0.0
    %1517 = vmatpush1.msra.mxu0 0.0
    %1518 = vmatprep.subr.mxu0 0.0
    %1519 = vmatpush1.msra.mxu0 0.0
    %1520 = vmatprep.subr.mxu0 0.0
    %1521 = vmatpush1.msra.mxu0 0.0
    %1522 = vmatprep.subr.mxu0 0.0
    %1523 = vmatpush1.msra.mxu0 0.0
    %1524 = vmatprep.subr.mxu0 0.0
    %1525 = vmatpush1.msra.mxu0 0.0
    %1526 = vmatprep.subr.mxu0 0.0
    %1527 = vmatpush1.msra.mxu0 0.0
    %1528 = vmatprep.mubr.f32.mxu0 0.0
    %1529 = vmatmul.mubr.f32.gmra.mrb[0].mxu0 %v1462
    %v1530 = vpop.f32.mrb[0].mxu0
    %v1531 = vadd.f32 0.0, %v1530
    %v1532 = vpop.f32.mrb[0].mxu0
    %1533 = vdwg.mxu0
    %v1535 = vsel %vm1023, %v1381, 0
    %1537 = vmatprep.subr.mxu0 0.0
    %1538 = vmatpush1.msra.mxu0 %v950
    %1539 = vmatprep.subr.mxu0 0.0
    %1540 = vmatpush1.msra.mxu0 0.0
    %1541 = vmatprep.subr.mxu0 0.0
    %1542 = vmatpush1.msra.mxu0 0.0
    %1543 = vmatprep.subr.mxu0 0.0
    %1544 = vmatpush1.msra.mxu0 0.0
    %1545 = vmatprep.subr.mxu0 0.0
    %1546 = vmatpush1.msra.mxu0 0.0
    %1547 = vmatprep.subr.mxu0 0.0
    %1548 = vmatpush1.msra.mxu0 0.0
    %1549 = vmatprep.subr.mxu0 0.0
    %1550 = vmatpush1.msra.mxu0 0.0
    %1551 = vmatprep.subr.mxu0 0.0
    %1552 = vmatpush1.msra.mxu0 0.0
    %1553 = vmatprep.subr.mxu0 0.0
    %1554 = vmatpush1.msra.mxu0 0.0
    %1555 = vmatprep.subr.mxu0 0.0
    %1556 = vmatpush1.msra.mxu0 0.0
    %1557 = vmatprep.subr.mxu0 0.0
    %1558 = vmatpush1.msra.mxu0 0.0
    %1559 = vmatprep.subr.mxu0 0.0
    %1560 = vmatpush1.msra.mxu0 0.0
    %1561 = vmatprep.subr.mxu0 0.0
    %1562 = vmatpush1.msra.mxu0 0.0
    %1563 = vmatprep.subr.mxu0 0.0
    %1564 = vmatpush1.msra.mxu0 0.0
    %1565 = vmatprep.subr.mxu0 0.0
    %1566 = vmatpush1.msra.mxu0 0.0
    %1567 = vmatprep.subr.mxu0 0.0
    %1568 = vmatpush1.msra.mxu0 0.0
    %1569 = vmatprep.subr.mxu0 0.0
    %1570 = vmatpush1.msra.mxu0 0.0
    %1571 = vmatprep.subr.mxu0 0.0
    %1572 = vmatpush1.msra.mxu0 0.0
    %1573 = vmatprep.subr.mxu0 0.0
    %1574 = vmatpush1.msra.mxu0 0.0
    %1575 = vmatprep.subr.mxu0 0.0
    %1576 = vmatpush1.msra.mxu0 0.0
    %1577 = vmatprep.subr.mxu0 0.0
    %1578 = vmatpush1.msra.mxu0 0.0
    %1579 = vmatprep.subr.mxu0 0.0
    %1580 = vmatpush1.msra.mxu0 0.0
    %1581 = vmatprep.subr.mxu0 0.0
    %1582 = vmatpush1.msra.mxu0 0.0
    %1583 = vmatprep.subr.mxu0 0.0
    %1584 = vmatpush1.msra.mxu0 0.0
    %1585 = vmatprep.subr.mxu0 0.0
    %1586 = vmatpush1.msra.mxu0 0.0
    %1587 = vmatprep.subr.mxu0 0.0
    %1588 = vmatpush1.msra.mxu0 0.0
    %1589 = vmatprep.subr.mxu0 0.0
    %1590 = vmatpush1.msra.mxu0 0.0
    %1591 = vmatprep.subr.mxu0 0.0
    %1592 = vmatpush1.msra.mxu0 0.0
    %1593 = vmatprep.subr.mxu0 0.0
    %1594 = vmatpush1.msra.mxu0 0.0
    %1595 = vmatprep.subr.mxu0 0.0
    %1596 = vmatpush1.msra.mxu0 0.0
    %1597 = vmatprep.subr.mxu0 0.0
    %1598 = vmatpush1.msra.mxu0 0.0
    %1599 = vmatprep.subr.mxu0 0.0
    %1600 = vmatpush1.msra.mxu0 0.0
    %1601 = vmatprep.mubr.f32.mxu0 0.0
    %1602 = vmatmul.mubr.f32.gmra.mrb[0].mxu0 %v1535
    %v1603 = vpop.f32.mrb[0].mxu0
    %v1604 = vadd.f32 0.0, %v1603
    %v1605 = vpop.f32.mrb[0].mxu0
    %1606 = vdwg.mxu0
    %v1608 = vsel %vm1023, %v1383, 0
    %1610 = vmatprep.subr.mxu0 0.0
    %1611 = vmatpush1.msra.mxu0 %v1020
    %1612 = vmatprep.subr.mxu0 0.0
    %1613 = vmatpush1.msra.mxu0 0.0
    %1614 = vmatprep.subr.mxu0 0.0
    %1615 = vmatpush1.msra.mxu0 0.0
    %1616 = vmatprep.subr.mxu0 0.0
    %1617 = vmatpush1.msra.mxu0 0.0
    %1618 = vmatprep.subr.mxu0 0.0
    %1619 = vmatpush1.msra.mxu0 0.0
    %1620 = vmatprep.subr.mxu0 0.0
    %1621 = vmatpush1.msra.mxu0 0.0
    %1622 = vmatprep.subr.mxu0 0.0
    %1623 = vmatpush1.msra.mxu0 0.0
    %1624 = vmatprep.subr.mxu0 0.0
    %1625 = vmatpush1.msra.mxu0 0.0
    %1626 = vmatprep.subr.mxu0 0.0
    %1627 = vmatpush1.msra.mxu0 0.0
    %1628 = vmatprep.subr.mxu0 0.0
    %1629 = vmatpush1.msra.mxu0 0.0
    %1630 = vmatprep.subr.mxu0 0.0
    %1631 = vmatpush1.msra.mxu0 0.0
    %1632 = vmatprep.subr.mxu0 0.0
    %1633 = vmatpush1.msra.mxu0 0.0
    %1634 = vmatprep.subr.mxu0 0.0
    %1635 = vmatpush1.msra.mxu0 0.0
    %1636 = vmatprep.subr.mxu0 0.0
    %1637 = vmatpush1.msra.mxu0 0.0
    %1638 = vmatprep.subr.mxu0 0.0
    %1639 = vmatpush1.msra.mxu0 0.0
    %1640 = vmatprep.subr.mxu0 0.0
    %1641 = vmatpush1.msra.mxu0 0.0
    %1642 = vmatprep.subr.mxu0 0.0
    %1643 = vmatpush1.msra.mxu0 0.0
    %1644 = vmatprep.subr.mxu0 0.0
    %1645 = vmatpush1.msra.mxu0 0.0
    %1646 = vmatprep.subr.mxu0 0.0
    %1647 = vmatpush1.msra.mxu0 0.0
    %1648 = vmatprep.subr.mxu0 0.0
    %1649 = vmatpush1.msra.mxu0 0.0
    %1650 = vmatprep.subr.mxu0 0.0
    %1651 = vmatpush1.msra.mxu0 0.0
    %1652 = vmatprep.subr.mxu0 0.0
    %1653 = vmatpush1.msra.mxu0 0.0
    %1654 = vmatprep.subr.mxu0 0.0
    %1655 = vmatpush1.msra.mxu0 0.0
    %1656 = vmatprep.subr.mxu0 0.0
    %1657 = vmatpush1.msra.mxu0 0.0
    %1658 = vmatprep.subr.mxu0 0.0
    %1659 = vmatpush1.msra.mxu0 0.0
    %1660 = vmatprep.subr.mxu0 0.0
    %1661 = vmatpush1.msra.mxu0 0.0
    %1662 = vmatprep.subr.mxu0 0.0
    %1663 = vmatpush1.msra.mxu0 0.0
    %1664 = vmatprep.subr.mxu0 0.0
    %1665 = vmatpush1.msra.mxu0 0.0
    %1666 = vmatprep.subr.mxu0 0.0
    %1667 = vmatpush1.msra.mxu0 0.0
    %1668 = vmatprep.subr.mxu0 0.0
    %1669 = vmatpush1.msra.mxu0 0.0
    %1670 = vmatprep.subr.mxu0 0.0
    %1671 = vmatpush1.msra.mxu0 0.0
    %1672 = vmatprep.subr.mxu0 0.0
    %1673 = vmatpush1.msra.mxu0 0.0
    %1674 = vmatprep.mubr.f32.mxu0 0.0
    %1675 = vmatmul.mubr.f32.gmra.mrb[0].mxu0 %v1608
    %v1676 = vpop.f32.mrb[0].mxu0
    %v1677 = vadd.f32 0.0, %v1676
    %v1678 = vpop.f32.mrb[0].mxu0
    %1679 = vdwg.mxu0
    %v1681 = vsel %vm1023, %v1458, 0
    %1683 = vmatprep.subr.mxu0 0.0
    %1684 = vmatpush1.msra.mxu0 %v93
    %1685 = vmatprep.subr.mxu0 0.0
    %1686 = vmatpush1.msra.mxu0 0.0
    %1687 = vmatprep.subr.mxu0 0.0
    %1688 = vmatpush1.msra.mxu0 0.0
    %1689 = vmatprep.subr.mxu0 0.0
    %1690 = vmatpush1.msra.mxu0 0.0
    %1691 = vmatprep.subr.mxu0 0.0
    %1692 = vmatpush1.msra.mxu0 0.0
    %1693 = vmatprep.subr.mxu0 0.0
    %1694 = vmatpush1.msra.mxu0 0.0
    %1695 = vmatprep.subr.mxu0 0.0
    %1696 = vmatpush1.msra.mxu0 0.0
    %1697 = vmatprep.subr.mxu0 0.0
    %1698 = vmatpush1.msra.mxu0 0.0
    %1699 = vmatprep.subr.mxu0 0.0
    %1700 = vmatpush1.msra.mxu0 0.0
    %1701 = vmatprep.subr.mxu0 0.0
    %1702 = vmatpush1.msra.mxu0 0.0
    %1703 = vmatprep.subr.mxu0 0.0
    %1704 = vmatpush1.msra.mxu0 0.0
    %1705 = vmatprep.subr.mxu0 0.0
    %1706 = vmatpush1.msra.mxu0 0.0
    %1707 = vmatprep.subr.mxu0 0.0
    %1708 = vmatpush1.msra.mxu0 0.0
    %1709 = vmatprep.subr.mxu0 0.0
    %1710 = vmatpush1.msra.mxu0 0.0
    %1711 = vmatprep.subr.mxu0 0.0
    %1712 = vmatpush1.msra.mxu0 0.0
    %1713 = vmatprep.subr.mxu0 0.0
    %1714 = vmatpush1.msra.mxu0 0.0
    %1715 = vmatprep.subr.mxu0 0.0
    %1716 = vmatpush1.msra.mxu0 0.0
    %1717 = vmatprep.subr.mxu0 0.0
    %1718 = vmatpush1.msra.mxu0 0.0
    %1719 = vmatprep.subr.mxu0 0.0
    %1720 = vmatpush1.msra.mxu0 0.0
    %1721 = vmatprep.subr.mxu0 0.0
    %1722 = vmatpush1.msra.mxu0 0.0
    %1723 = vmatprep.subr.mxu0 0.0
    %1724 = vmatpush1.msra.mxu0 0.0
    %1725 = vmatprep.subr.mxu0 0.0
    %1726 = vmatpush1.msra.mxu0 0.0
    %1727 = vmatprep.subr.mxu0 0.0
    %1728 = vmatpush1.msra.mxu0 0.0
    %1729 = vmatprep.subr.mxu0 0.0
    %1730 = vmatpush1.msra.mxu0 0.0
    %1731 = vmatprep.subr.mxu0 0.0
    %1732 = vmatpush1.msra.mxu0 0.0
    %1733 = vmatprep.subr.mxu0 0.0
    %1734 = vmatpush1.msra.mxu0 0.0
    %1735 = vmatprep.subr.mxu0 0.0
    %1736 = vmatpush1.msra.mxu0 0.0
    %1737 = vmatprep.subr.mxu0 0.0
    %1738 = vmatpush1.msra.mxu0 0.0
    %1739 = vmatprep.subr.mxu0 0.0
    %1740 = vmatpush1.msra.mxu0 0.0
    %1741 = vmatprep.subr.mxu0 0.0
    %1742 = vmatpush1.msra.mxu0 0.0
    %1743 = vmatprep.subr.mxu0 0.0
    %1744 = vmatpush1.msra.mxu0 0.0
    %1745 = vmatprep.subr.mxu0 0.0
    %1746 = vmatpush1.msra.mxu0 0.0
    %1747 = vmatprep.mubr.f32.mxu0 0.0
    %1748 = vmatmul.mubr.f32.gmra.mrb[0].mxu0 %v1681
    %v1749 = vpop.f32.mrb[0].mxu0
    %v1750 = vadd.f32 0.0, %v1749
    %v1751 = vpop.f32.mrb[0].mxu0
    %1752 = vdwg.mxu0
    %v1754 = vsel %vm1023, %v1531, 0
    %1756 = vmatprep.subr.mxu0 0.0
    %1757 = vmatpush1.msra.mxu0 %v94
    %1758 = vmatprep.subr.mxu0 0.0
    %1759 = vmatpush1.msra.mxu0 0.0
    %1760 = vmatprep.subr.mxu0 0.0
    %1761 = vmatpush1.msra.mxu0 0.0
    %1762 = vmatprep.subr.mxu0 0.0
    %1763 = vmatpush1.msra.mxu0 0.0
    %1764 = vmatprep.subr.mxu0 0.0
    %1765 = vmatpush1.msra.mxu0 0.0
    %1766 = vmatprep.subr.mxu0 0.0
    %1767 = vmatpush1.msra.mxu0 0.0
    %1768 = vmatprep.subr.mxu0 0.0
    %1769 = vmatpush1.msra.mxu0 0.0
    %1770 = vmatprep.subr.mxu0 0.0
    %1771 = vmatpush1.msra.mxu0 0.0
    %1772 = vmatprep.subr.mxu0 0.0
    %1773 = vmatpush1.msra.mxu0 0.0
    %1774 = vmatprep.subr.mxu0 0.0
    %1775 = vmatpush1.msra.mxu0 0.0
    %1776 = vmatprep.subr.mxu0 0.0
    %1777 = vmatpush1.msra.mxu0 0.0
    %1778 = vmatprep.subr.mxu0 0.0
    %1779 = vmatpush1.msra.mxu0 0.0
    %1780 = vmatprep.subr.mxu0 0.0
    %1781 = vmatpush1.msra.mxu0 0.0
    %1782 = vmatprep.subr.mxu0 0.0
    %1783 = vmatpush1.msra.mxu0 0.0
    %1784 = vmatprep.subr.mxu0 0.0
    %1785 = vmatpush1.msra.mxu0 0.0
    %1786 = vmatprep.subr.mxu0 0.0
    %1787 = vmatpush1.msra.mxu0 0.0
    %1788 = vmatprep.subr.mxu0 0.0
    %1789 = vmatpush1.msra.mxu0 0.0
    %1790 = vmatprep.subr.mxu0 0.0
    %1791 = vmatpush1.msra.mxu0 0.0
    %1792 = vmatprep.subr.mxu0 0.0
    %1793 = vmatpush1.msra.mxu0 0.0
    %1794 = vmatprep.subr.mxu0 0.0
    %1795 = vmatpush1.msra.mxu0 0.0
    %1796 = vmatprep.subr.mxu0 0.0
    %1797 = vmatpush1.msra.mxu0 0.0
    %1798 = vmatprep.subr.mxu0 0.0
    %1799 = vmatpush1.msra.mxu0 0.0
    %1800 = vmatprep.subr.mxu0 0.0
    %1801 = vmatpush1.msra.mxu0 0.0
    %1802 = vmatprep.subr.mxu0 0.0
    %1803 = vmatpush1.msra.mxu0 0.0
    %1804 = vmatprep.subr.mxu0 0.0
    %1805 = vmatpush1.msra.mxu0 0.0
    %1806 = vmatprep.subr.mxu0 0.0
    %1807 = vmatpush1.msra.mxu0 0.0
    %1808 = vmatprep.subr.mxu0 0.0
    %1809 = vmatpush1.msra.mxu0 0.0
    %1810 = vmatprep.subr.mxu0 0.0
    %1811 = vmatpush1.msra.mxu0 0.0
    %1812 = vmatprep.subr.mxu0 0.0
    %1813 = vmatpush1.msra.mxu0 0.0
    %1814 = vmatprep.subr.mxu0 0.0
    %1815 = vmatpush1.msra.mxu0 0.0
    %1816 = vmatprep.subr.mxu0 0.0
    %1817 = vmatpush1.msra.mxu0 0.0
    %1818 = vmatprep.subr.mxu0 0.0
    %1819 = vmatpush1.msra.mxu0 0.0
    %1820 = vmatprep.mubr.f32.mxu0 0.0
    %1821 = vmatmul.mubr.f32.gmra.mrb[0].mxu0 %v1754
    %v1822 = vpop.f32.mrb[0].mxu0
    %v1823 = vadd.f32 0.0, %v1822
    %v1824 = vpop.f32.mrb[0].mxu0
    %1825 = vdwg.mxu0
    %v1827 = vsel %vm1023, %v1604, 0
    %1829 = vmatprep.subr.mxu0 0.0
    %1830 = vmatpush1.msra.mxu0 %v95
    %1831 = vmatprep.subr.mxu0 0.0
    %1832 = vmatpush1.msra.mxu0 0.0
    %1833 = vmatprep.subr.mxu0 0.0
    %1834 = vmatpush1.msra.mxu0 0.0
    %1835 = vmatprep.subr.mxu0 0.0
    %1836 = vmatpush1.msra.mxu0 0.0
    %1837 = vmatprep.subr.mxu0 0.0
    %1838 = vmatpush1.msra.mxu0 0.0
    %1839 = vmatprep.subr.mxu0 0.0
    %1840 = vmatpush1.msra.mxu0 0.0
    %1841 = vmatprep.subr.mxu0 0.0
    %1842 = vmatpush1.msra.mxu0 0.0
    %1843 = vmatprep.subr.mxu0 0.0
    %1844 = vmatpush1.msra.mxu0 0.0
    %1845 = vmatprep.subr.mxu0 0.0
    %1846 = vmatpush1.msra.mxu0 0.0
    %1847 = vmatprep.subr.mxu0 0.0
    %1848 = vmatpush1.msra.mxu0 0.0
    %1849 = vmatprep.subr.mxu0 0.0
    %1850 = vmatpush1.msra.mxu0 0.0
    %1851 = vmatprep.subr.mxu0 0.0
    %1852 = vmatpush1.msra.mxu0 0.0
    %1853 = vmatprep.subr.mxu0 0.0
    %1854 = vmatpush1.msra.mxu0 0.0
    %1855 = vmatprep.subr.mxu0 0.0
    %1856 = vmatpush1.msra.mxu0 0.0
    %1857 = vmatprep.subr.mxu0 0.0
    %1858 = vmatpush1.msra.mxu0 0.0
    %1859 = vmatprep.subr.mxu0 0.0
    %1860 = vmatpush1.msra.mxu0 0.0
    %1861 = vmatprep.subr.mxu0 0.0
    %1862 = vmatpush1.msra.mxu0 0.0
    %1863 = vmatprep.subr.mxu0 0.0
    %1864 = vmatpush1.msra.mxu0 0.0
    %1865 = vmatprep.subr.mxu0 0.0
    %1866 = vmatpush1.msra.mxu0 0.0
    %1867 = vmatprep.subr.mxu0 0.0
    %1868 = vmatpush1.msra.mxu0 0.0
    %1869 = vmatprep.subr.mxu0 0.0
    %1870 = vmatpush1.msra.mxu0 0.0
    %1871 = vmatprep.subr.mxu0 0.0
    %1872 = vmatpush1.msra.mxu0 0.0
    %1873 = vmatprep.subr.mxu0 0.0
    %1874 = vmatpush1.msra.mxu0 0.0
    %1875 = vmatprep.subr.mxu0 0.0
    %1876 = vmatpush1.msra.mxu0 0.0
    %1877 = vmatprep.subr.mxu0 0.0
    %1878 = vmatpush1.msra.mxu0 0.0
    %1879 = vmatprep.subr.mxu0 0.0
    %1880 = vmatpush1.msra.mxu0 0.0
    %1881 = vmatprep.subr.mxu0 0.0
    %1882 = vmatpush1.msra.mxu0 0.0
    %1883 = vmatprep.subr.mxu0 0.0
    %1884 = vmatpush1.msra.mxu0 0.0
    %1885 = vmatprep.subr.mxu0 0.0
    %1886 = vmatpush1.msra.mxu0 0.0
    %1887 = vmatprep.subr.mxu0 0.0
    %1888 = vmatpush1.msra.mxu0 0.0
    %1889 = vmatprep.subr.mxu0 0.0
    %1890 = vmatpush1.msra.mxu0 0.0
    %1891 = vmatprep.subr.mxu0 0.0
    %1892 = vmatpush1.msra.mxu0 0.0
    %1893 = vmatprep.mubr.f32.mxu0 0.0
    %1894 = vmatmul.mubr.f32.gmra.mrb[0].mxu0 %v1827
    %v1895 = vpop.f32.mrb[0].mxu0
    %v1896 = vadd.f32 0.0, %v1895
    %v1897 = vpop.f32.mrb[0].mxu0
    %1898 = vdwg.mxu0
    %v1900 = vsel %vm1023, %v1677, 0
    %1902 = vmatprep.subr.mxu0 0.0
    %1903 = vmatpush1.msra.mxu0 %v96
    %1904 = vmatprep.subr.mxu0 0.0
    %1905 = vmatpush1.msra.mxu0 0.0
    %1906 = vmatprep.subr.mxu0 0.0
    %1907 = vmatpush1.msra.mxu0 0.0
    %1908 = vmatprep.subr.mxu0 0.0
    %1909 = vmatpush1.msra.mxu0 0.0
    %1910 = vmatprep.subr.mxu0 0.0
    %1911 = vmatpush1.msra.mxu0 0.0
    %1912 = vmatprep.subr.mxu0 0.0
    %1913 = vmatpush1.msra.mxu0 0.0
    %1914 = vmatprep.subr.mxu0 0.0
    %1915 = vmatpush1.msra.mxu0 0.0
    %1916 = vmatprep.subr.mxu0 0.0
    %1917 = vmatpush1.msra.mxu0 0.0
    %1918 = vmatprep.subr.mxu0 0.0
    %1919 = vmatpush1.msra.mxu0 0.0
    %1920 = vmatprep.subr.mxu0 0.0
    %1921 = vmatpush1.msra.mxu0 0.0
    %1922 = vmatprep.subr.mxu0 0.0
    %1923 = vmatpush1.msra.mxu0 0.0
    %1924 = vmatprep.subr.mxu0 0.0
    %1925 = vmatpush1.msra.mxu0 0.0
    %1926 = vmatprep.subr.mxu0 0.0
    %1927 = vmatpush1.msra.mxu0 0.0
    %1928 = vmatprep.subr.mxu0 0.0
    %1929 = vmatpush1.msra.mxu0 0.0
    %1930 = vmatprep.subr.mxu0 0.0
    %1931 = vmatpush1.msra.mxu0 0.0
    %1932 = vmatprep.subr.mxu0 0.0
    %1933 = vmatpush1.msra.mxu0 0.0
    %1934 = vmatprep.subr.mxu0 0.0
    %1935 = vmatpush1.msra.mxu0 0.0
    %1936 = vmatprep.subr.mxu0 0.0
    %1937 = vmatpush1.msra.mxu0 0.0
    %1938 = vmatprep.subr.mxu0 0.0
    %1939 = vmatpush1.msra.mxu0 0.0
    %1940 = vmatprep.subr.mxu0 0.0
    %1941 = vmatpush1.msra.mxu0 0.0
    %1942 = vmatprep.subr.mxu0 0.0
    %1943 = vmatpush1.msra.mxu0 0.0
    %1944 = vmatprep.subr.mxu0 0.0
    %1945 = vmatpush1.msra.mxu0 0.0
    %1946 = vmatprep.subr.mxu0 0.0
    %1947 = vmatpush1.msra.mxu0 0.0
    %1948 = vmatprep.subr.mxu0 0.0
    %1949 = vmatpush1.msra.mxu0 0.0
    %1950 = vmatprep.subr.mxu0 0.0
    %1951 = vmatpush1.msra.mxu0 0.0
    %1952 = vmatprep.subr.mxu0 0.0
    %1953 = vmatpush1.msra.mxu0 0.0
    %1954 = vmatprep.subr.mxu0 0.0
    %1955 = vmatpush1.msra.mxu0 0.0
    %1956 = vmatprep.subr.mxu0 0.0
    %1957 = vmatpush1.msra.mxu0 0.0
    %1958 = vmatprep.subr.mxu0 0.0
    %1959 = vmatpush1.msra.mxu0 0.0
    %1960 = vmatprep.subr.mxu0 0.0
    %1961 = vmatpush1.msra.mxu0 0.0
    %1962 = vmatprep.subr.mxu0 0.0
    %1963 = vmatpush1.msra.mxu0 0.0
    %1964 = vmatprep.subr.mxu0 0.0
    %1965 = vmatpush1.msra.mxu0 0.0
    %1966 = vmatprep.mubr.f32.mxu0 0.0
    %1967 = vmatmul.mubr.f32.gmra.mrb[0].mxu0 %v1900
    %v1968 = vpop.f32.mrb[0].mxu0
    %v1969 = vadd.f32 0.0, %v1968
    %v1970 = vpop.f32.mrb[0].mxu0
    %1971 = vdwg.mxu0
    %v1972 = vsel %vm173, %v1750, 0.0
    %v1973 = vsel %vm173, %v1823, 0.0
    %v1974 = vadd.f32 %v1972, %v1973
    %v1975 = vsel %vm173, %v1896, 0.0
    %v1976 = vadd.f32 %v1974, %v1975
    %v1977 = vsel %vm173, %v1969, 0.0
    %v1978 = vadd.f32 %v1976, %v1977
    %v1980 = vlaneseq
    %v1981 = vshrl.u32 %v1980, 7
    %v1982 = vsub.s32 0, %v1981
    %v1983 = vrot.slane %v97, %v1982
    %v1985 = vadd.f32 %v1978, %v1983
    %1986 = vst.msk [vmem:[#allocation2] sm:$0xff] %vm173, %v1985
    %s1987 = scalar_lea.vmem %s0, 8
    %v1988 = vld [vmem:[%s1987] sm:$0xff]
    %s1989 = scalar_lea.vmem %s1, 8
    %v1990 = vld [vmem:[%s1989] sm:$0xff]
    %s1991 = scalar_lea.vmem %s2, 8
    %v1992 = vld [vmem:[%s1991] sm:$0xff]
    %v1994 = vsel %vm173, %v1988, 0
    %1996 = vmatprep.subr.mxu0 0.0
    %1997 = vmatpush1.msra.mxu0 %v33
    %1998 = vmatprep.subr.mxu0 0.0
    %1999 = vmatpush1.msra.mxu0 %v34
    %2000 = vmatprep.subr.mxu0 0.0
    %2001 = vmatpush1.msra.mxu0 %v35
    %2002 = vmatprep.subr.mxu0 0.0
    %2003 = vmatpush1.msra.mxu0 %v36
    %2004 = vmatprep.subr.mxu0 0.0
    %2005 = vmatpush1.msra.mxu0 0.0
    %2006 = vmatprep.subr.mxu0 0.0
    %2007 = vmatpush1.msra.mxu0 0.0
    %2008 = vmatprep.subr.mxu0 0.0
    %2009 = vmatpush1.msra.mxu0 0.0
    %2010 = vmatprep.subr.mxu0 0.0
    %2011 = vmatpush1.msra.mxu0 0.0
    %2012 = vmatprep.subr.mxu0 0.0
    %2013 = vmatpush1.msra.mxu0 0.0
    %2014 = vmatprep.subr.mxu0 0.0
    %2015 = vmatpush1.msra.mxu0 0.0
    %2016 = vmatprep.subr.mxu0 0.0
    %2017 = vmatpush1.msra.mxu0 0.0
    %2018 = vmatprep.subr.mxu0 0.0
    %2019 = vmatpush1.msra.mxu0 0.0
    %2020 = vmatprep.subr.mxu0 0.0
    %2021 = vmatpush1.msra.mxu0 0.0
    %2022 = vmatprep.subr.mxu0 0.0
    %2023 = vmatpush1.msra.mxu0 0.0
    %2024 = vmatprep.subr.mxu0 0.0
    %2025 = vmatpush1.msra.mxu0 0.0
    %2026 = vmatprep.subr.mxu0 0.0
    %2027 = vmatpush1.msra.mxu0 0.0
    %2028 = vmatprep.subr.mxu0 0.0
    %2029 = vmatpush1.msra.mxu0 0.0
    %2030 = vmatprep.subr.mxu0 0.0
    %2031 = vmatpush1.msra.mxu0 0.0
    %2032 = vmatprep.subr.mxu0 0.0
    %2033 = vmatpush1.msra.mxu0 0.0
    %2034 = vmatprep.subr.mxu0 0.0
    %2035 = vmatpush1.msra.mxu0 0.0
    %2036 = vmatprep.subr.mxu0 0.0
    %2037 = vmatpush1.msra.mxu0 0.0
    %2038 = vmatprep.subr.mxu0 0.0
    %2039 = vmatpush1.msra.mxu0 0.0
    %2040 = vmatprep.subr.mxu0 0.0
    %2041 = vmatpush1.msra.mxu0 0.0
    %2042 = vmatprep.subr.mxu0 0.0
    %2043 = vmatpush1.msra.mxu0 0.0
    %2044 = vmatprep.subr.mxu0 0.0
    %2045 = vmatpush1.msra.mxu0 0.0
    %2046 = vmatprep.subr.mxu0 0.0
    %2047 = vmatpush1.msra.mxu0 0.0
    %2048 = vmatprep.subr.mxu0 0.0
    %2049 = vmatpush1.msra.mxu0 0.0
    %2050 = vmatprep.subr.mxu0 0.0
    %2051 = vmatpush1.msra.mxu0 0.0
    %2052 = vmatprep.subr.mxu0 0.0
    %2053 = vmatpush1.msra.mxu0 0.0
    %2054 = vmatprep.subr.mxu0 0.0
    %2055 = vmatpush1.msra.mxu0 0.0
    %2056 = vmatprep.subr.mxu0 0.0
    %2057 = vmatpush1.msra.mxu0 0.0
    %2058 = vmatprep.subr.mxu0 0.0
    %2059 = vmatpush1.msra.mxu0 0.0
    %2060 = vmatprep.mubr.f32.mxu0 0.0
    %2061 = vmatmul.mubr.f32.gmra.mrb[0].mxu0 %v1994
    %v2062 = vpop.f32.mrb[0].mxu0
    %v2063 = vadd.f32 %v116, %v2062
    %v2064 = vpop.f32.mrb[0].mxu0
    %2065 = vdwg.mxu0
    %2066 = vmatprep.subr.mxu0 0.0
    %2067 = vmatpush1.msra.mxu0 %v37
    %2068 = vmatprep.subr.mxu0 0.0
    %2069 = vmatpush1.msra.mxu0 %v38
    %2070 = vmatprep.subr.mxu0 0.0
    %2071 = vmatpush1.msra.mxu0 %v39
    %2072 = vmatprep.subr.mxu0 0.0
    %2073 = vmatpush1.msra.mxu0 %v40
    %2074 = vmatprep.subr.mxu0 0.0
    %2075 = vmatpush1.msra.mxu0 0.0
    %2076 = vmatprep.subr.mxu0 0.0
    %2077 = vmatpush1.msra.mxu0 0.0
    %2078 = vmatprep.subr.mxu0 0.0
    %2079 = vmatpush1.msra.mxu0 0.0
    %2080 = vmatprep.subr.mxu0 0.0
    %2081 = vmatpush1.msra.mxu0 0.0
    %2082 = vmatprep.subr.mxu0 0.0
    %2083 = vmatpush1.msra.mxu0 0.0
    %2084 = vmatprep.subr.mxu0 0.0
    %2085 = vmatpush1.msra.mxu0 0.0
    %2086 = vmatprep.subr.mxu0 0.0
    %2087 = vmatpush1.msra.mxu0 0.0
    %2088 = vmatprep.subr.mxu0 0.0
    %2089 = vmatpush1.msra.mxu0 0.0
    %2090 = vmatprep.subr.mxu0 0.0
    %2091 = vmatpush1.msra.mxu0 0.0
    %2092 = vmatprep.subr.mxu0 0.0
    %2093 = vmatpush1.msra.mxu0 0.0
    %2094 = vmatprep.subr.mxu0 0.0
    %2095 = vmatpush1.msra.mxu0 0.0
    %2096 = vmatprep.subr.mxu0 0.0
    %2097 = vmatpush1.msra.mxu0 0.0
    %2098 = vmatprep.subr.mxu0 0.0
    %2099 = vmatpush1.msra.mxu0 0.0
    %2100 = vmatprep.subr.mxu0 0.0
    %2101 = vmatpush1.msra.mxu0 0.0
    %2102 = vmatprep.subr.mxu0 0.0
    %2103 = vmatpush1.msra.mxu0 0.0
    %2104 = vmatprep.subr.mxu0 0.0
    %2105 = vmatpush1.msra.mxu0 0.0
    %2106 = vmatprep.subr.mxu0 0.0
    %2107 = vmatpush1.msra.mxu0 0.0
    %2108 = vmatprep.subr.mxu0 0.0
    %2109 = vmatpush1.msra.mxu0 0.0
    %2110 = vmatprep.subr.mxu0 0.0
    %2111 = vmatpush1.msra.mxu0 0.0
    %2112 = vmatprep.subr.mxu0 0.0
    %2113 = vmatpush1.msra.mxu0 0.0
    %2114 = vmatprep.subr.mxu0 0.0
    %2115 = vmatpush1.msra.mxu0 0.0
    %2116 = vmatprep.subr.mxu0 0.0
    %2117 = vmatpush1.msra.mxu0 0.0
    %2118 = vmatprep.subr.mxu0 0.0
    %2119 = vmatpush1.msra.mxu0 0.0
    %2120 = vmatprep.subr.mxu0 0.0
    %2121 = vmatpush1.msra.mxu0 0.0
    %2122 = vmatprep.subr.mxu0 0.0
    %2123 = vmatpush1.msra.mxu0 0.0
    %2124 = vmatprep.subr.mxu0 0.0
    %2125 = vmatpush1.msra.mxu0 0.0
    %2126 = vmatprep.subr.mxu0 0.0
    %2127 = vmatpush1.msra.mxu0 0.0
    %2128 = vmatprep.subr.mxu0 0.0
    %2129 = vmatpush1.msra.mxu0 0.0
    %2130 = vmatprep.mubr.f32.mxu0 0.0
    %2131 = vmatmul.mubr.f32.gmra.mrb[0].mxu0 %v1994
    %v2132 = vpop.f32.mrb[0].mxu0
    %v2133 = vadd.f32 %v120, %v2132
    %v2134 = vpop.f32.mrb[0].mxu0
    %2135 = vdwg.mxu0
    %2136 = vmatprep.subr.mxu0 0.0
    %2137 = vmatpush1.msra.mxu0 %v41
    %2138 = vmatprep.subr.mxu0 0.0
    %2139 = vmatpush1.msra.mxu0 %v42
    %2140 = vmatprep.subr.mxu0 0.0
    %2141 = vmatpush1.msra.mxu0 %v43
    %2142 = vmatprep.subr.mxu0 0.0
    %2143 = vmatpush1.msra.mxu0 %v44
    %2144 = vmatprep.subr.mxu0 0.0
    %2145 = vmatpush1.msra.mxu0 0.0
    %2146 = vmatprep.subr.mxu0 0.0
    %2147 = vmatpush1.msra.mxu0 0.0
    %2148 = vmatprep.subr.mxu0 0.0
    %2149 = vmatpush1.msra.mxu0 0.0
    %2150 = vmatprep.subr.mxu0 0.0
    %2151 = vmatpush1.msra.mxu0 0.0
    %2152 = vmatprep.subr.mxu0 0.0
    %2153 = vmatpush1.msra.mxu0 0.0
    %2154 = vmatprep.subr.mxu0 0.0
    %2155 = vmatpush1.msra.mxu0 0.0
    %2156 = vmatprep.subr.mxu0 0.0
    %2157 = vmatpush1.msra.mxu0 0.0
    %2158 = vmatprep.subr.mxu0 0.0
    %2159 = vmatpush1.msra.mxu0 0.0
    %2160 = vmatprep.subr.mxu0 0.0
    %2161 = vmatpush1.msra.mxu0 0.0
    %2162 = vmatprep.subr.mxu0 0.0
    %2163 = vmatpush1.msra.mxu0 0.0
    %2164 = vmatprep.subr.mxu0 0.0
    %2165 = vmatpush1.msra.mxu0 0.0
    %2166 = vmatprep.subr.mxu0 0.0
    %2167 = vmatpush1.msra.mxu0 0.0
    %2168 = vmatprep.subr.mxu0 0.0
    %2169 = vmatpush1.msra.mxu0 0.0
    %2170 = vmatprep.subr.mxu0 0.0
    %2171 = vmatpush1.msra.mxu0 0.0
    %2172 = vmatprep.subr.mxu0 0.0
    %2173 = vmatpush1.msra.mxu0 0.0
    %2174 = vmatprep.subr.mxu0 0.0
    %2175 = vmatpush1.msra.mxu0 0.0
    %2176 = vmatprep.subr.mxu0 0.0
    %2177 = vmatpush1.msra.mxu0 0.0
    %2178 = vmatprep.subr.mxu0 0.0
    %2179 = vmatpush1.msra.mxu0 0.0
    %2180 = vmatprep.subr.mxu0 0.0
    %2181 = vmatpush1.msra.mxu0 0.0
    %2182 = vmatprep.subr.mxu0 0.0
    %2183 = vmatpush1.msra.mxu0 0.0
    %2184 = vmatprep.subr.mxu0 0.0
    %2185 = vmatpush1.msra.mxu0 0.0
    %2186 = vmatprep.subr.mxu0 0.0
    %2187 = vmatpush1.msra.mxu0 0.0
    %2188 = vmatprep.subr.mxu0 0.0
    %2189 = vmatpush1.msra.mxu0 0.0
    %2190 = vmatprep.subr.mxu0 0.0
    %2191 = vmatpush1.msra.mxu0 0.0
    %2192 = vmatprep.subr.mxu0 0.0
    %2193 = vmatpush1.msra.mxu0 0.0
    %2194 = vmatprep.subr.mxu0 0.0
    %2195 = vmatpush1.msra.mxu0 0.0
    %2196 = vmatprep.subr.mxu0 0.0
    %2197 = vmatpush1.msra.mxu0 0.0
    %2198 = vmatprep.subr.mxu0 0.0
    %2199 = vmatpush1.msra.mxu0 0.0
    %2200 = vmatprep.mubr.f32.mxu0 0.0
    %2201 = vmatmul.mubr.f32.gmra.mrb[0].mxu0 %v1994
    %v2202 = vpop.f32.mrb[0].mxu0
    %v2203 = vadd.f32 %v124, %v2202
    %v2204 = vpop.f32.mrb[0].mxu0
    %2205 = vdwg.mxu0
    %2206 = vmatprep.subr.mxu0 0.0
    %2207 = vmatpush1.msra.mxu0 %v45
    %2208 = vmatprep.subr.mxu0 0.0
    %2209 = vmatpush1.msra.mxu0 %v46
    %2210 = vmatprep.subr.mxu0 0.0
    %2211 = vmatpush1.msra.mxu0 %v47
    %2212 = vmatprep.subr.mxu0 0.0
    %2213 = vmatpush1.msra.mxu0 %v48
    %2214 = vmatprep.subr.mxu0 0.0
    %2215 = vmatpush1.msra.mxu0 0.0
    %2216 = vmatprep.subr.mxu0 0.0
    %2217 = vmatpush1.msra.mxu0 0.0
    %2218 = vmatprep.subr.mxu0 0.0
    %2219 = vmatpush1.msra.mxu0 0.0
    %2220 = vmatprep.subr.mxu0 0.0
    %2221 = vmatpush1.msra.mxu0 0.0
    %2222 = vmatprep.subr.mxu0 0.0
    %2223 = vmatpush1.msra.mxu0 0.0
    %2224 = vmatprep.subr.mxu0 0.0
    %2225 = vmatpush1.msra.mxu0 0.0
    %2226 = vmatprep.subr.mxu0 0.0
    %2227 = vmatpush1.msra.mxu0 0.0
    %2228 = vmatprep.subr.mxu0 0.0
    %2229 = vmatpush1.msra.mxu0 0.0
    %2230 = vmatprep.subr.mxu0 0.0
    %2231 = vmatpush1.msra.mxu0 0.0
    %2232 = vmatprep.subr.mxu0 0.0
    %2233 = vmatpush1.msra.mxu0 0.0
    %2234 = vmatprep.subr.mxu0 0.0
    %2235 = vmatpush1.msra.mxu0 0.0
    %2236 = vmatprep.subr.mxu0 0.0
    %2237 = vmatpush1.msra.mxu0 0.0
    %2238 = vmatprep.subr.mxu0 0.0
    %2239 = vmatpush1.msra.mxu0 0.0
    %2240 = vmatprep.subr.mxu0 0.0
    %2241 = vmatpush1.msra.mxu0 0.0
    %2242 = vmatprep.subr.mxu0 0.0
    %2243 = vmatpush1.msra.mxu0 0.0
    %2244 = vmatprep.subr.mxu0 0.0
    %2245 = vmatpush1.msra.mxu0 0.0
    %2246 = vmatprep.subr.mxu0 0.0
    %2247 = vmatpush1.msra.mxu0 0.0
    %2248 = vmatprep.subr.mxu0 0.0
    %2249 = vmatpush1.msra.mxu0 0.0
    %2250 = vmatprep.subr.mxu0 0.0
    %2251 = vmatpush1.msra.mxu0 0.0
    %2252 = vmatprep.subr.mxu0 0.0
    %2253 = vmatpush1.msra.mxu0 0.0
    %2254 = vmatprep.subr.mxu0 0.0
    %2255 = vmatpush1.msra.mxu0 0.0
    %2256 = vmatprep.subr.mxu0 0.0
    %2257 = vmatpush1.msra.mxu0 0.0
    %2258 = vmatprep.subr.mxu0 0.0
    %2259 = vmatpush1.msra.mxu0 0.0
    %2260 = vmatprep.subr.mxu0 0.0
    %2261 = vmatpush1.msra.mxu0 0.0
    %2262 = vmatprep.subr.mxu0 0.0
    %2263 = vmatpush1.msra.mxu0 0.0
    %2264 = vmatprep.subr.mxu0 0.0
    %2265 = vmatpush1.msra.mxu0 0.0
    %2266 = vmatprep.subr.mxu0 0.0
    %2267 = vmatpush1.msra.mxu0 0.0
    %2268 = vmatprep.subr.mxu0 0.0
    %2269 = vmatpush1.msra.mxu0 0.0
    %2270 = vmatprep.mubr.f32.mxu0 0.0
    %2271 = vmatmul.mubr.f32.gmra.mrb[0].mxu0 %v1994
    %v2272 = vpop.f32.mrb[0].mxu0
    %v2273 = vadd.f32 %v128, %v2272
    %v2274 = vpop.f32.mrb[0].mxu0
    %2275 = vdwg.mxu0
    %v2277 = vsel %vm173, %v1990, 0
    %2279 = vmatprep.subr.mxu0 0.0
    %2280 = vmatpush1.msra.mxu0 %v49
    %2281 = vmatprep.subr.mxu0 0.0
    %2282 = vmatpush1.msra.mxu0 %v50
    %2283 = vmatprep.subr.mxu0 0.0
    %2284 = vmatpush1.msra.mxu0 %v51
    %2285 = vmatprep.subr.mxu0 0.0
    %2286 = vmatpush1.msra.mxu0 %v52
    %2287 = vmatprep.subr.mxu0 0.0
    %2288 = vmatpush1.msra.mxu0 0.0
    %2289 = vmatprep.subr.mxu0 0.0
    %2290 = vmatpush1.msra.mxu0 0.0
    %2291 = vmatprep.subr.mxu0 0.0
    %2292 = vmatpush1.msra.mxu0 0.0
    %2293 = vmatprep.subr.mxu0 0.0
    %2294 = vmatpush1.msra.mxu0 0.0
    %2295 = vmatprep.subr.mxu0 0.0
    %2296 = vmatpush1.msra.mxu0 0.0
    %2297 = vmatprep.subr.mxu0 0.0
    %2298 = vmatpush1.msra.mxu0 0.0
    %2299 = vmatprep.subr.mxu0 0.0
    %2300 = vmatpush1.msra.mxu0 0.0
    %2301 = vmatprep.subr.mxu0 0.0
    %2302 = vmatpush1.msra.mxu0 0.0
    %2303 = vmatprep.subr.mxu0 0.0
    %2304 = vmatpush1.msra.mxu0 0.0
    %2305 = vmatprep.subr.mxu0 0.0
    %2306 = vmatpush1.msra.mxu0 0.0
    %2307 = vmatprep.subr.mxu0 0.0
    %2308 = vmatpush1.msra.mxu0 0.0
    %2309 = vmatprep.subr.mxu0 0.0
    %2310 = vmatpush1.msra.mxu0 0.0
    %2311 = vmatprep.subr.mxu0 0.0
    %2312 = vmatpush1.msra.mxu0 0.0
    %2313 = vmatprep.subr.mxu0 0.0
    %2314 = vmatpush1.msra.mxu0 0.0
    %2315 = vmatprep.subr.mxu0 0.0
    %2316 = vmatpush1.msra.mxu0 0.0
    %2317 = vmatprep.subr.mxu0 0.0
    %2318 = vmatpush1.msra.mxu0 0.0
    %2319 = vmatprep.subr.mxu0 0.0
    %2320 = vmatpush1.msra.mxu0 0.0
    %2321 = vmatprep.subr.mxu0 0.0
    %2322 = vmatpush1.msra.mxu0 0.0
    %2323 = vmatprep.subr.mxu0 0.0
    %2324 = vmatpush1.msra.mxu0 0.0
    %2325 = vmatprep.subr.mxu0 0.0
    %2326 = vmatpush1.msra.mxu0 0.0
    %2327 = vmatprep.subr.mxu0 0.0
    %2328 = vmatpush1.msra.mxu0 0.0
    %2329 = vmatprep.subr.mxu0 0.0
    %2330 = vmatpush1.msra.mxu0 0.0
    %2331 = vmatprep.subr.mxu0 0.0
    %2332 = vmatpush1.msra.mxu0 0.0
    %2333 = vmatprep.subr.mxu0 0.0
    %2334 = vmatpush1.msra.mxu0 0.0
    %2335 = vmatprep.subr.mxu0 0.0
    %2336 = vmatpush1.msra.mxu0 0.0
    %2337 = vmatprep.subr.mxu0 0.0
    %2338 = vmatpush1.msra.mxu0 0.0
    %2339 = vmatprep.subr.mxu0 0.0
    %2340 = vmatpush1.msra.mxu0 0.0
    %2341 = vmatprep.subr.mxu0 0.0
    %2342 = vmatpush1.msra.mxu0 0.0
    %2343 = vmatprep.mubr.f32.mxu0 0.0
    %2344 = vmatmul.mubr.f32.gmra.mrb[0].mxu0 %v2277
    %v2345 = vpop.f32.mrb[0].mxu0
    %v2346 = vadd.f32 %v132, %v2345
    %v2347 = vpop.f32.mrb[0].mxu0
    %2348 = vdwg.mxu0
    %2349 = vmatprep.subr.mxu0 0.0
    %2350 = vmatpush1.msra.mxu0 %v53
    %2351 = vmatprep.subr.mxu0 0.0
    %2352 = vmatpush1.msra.mxu0 %v54
    %2353 = vmatprep.subr.mxu0 0.0
    %2354 = vmatpush1.msra.mxu0 %v55
    %2355 = vmatprep.subr.mxu0 0.0
    %2356 = vmatpush1.msra.mxu0 %v56
    %2357 = vmatprep.subr.mxu0 0.0
    %2358 = vmatpush1.msra.mxu0 0.0
    %2359 = vmatprep.subr.mxu0 0.0
    %2360 = vmatpush1.msra.mxu0 0.0
    %2361 = vmatprep.subr.mxu0 0.0
    %2362 = vmatpush1.msra.mxu0 0.0
    %2363 = vmatprep.subr.mxu0 0.0
    %2364 = vmatpush1.msra.mxu0 0.0
    %2365 = vmatprep.subr.mxu0 0.0
    %2366 = vmatpush1.msra.mxu0 0.0
    %2367 = vmatprep.subr.mxu0 0.0
    %2368 = vmatpush1.msra.mxu0 0.0
    %2369 = vmatprep.subr.mxu0 0.0
    %2370 = vmatpush1.msra.mxu0 0.0
    %2371 = vmatprep.subr.mxu0 0.0
    %2372 = vmatpush1.msra.mxu0 0.0
    %2373 = vmatprep.subr.mxu0 0.0
    %2374 = vmatpush1.msra.mxu0 0.0
    %2375 = vmatprep.subr.mxu0 0.0
    %2376 = vmatpush1.msra.mxu0 0.0
    %2377 = vmatprep.subr.mxu0 0.0
    %2378 = vmatpush1.msra.mxu0 0.0
    %2379 = vmatprep.subr.mxu0 0.0
    %2380 = vmatpush1.msra.mxu0 0.0
    %2381 = vmatprep.subr.mxu0 0.0
    %2382 = vmatpush1.msra.mxu0 0.0
    %2383 = vmatprep.subr.mxu0 0.0
    %2384 = vmatpush1.msra.mxu0 0.0
    %2385 = vmatprep.subr.mxu0 0.0
    %2386 = vmatpush1.msra.mxu0 0.0
    %2387 = vmatprep.subr.mxu0 0.0
    %2388 = vmatpush1.msra.mxu0 0.0
    %2389 = vmatprep.subr.mxu0 0.0
    %2390 = vmatpush1.msra.mxu0 0.0
    %2391 = vmatprep.subr.mxu0 0.0
    %2392 = vmatpush1.msra.mxu0 0.0
    %2393 = vmatprep.subr.mxu0 0.0
    %2394 = vmatpush1.msra.mxu0 0.0
    %2395 = vmatprep.subr.mxu0 0.0
    %2396 = vmatpush1.msra.mxu0 0.0
    %2397 = vmatprep.subr.mxu0 0.0
    %2398 = vmatpush1.msra.mxu0 0.0
    %2399 = vmatprep.subr.mxu0 0.0
    %2400 = vmatpush1.msra.mxu0 0.0
    %2401 = vmatprep.subr.mxu0 0.0
    %2402 = vmatpush1.msra.mxu0 0.0
    %2403 = vmatprep.subr.mxu0 0.0
    %2404 = vmatpush1.msra.mxu0 0.0
    %2405 = vmatprep.subr.mxu0 0.0
    %2406 = vmatpush1.msra.mxu0 0.0
    %2407 = vmatprep.subr.mxu0 0.0
    %2408 = vmatpush1.msra.mxu0 0.0
    %2409 = vmatprep.subr.mxu0 0.0
    %2410 = vmatpush1.msra.mxu0 0.0
    %2411 = vmatprep.subr.mxu0 0.0
    %2412 = vmatpush1.msra.mxu0 0.0
    %2413 = vmatprep.mubr.f32.mxu0 0.0
    %2414 = vmatmul.mubr.f32.gmra.mrb[0].mxu0 %v2277
    %v2415 = vpop.f32.mrb[0].mxu0
    %v2416 = vadd.f32 %v136, %v2415
    %v2417 = vpop.f32.mrb[0].mxu0
    %2418 = vdwg.mxu0
    %2419 = vmatprep.subr.mxu0 0.0
    %2420 = vmatpush1.msra.mxu0 %v57
    %2421 = vmatprep.subr.mxu0 0.0
    %2422 = vmatpush1.msra.mxu0 %v58
    %2423 = vmatprep.subr.mxu0 0.0
    %2424 = vmatpush1.msra.mxu0 %v59
    %2425 = vmatprep.subr.mxu0 0.0
    %2426 = vmatpush1.msra.mxu0 %v60
    %2427 = vmatprep.subr.mxu0 0.0
    %2428 = vmatpush1.msra.mxu0 0.0
    %2429 = vmatprep.subr.mxu0 0.0
    %2430 = vmatpush1.msra.mxu0 0.0
    %2431 = vmatprep.subr.mxu0 0.0
    %2432 = vmatpush1.msra.mxu0 0.0
    %2433 = vmatprep.subr.mxu0 0.0
    %2434 = vmatpush1.msra.mxu0 0.0
    %2435 = vmatprep.subr.mxu0 0.0
    %2436 = vmatpush1.msra.mxu0 0.0
    %2437 = vmatprep.subr.mxu0 0.0
    %2438 = vmatpush1.msra.mxu0 0.0
    %2439 = vmatprep.subr.mxu0 0.0
    %2440 = vmatpush1.msra.mxu0 0.0
    %2441 = vmatprep.subr.mxu0 0.0
    %2442 = vmatpush1.msra.mxu0 0.0
    %2443 = vmatprep.subr.mxu0 0.0
    %2444 = vmatpush1.msra.mxu0 0.0
    %2445 = vmatprep.subr.mxu0 0.0
    %2446 = vmatpush1.msra.mxu0 0.0
    %2447 = vmatprep.subr.mxu0 0.0
    %2448 = vmatpush1.msra.mxu0 0.0
    %2449 = vmatprep.subr.mxu0 0.0
    %2450 = vmatpush1.msra.mxu0 0.0
    %2451 = vmatprep.subr.mxu0 0.0
    %2452 = vmatpush1.msra.mxu0 0.0
    %2453 = vmatprep.subr.mxu0 0.0
    %2454 = vmatpush1.msra.mxu0 0.0
    %2455 = vmatprep.subr.mxu0 0.0
    %2456 = vmatpush1.msra.mxu0 0.0
    %2457 = vmatprep.subr.mxu0 0.0
    %2458 = vmatpush1.msra.mxu0 0.0
    %2459 = vmatprep.subr.mxu0 0.0
    %2460 = vmatpush1.msra.mxu0 0.0
    %2461 = vmatprep.subr.mxu0 0.0
    %2462 = vmatpush1.msra.mxu0 0.0
    %2463 = vmatprep.subr.mxu0 0.0
    %2464 = vmatpush1.msra.mxu0 0.0
    %2465 = vmatprep.subr.mxu0 0.0
    %2466 = vmatpush1.msra.mxu0 0.0
    %2467 = vmatprep.subr.mxu0 0.0
    %2468 = vmatpush1.msra.mxu0 0.0
    %2469 = vmatprep.subr.mxu0 0.0
    %2470 = vmatpush1.msra.mxu0 0.0
    %2471 = vmatprep.subr.mxu0 0.0
    %2472 = vmatpush1.msra.mxu0 0.0
    %2473 = vmatprep.subr.mxu0 0.0
    %2474 = vmatpush1.msra.mxu0 0.0
    %2475 = vmatprep.subr.mxu0 0.0
    %2476 = vmatpush1.msra.mxu0 0.0
    %2477 = vmatprep.subr.mxu0 0.0
    %2478 = vmatpush1.msra.mxu0 0.0
    %2479 = vmatprep.subr.mxu0 0.0
    %2480 = vmatpush1.msra.mxu0 0.0
    %2481 = vmatprep.subr.mxu0 0.0
    %2482 = vmatpush1.msra.mxu0 0.0
    %2483 = vmatprep.mubr.f32.mxu0 0.0
    %2484 = vmatmul.mubr.f32.gmra.mrb[0].mxu0 %v2277
    %v2485 = vpop.f32.mrb[0].mxu0
    %v2486 = vadd.f32 %v140, %v2485
    %v2487 = vpop.f32.mrb[0].mxu0
    %2488 = vdwg.mxu0
    %2489 = vmatprep.subr.mxu0 0.0
    %2490 = vmatpush1.msra.mxu0 %v61
    %2491 = vmatprep.subr.mxu0 0.0
    %2492 = vmatpush1.msra.mxu0 %v62
    %2493 = vmatprep.subr.mxu0 0.0
    %2494 = vmatpush1.msra.mxu0 %v63
    %2495 = vmatprep.subr.mxu0 0.0
    %2496 = vmatpush1.msra.mxu0 %v64
    %2497 = vmatprep.subr.mxu0 0.0
    %2498 = vmatpush1.msra.mxu0 0.0
    %2499 = vmatprep.subr.mxu0 0.0
    %2500 = vmatpush1.msra.mxu0 0.0
    %2501 = vmatprep.subr.mxu0 0.0
    %2502 = vmatpush1.msra.mxu0 0.0
    %2503 = vmatprep.subr.mxu0 0.0
    %2504 = vmatpush1.msra.mxu0 0.0
    %2505 = vmatprep.subr.mxu0 0.0
    %2506 = vmatpush1.msra.mxu0 0.0
    %2507 = vmatprep.subr.mxu0 0.0
    %2508 = vmatpush1.msra.mxu0 0.0
    %2509 = vmatprep.subr.mxu0 0.0
    %2510 = vmatpush1.msra.mxu0 0.0
    %2511 = vmatprep.subr.mxu0 0.0
    %2512 = vmatpush1.msra.mxu0 0.0
    %2513 = vmatprep.subr.mxu0 0.0
    %2514 = vmatpush1.msra.mxu0 0.0
    %2515 = vmatprep.subr.mxu0 0.0
    %2516 = vmatpush1.msra.mxu0 0.0
    %2517 = vmatprep.subr.mxu0 0.0
    %2518 = vmatpush1.msra.mxu0 0.0
    %2519 = vmatprep.subr.mxu0 0.0
    %2520 = vmatpush1.msra.mxu0 0.0
    %2521 = vmatprep.subr.mxu0 0.0
    %2522 = vmatpush1.msra.mxu0 0.0
    %2523 = vmatprep.subr.mxu0 0.0
    %2524 = vmatpush1.msra.mxu0 0.0
    %2525 = vmatprep.subr.mxu0 0.0
    %2526 = vmatpush1.msra.mxu0 0.0
    %2527 = vmatprep.subr.mxu0 0.0
    %2528 = vmatpush1.msra.mxu0 0.0
    %2529 = vmatprep.subr.mxu0 0.0
    %2530 = vmatpush1.msra.mxu0 0.0
    %2531 = vmatprep.subr.mxu0 0.0
    %2532 = vmatpush1.msra.mxu0 0.0
    %2533 = vmatprep.subr.mxu0 0.0
    %2534 = vmatpush1.msra.mxu0 0.0
    %2535 = vmatprep.subr.mxu0 0.0
    %2536 = vmatpush1.msra.mxu0 0.0
    %2537 = vmatprep.subr.mxu0 0.0
    %2538 = vmatpush1.msra.mxu0 0.0
    %2539 = vmatprep.subr.mxu0 0.0
    %2540 = vmatpush1.msra.mxu0 0.0
    %2541 = vmatprep.subr.mxu0 0.0
    %2542 = vmatpush1.msra.mxu0 0.0
    %2543 = vmatprep.subr.mxu0 0.0
    %2544 = vmatpush1.msra.mxu0 0.0
    %2545 = vmatprep.subr.mxu0 0.0
    %2546 = vmatpush1.msra.mxu0 0.0
    %2547 = vmatprep.subr.mxu0 0.0
    %2548 = vmatpush1.msra.mxu0 0.0
    %2549 = vmatprep.subr.mxu0 0.0
    %2550 = vmatpush1.msra.mxu0 0.0
    %2551 = vmatprep.subr.mxu0 0.0
    %2552 = vmatpush1.msra.mxu0 0.0
    %2553 = vmatprep.mubr.f32.mxu0 0.0
    %2554 = vmatmul.mubr.f32.gmra.mrb[0].mxu0 %v2277
    %v2555 = vpop.f32.mrb[0].mxu0
    %v2556 = vadd.f32 %v144, %v2555
    %v2557 = vpop.f32.mrb[0].mxu0
    %2558 = vdwg.mxu0
    %v2560 = vsel %vm173, %v1992, 0
    %2562 = vmatprep.subr.mxu0 0.0
    %2563 = vmatpush1.msra.mxu0 %v65
    %2564 = vmatprep.subr.mxu0 0.0
    %2565 = vmatpush1.msra.mxu0 %v66
    %2566 = vmatprep.subr.mxu0 0.0
    %2567 = vmatpush1.msra.mxu0 %v67
    %2568 = vmatprep.subr.mxu0 0.0
    %2569 = vmatpush1.msra.mxu0 %v68
    %2570 = vmatprep.subr.mxu0 0.0
    %2571 = vmatpush1.msra.mxu0 0.0
    %2572 = vmatprep.subr.mxu0 0.0
    %2573 = vmatpush1.msra.mxu0 0.0
    %2574 = vmatprep.subr.mxu0 0.0
    %2575 = vmatpush1.msra.mxu0 0.0
    %2576 = vmatprep.subr.mxu0 0.0
    %2577 = vmatpush1.msra.mxu0 0.0
    %2578 = vmatprep.subr.mxu0 0.0
    %2579 = vmatpush1.msra.mxu0 0.0
    %2580 = vmatprep.subr.mxu0 0.0
    %2581 = vmatpush1.msra.mxu0 0.0
    %2582 = vmatprep.subr.mxu0 0.0
    %2583 = vmatpush1.msra.mxu0 0.0
    %2584 = vmatprep.subr.mxu0 0.0
    %2585 = vmatpush1.msra.mxu0 0.0
    %2586 = vmatprep.subr.mxu0 0.0
    %2587 = vmatpush1.msra.mxu0 0.0
    %2588 = vmatprep.subr.mxu0 0.0
    %2589 = vmatpush1.msra.mxu0 0.0
    %2590 = vmatprep.subr.mxu0 0.0
    %2591 = vmatpush1.msra.mxu0 0.0
    %2592 = vmatprep.subr.mxu0 0.0
    %2593 = vmatpush1.msra.mxu0 0.0
    %2594 = vmatprep.subr.mxu0 0.0
    %2595 = vmatpush1.msra.mxu0 0.0
    %2596 = vmatprep.subr.mxu0 0.0
    %2597 = vmatpush1.msra.mxu0 0.0
    %2598 = vmatprep.subr.mxu0 0.0
    %2599 = vmatpush1.msra.mxu0 0.0
    %2600 = vmatprep.subr.mxu0 0.0
    %2601 = vmatpush1.msra.mxu0 0.0
    %2602 = vmatprep.subr.mxu0 0.0
    %2603 = vmatpush1.msra.mxu0 0.0
    %2604 = vmatprep.subr.mxu0 0.0
    %2605 = vmatpush1.msra.mxu0 0.0
    %2606 = vmatprep.subr.mxu0 0.0
    %2607 = vmatpush1.msra.mxu0 0.0
    %2608 = vmatprep.subr.mxu0 0.0
    %2609 = vmatpush1.msra.mxu0 0.0
    %2610 = vmatprep.subr.mxu0 0.0
    %2611 = vmatpush1.msra.mxu0 0.0
    %2612 = vmatprep.subr.mxu0 0.0
    %2613 = vmatpush1.msra.mxu0 0.0
    %2614 = vmatprep.subr.mxu0 0.0
    %2615 = vmatpush1.msra.mxu0 0.0
    %2616 = vmatprep.subr.mxu0 0.0
    %2617 = vmatpush1.msra.mxu0 0.0
    %2618 = vmatprep.subr.mxu0 0.0
    %2619 = vmatpush1.msra.mxu0 0.0
    %2620 = vmatprep.subr.mxu0 0.0
    %2621 = vmatpush1.msra.mxu0 0.0
    %2622 = vmatprep.subr.mxu0 0.0
    %2623 = vmatpush1.msra.mxu0 0.0
    %2624 = vmatprep.subr.mxu0 0.0
    %2625 = vmatpush1.msra.mxu0 0.0
    %2626 = vmatprep.mubr.f32.mxu0 0.0
    %2627 = vmatmul.mubr.f32.gmra.mrb[0].mxu0 %v2560
    %v2628 = vpop.f32.mrb[0].mxu0
    %v2629 = vadd.f32 %v148, %v2628
    %v2630 = vpop.f32.mrb[0].mxu0
    %2631 = vdwg.mxu0
    %2632 = vmatprep.subr.mxu0 0.0
    %2633 = vmatpush1.msra.mxu0 %v69
    %2634 = vmatprep.subr.mxu0 0.0
    %2635 = vmatpush1.msra.mxu0 %v70
    %2636 = vmatprep.subr.mxu0 0.0
    %2637 = vmatpush1.msra.mxu0 %v71
    %2638 = vmatprep.subr.mxu0 0.0
    %2639 = vmatpush1.msra.mxu0 %v72
    %2640 = vmatprep.subr.mxu0 0.0
    %2641 = vmatpush1.msra.mxu0 0.0
    %2642 = vmatprep.subr.mxu0 0.0
    %2643 = vmatpush1.msra.mxu0 0.0
    %2644 = vmatprep.subr.mxu0 0.0
    %2645 = vmatpush1.msra.mxu0 0.0
    %2646 = vmatprep.subr.mxu0 0.0
    %2647 = vmatpush1.msra.mxu0 0.0
    %2648 = vmatprep.subr.mxu0 0.0
    %2649 = vmatpush1.msra.mxu0 0.0
    %2650 = vmatprep.subr.mxu0 0.0
    %2651 = vmatpush1.msra.mxu0 0.0
    %2652 = vmatprep.subr.mxu0 0.0
    %2653 = vmatpush1.msra.mxu0 0.0
    %2654 = vmatprep.subr.mxu0 0.0
    %2655 = vmatpush1.msra.mxu0 0.0
    %2656 = vmatprep.subr.mxu0 0.0
    %2657 = vmatpush1.msra.mxu0 0.0
    %2658 = vmatprep.subr.mxu0 0.0
    %2659 = vmatpush1.msra.mxu0 0.0
    %2660 = vmatprep.subr.mxu0 0.0
    %2661 = vmatpush1.msra.mxu0 0.0
    %2662 = vmatprep.subr.mxu0 0.0
    %2663 = vmatpush1.msra.mxu0 0.0
    %2664 = vmatprep.subr.mxu0 0.0
    %2665 = vmatpush1.msra.mxu0 0.0
    %2666 = vmatprep.subr.mxu0 0.0
    %2667 = vmatpush1.msra.mxu0 0.0
    %2668 = vmatprep.subr.mxu0 0.0
    %2669 = vmatpush1.msra.mxu0 0.0
    %2670 = vmatprep.subr.mxu0 0.0
    %2671 = vmatpush1.msra.mxu0 0.0
    %2672 = vmatprep.subr.mxu0 0.0
    %2673 = vmatpush1.msra.mxu0 0.0
    %2674 = vmatprep.subr.mxu0 0.0
    %2675 = vmatpush1.msra.mxu0 0.0
    %2676 = vmatprep.subr.mxu0 0.0
    %2677 = vmatpush1.msra.mxu0 0.0
    %2678 = vmatprep.subr.mxu0 0.0
    %2679 = vmatpush1.msra.mxu0 0.0
    %2680 = vmatprep.subr.mxu0 0.0
    %2681 = vmatpush1.msra.mxu0 0.0
    %2682 = vmatprep.subr.mxu0 0.0
    %2683 = vmatpush1.msra.mxu0 0.0
    %2684 = vmatprep.subr.mxu0 0.0
    %2685 = vmatpush1.msra.mxu0 0.0
    %2686 = vmatprep.subr.mxu0 0.0
    %2687 = vmatpush1.msra.mxu0 0.0
    %2688 = vmatprep.subr.mxu0 0.0
    %2689 = vmatpush1.msra.mxu0 0.0
    %2690 = vmatprep.subr.mxu0 0.0
    %2691 = vmatpush1.msra.mxu0 0.0
    %2692 = vmatprep.subr.mxu0 0.0
    %2693 = vmatpush1.msra.mxu0 0.0
    %2694 = vmatprep.subr.mxu0 0.0
    %2695 = vmatpush1.msra.mxu0 0.0
    %2696 = vmatprep.mubr.f32.mxu0 0.0
    %2697 = vmatmul.mubr.f32.gmra.mrb[0].mxu0 %v2560
    %v2698 = vpop.f32.mrb[0].mxu0
    %v2699 = vadd.f32 %v152, %v2698
    %v2700 = vpop.f32.mrb[0].mxu0
    %2701 = vdwg.mxu0
    %2702 = vmatprep.subr.mxu0 0.0
    %2703 = vmatpush1.msra.mxu0 %v73
    %2704 = vmatprep.subr.mxu0 0.0
    %2705 = vmatpush1.msra.mxu0 %v74
    %2706 = vmatprep.subr.mxu0 0.0
    %2707 = vmatpush1.msra.mxu0 %v75
    %2708 = vmatprep.subr.mxu0 0.0
    %2709 = vmatpush1.msra.mxu0 %v76
    %2710 = vmatprep.subr.mxu0 0.0
    %2711 = vmatpush1.msra.mxu0 0.0
    %2712 = vmatprep.subr.mxu0 0.0
    %2713 = vmatpush1.msra.mxu0 0.0
    %2714 = vmatprep.subr.mxu0 0.0
    %2715 = vmatpush1.msra.mxu0 0.0
    %2716 = vmatprep.subr.mxu0 0.0
    %2717 = vmatpush1.msra.mxu0 0.0
    %2718 = vmatprep.subr.mxu0 0.0
    %2719 = vmatpush1.msra.mxu0 0.0
    %2720 = vmatprep.subr.mxu0 0.0
    %2721 = vmatpush1.msra.mxu0 0.0
    %2722 = vmatprep.subr.mxu0 0.0
    %2723 = vmatpush1.msra.mxu0 0.0
    %2724 = vmatprep.subr.mxu0 0.0
    %2725 = vmatpush1.msra.mxu0 0.0
    %2726 = vmatprep.subr.mxu0 0.0
    %2727 = vmatpush1.msra.mxu0 0.0
    %2728 = vmatprep.subr.mxu0 0.0
    %2729 = vmatpush1.msra.mxu0 0.0
    %2730 = vmatprep.subr.mxu0 0.0
    %2731 = vmatpush1.msra.mxu0 0.0
    %2732 = vmatprep.subr.mxu0 0.0
    %2733 = vmatpush1.msra.mxu0 0.0
    %2734 = vmatprep.subr.mxu0 0.0
    %2735 = vmatpush1.msra.mxu0 0.0
    %2736 = vmatprep.subr.mxu0 0.0
    %2737 = vmatpush1.msra.mxu0 0.0
    %2738 = vmatprep.subr.mxu0 0.0
    %2739 = vmatpush1.msra.mxu0 0.0
    %2740 = vmatprep.subr.mxu0 0.0
    %2741 = vmatpush1.msra.mxu0 0.0
    %2742 = vmatprep.subr.mxu0 0.0
    %2743 = vmatpush1.msra.mxu0 0.0
    %2744 = vmatprep.subr.mxu0 0.0
    %2745 = vmatpush1.msra.mxu0 0.0
    %2746 = vmatprep.subr.mxu0 0.0
    %2747 = vmatpush1.msra.mxu0 0.0
    %2748 = vmatprep.subr.mxu0 0.0
    %2749 = vmatpush1.msra.mxu0 0.0
    %2750 = vmatprep.subr.mxu0 0.0
    %2751 = vmatpush1.msra.mxu0 0.0
    %2752 = vmatprep.subr.mxu0 0.0
    %2753 = vmatpush1.msra.mxu0 0.0
    %2754 = vmatprep.subr.mxu0 0.0
    %2755 = vmatpush1.msra.mxu0 0.0
    %2756 = vmatprep.subr.mxu0 0.0
    %2757 = vmatpush1.msra.mxu0 0.0
    %2758 = vmatprep.subr.mxu0 0.0
    %2759 = vmatpush1.msra.mxu0 0.0
    %2760 = vmatprep.subr.mxu0 0.0
    %2761 = vmatpush1.msra.mxu0 0.0
    %2762 = vmatprep.subr.mxu0 0.0
    %2763 = vmatpush1.msra.mxu0 0.0
    %2764 = vmatprep.subr.mxu0 0.0
    %2765 = vmatpush1.msra.mxu0 0.0
    %2766 = vmatprep.mubr.f32.mxu0 0.0
    %2767 = vmatmul.mubr.f32.gmra.mrb[0].mxu0 %v2560
    %v2768 = vpop.f32.mrb[0].mxu0
    %v2769 = vadd.f32 %v156, %v2768
    %v2770 = vpop.f32.mrb[0].mxu0
    %2771 = vdwg.mxu0
    %2772 = vmatprep.subr.mxu0 0.0
    %2773 = vmatpush1.msra.mxu0 %v77
    %2774 = vmatprep.subr.mxu0 0.0
    %2775 = vmatpush1.msra.mxu0 %v78
    %2776 = vmatprep.subr.mxu0 0.0
    %2777 = vmatpush1.msra.mxu0 %v79
    %2778 = vmatprep.subr.mxu0 0.0
    %2779 = vmatpush1.msra.mxu0 %v80
    %2780 = vmatprep.subr.mxu0 0.0
    %2781 = vmatpush1.msra.mxu0 0.0
    %2782 = vmatprep.subr.mxu0 0.0
    %2783 = vmatpush1.msra.mxu0 0.0
    %2784 = vmatprep.subr.mxu0 0.0
    %2785 = vmatpush1.msra.mxu0 0.0
    %2786 = vmatprep.subr.mxu0 0.0
    %2787 = vmatpush1.msra.mxu0 0.0
    %2788 = vmatprep.subr.mxu0 0.0
    %2789 = vmatpush1.msra.mxu0 0.0
    %2790 = vmatprep.subr.mxu0 0.0
    %2791 = vmatpush1.msra.mxu0 0.0
    %2792 = vmatprep.subr.mxu0 0.0
    %2793 = vmatpush1.msra.mxu0 0.0
    %2794 = vmatprep.subr.mxu0 0.0
    %2795 = vmatpush1.msra.mxu0 0.0
    %2796 = vmatprep.subr.mxu0 0.0
    %2797 = vmatpush1.msra.mxu0 0.0
    %2798 = vmatprep.subr.mxu0 0.0
    %2799 = vmatpush1.msra.mxu0 0.0
    %2800 = vmatprep.subr.mxu0 0.0
    %2801 = vmatpush1.msra.mxu0 0.0
    %2802 = vmatprep.subr.mxu0 0.0
    %2803 = vmatpush1.msra.mxu0 0.0
    %2804 = vmatprep.subr.mxu0 0.0
    %2805 = vmatpush1.msra.mxu0 0.0
    %2806 = vmatprep.subr.mxu0 0.0
    %2807 = vmatpush1.msra.mxu0 0.0
    %2808 = vmatprep.subr.mxu0 0.0
    %2809 = vmatpush1.msra.mxu0 0.0
    %2810 = vmatprep.subr.mxu0 0.0
    %2811 = vmatpush1.msra.mxu0 0.0
    %2812 = vmatprep.subr.mxu0 0.0
    %2813 = vmatpush1.msra.mxu0 0.0
    %2814 = vmatprep.subr.mxu0 0.0
    %2815 = vmatpush1.msra.mxu0 0.0
    %2816 = vmatprep.subr.mxu0 0.0
    %2817 = vmatpush1.msra.mxu0 0.0
    %2818 = vmatprep.subr.mxu0 0.0
    %2819 = vmatpush1.msra.mxu0 0.0
    %2820 = vmatprep.subr.mxu0 0.0
    %2821 = vmatpush1.msra.mxu0 0.0
    %2822 = vmatprep.subr.mxu0 0.0
    %2823 = vmatpush1.msra.mxu0 0.0
    %2824 = vmatprep.subr.mxu0 0.0
    %2825 = vmatpush1.msra.mxu0 0.0
    %2826 = vmatprep.subr.mxu0 0.0
    %2827 = vmatpush1.msra.mxu0 0.0
    %2828 = vmatprep.subr.mxu0 0.0
    %2829 = vmatpush1.msra.mxu0 0.0
    %2830 = vmatprep.subr.mxu0 0.0
    %2831 = vmatpush1.msra.mxu0 0.0
    %2832 = vmatprep.subr.mxu0 0.0
    %2833 = vmatpush1.msra.mxu0 0.0
    %2834 = vmatprep.subr.mxu0 0.0
    %2835 = vmatpush1.msra.mxu0 0.0
    %2836 = vmatprep.mubr.f32.mxu0 0.0
    %2837 = vmatmul.mubr.f32.gmra.mrb[0].mxu0 %v2560
    %v2838 = vpop.f32.mrb[0].mxu0
    %v2839 = vadd.f32 %v160, %v2838
    %v2840 = vpop.f32.mrb[0].mxu0
    %2841 = vdwg.mxu0
    %v2843 = vsel %vm1023, %v2063, 0
    %v2846 = vsel %vm1023, %v2346, 0
    %2848 = vmatprep.subr.mxu0 0.0
    %2849 = vmatpush1.xpose.msra.mxu0 %v2846
    %2850 = vmatprep.subr.mxu0 0.0
    %2851 = vmatpush1.xpose.msra.mxu0 0.0
    %2852 = vmatprep.subr.mxu0 0.0
    %2853 = vmatpush1.xpose.msra.mxu0 0.0
    %2854 = vmatprep.subr.mxu0 0.0
    %2855 = vmatpush1.xpose.msra.mxu0 0.0
    %2856 = vmatprep.subr.mxu0 0.0
    %2857 = vmatpush1.xpose.msra.mxu0 0.0
    %2858 = vmatprep.subr.mxu0 0.0
    %2859 = vmatpush1.xpose.msra.mxu0 0.0
    %2860 = vmatprep.subr.mxu0 0.0
    %2861 = vmatpush1.xpose.msra.mxu0 0.0
    %2862 = vmatprep.subr.mxu0 0.0
    %2863 = vmatpush1.xpose.msra.mxu0 0.0
    %2864 = vmatprep.subr.mxu0 0.0
    %2865 = vmatpush1.xpose.msra.mxu0 0.0
    %2866 = vmatprep.subr.mxu0 0.0
    %2867 = vmatpush1.xpose.msra.mxu0 0.0
    %2868 = vmatprep.subr.mxu0 0.0
    %2869 = vmatpush1.xpose.msra.mxu0 0.0
    %2870 = vmatprep.subr.mxu0 0.0
    %2871 = vmatpush1.xpose.msra.mxu0 0.0
    %2872 = vmatprep.subr.mxu0 0.0
    %2873 = vmatpush1.xpose.msra.mxu0 0.0
    %2874 = vmatprep.subr.mxu0 0.0
    %2875 = vmatpush1.xpose.msra.mxu0 0.0
    %2876 = vmatprep.subr.mxu0 0.0
    %2877 = vmatpush1.xpose.msra.mxu0 0.0
    %2878 = vmatprep.subr.mxu0 0.0
    %2879 = vmatpush1.xpose.msra.mxu0 0.0
    %2880 = vmatprep.subr.mxu0 0.0
    %2881 = vmatpush1.xpose.msra.mxu0 0.0
    %2882 = vmatprep.subr.mxu0 0.0
    %2883 = vmatpush1.xpose.msra.mxu0 0.0
    %2884 = vmatprep.subr.mxu0 0.0
    %2885 = vmatpush1.xpose.msra.mxu0 0.0
    %2886 = vmatprep.subr.mxu0 0.0
    %2887 = vmatpush1.xpose.msra.mxu0 0.0
    %2888 = vmatprep.subr.mxu0 0.0
    %2889 = vmatpush1.xpose.msra.mxu0 0.0
    %2890 = vmatprep.subr.mxu0 0.0
    %2891 = vmatpush1.xpose.msra.mxu0 0.0
    %2892 = vmatprep.subr.mxu0 0.0
    %2893 = vmatpush1.xpose.msra.mxu0 0.0
    %2894 = vmatprep.subr.mxu0 0.0
    %2895 = vmatpush1.xpose.msra.mxu0 0.0
    %2896 = vmatprep.subr.mxu0 0.0
    %2897 = vmatpush1.xpose.msra.mxu0 0.0
    %2898 = vmatprep.subr.mxu0 0.0
    %2899 = vmatpush1.xpose.msra.mxu0 0.0
    %2900 = vmatprep.subr.mxu0 0.0
    %2901 = vmatpush1.xpose.msra.mxu0 0.0
    %2902 = vmatprep.subr.mxu0 0.0
    %2903 = vmatpush1.xpose.msra.mxu0 0.0
    %2904 = vmatprep.subr.mxu0 0.0
    %2905 = vmatpush1.xpose.msra.mxu0 0.0
    %2906 = vmatprep.subr.mxu0 0.0
    %2907 = vmatpush1.xpose.msra.mxu0 0.0
    %2908 = vmatprep.subr.mxu0 0.0
    %2909 = vmatpush1.xpose.msra.mxu0 0.0
    %2910 = vmatprep.subr.mxu0 0.0
    %2911 = vmatpush1.xpose.msra.mxu0 0.0
    %2912 = vmatprep.mubr.f32.mxu0 0.0
    %2913 = vmatmul.mubr.f32.gmra.mrb[0].mxu0 %v2843
    %v2914 = vpop.f32.mrb[0].mxu0
    %v2915 = vadd.f32 0.0, %v2914
    %v2916 = vpop.f32.mrb[0].mxu0
    %2917 = vdwg.mxu0
    %v2919 = vsel %vm1023, %v2133, 0
    %v2922 = vsel %vm1023, %v2416, 0
    %2924 = vmatprep.subr.mxu0 0.0
    %2925 = vmatpush1.xpose.msra.mxu0 %v2922
    %2926 = vmatprep.subr.mxu0 0.0
    %2927 = vmatpush1.xpose.msra.mxu0 0.0
    %2928 = vmatprep.subr.mxu0 0.0
    %2929 = vmatpush1.xpose.msra.mxu0 0.0
    %2930 = vmatprep.subr.mxu0 0.0
    %2931 = vmatpush1.xpose.msra.mxu0 0.0
    %2932 = vmatprep.subr.mxu0 0.0
    %2933 = vmatpush1.xpose.msra.mxu0 0.0
    %2934 = vmatprep.subr.mxu0 0.0
    %2935 = vmatpush1.xpose.msra.mxu0 0.0
    %2936 = vmatprep.subr.mxu0 0.0
    %2937 = vmatpush1.xpose.msra.mxu0 0.0
    %2938 = vmatprep.subr.mxu0 0.0
    %2939 = vmatpush1.xpose.msra.mxu0 0.0
    %2940 = vmatprep.subr.mxu0 0.0
    %2941 = vmatpush1.xpose.msra.mxu0 0.0
    %2942 = vmatprep.subr.mxu0 0.0
    %2943 = vmatpush1.xpose.msra.mxu0 0.0
    %2944 = vmatprep.subr.mxu0 0.0
    %2945 = vmatpush1.xpose.msra.mxu0 0.0
    %2946 = vmatprep.subr.mxu0 0.0
    %2947 = vmatpush1.xpose.msra.mxu0 0.0
    %2948 = vmatprep.subr.mxu0 0.0
    %2949 = vmatpush1.xpose.msra.mxu0 0.0
    %2950 = vmatprep.subr.mxu0 0.0
    %2951 = vmatpush1.xpose.msra.mxu0 0.0
    %2952 = vmatprep.subr.mxu0 0.0
    %2953 = vmatpush1.xpose.msra.mxu0 0.0
    %2954 = vmatprep.subr.mxu0 0.0
    %2955 = vmatpush1.xpose.msra.mxu0 0.0
    %2956 = vmatprep.subr.mxu0 0.0
    %2957 = vmatpush1.xpose.msra.mxu0 0.0
    %2958 = vmatprep.subr.mxu0 0.0
    %2959 = vmatpush1.xpose.msra.mxu0 0.0
    %2960 = vmatprep.subr.mxu0 0.0
    %2961 = vmatpush1.xpose.msra.mxu0 0.0
    %2962 = vmatprep.subr.mxu0 0.0
    %2963 = vmatpush1.xpose.msra.mxu0 0.0
    %2964 = vmatprep.subr.mxu0 0.0
    %2965 = vmatpush1.xpose.msra.mxu0 0.0
    %2966 = vmatprep.subr.mxu0 0.0
    %2967 = vmatpush1.xpose.msra.mxu0 0.0
    %2968 = vmatprep.subr.mxu0 0.0
    %2969 = vmatpush1.xpose.msra.mxu0 0.0
    %2970 = vmatprep.subr.mxu0 0.0
    %2971 = vmatpush1.xpose.msra.mxu0 0.0
    %2972 = vmatprep.subr.mxu0 0.0
    %2973 = vmatpush1.xpose.msra.mxu0 0.0
    %2974 = vmatprep.subr.mxu0 0.0
    %2975 = vmatpush1.xpose.msra.mxu0 0.0
    %2976 = vmatprep.subr.mxu0 0.0
    %2977 = vmatpush1.xpose.msra.mxu0 0.0
    %2978 = vmatprep.subr.mxu0 0.0
    %2979 = vmatpush1.xpose.msra.mxu0 0.0
    %2980 = vmatprep.subr.mxu0 0.0
    %2981 = vmatpush1.xpose.msra.mxu0 0.0
    %2982 = vmatprep.subr.mxu0 0.0
    %2983 = vmatpush1.xpose.msra.mxu0 0.0
    %2984 = vmatprep.subr.mxu0 0.0
    %2985 = vmatpush1.xpose.msra.mxu0 0.0
    %2986 = vmatprep.subr.mxu0 0.0
    %2987 = vmatpush1.xpose.msra.mxu0 0.0
    %2988 = vmatprep.mubr.f32.mxu0 0.0
    %2989 = vmatmul.mubr.f32.gmra.mrb[0].mxu0 %v2919
    %v2990 = vpop.f32.mrb[0].mxu0
    %v2991 = vadd.f32 0.0, %v2990
    %v2992 = vpop.f32.mrb[0].mxu0
    %2993 = vdwg.mxu0
    %v2995 = vsel %vm1023, %v2203, 0
    %v2998 = vsel %vm1023, %v2486, 0
    %3000 = vmatprep.subr.mxu0 0.0
    %3001 = vmatpush1.xpose.msra.mxu0 %v2998
    %3002 = vmatprep.subr.mxu0 0.0
    %3003 = vmatpush1.xpose.msra.mxu0 0.0
    %3004 = vmatprep.subr.mxu0 0.0
    %3005 = vmatpush1.xpose.msra.mxu0 0.0
    %3006 = vmatprep.subr.mxu0 0.0
    %3007 = vmatpush1.xpose.msra.mxu0 0.0
    %3008 = vmatprep.subr.mxu0 0.0
    %3009 = vmatpush1.xpose.msra.mxu0 0.0
    %3010 = vmatprep.subr.mxu0 0.0
    %3011 = vmatpush1.xpose.msra.mxu0 0.0
    %3012 = vmatprep.subr.mxu0 0.0
    %3013 = vmatpush1.xpose.msra.mxu0 0.0
    %3014 = vmatprep.subr.mxu0 0.0
    %3015 = vmatpush1.xpose.msra.mxu0 0.0
    %3016 = vmatprep.subr.mxu0 0.0
    %3017 = vmatpush1.xpose.msra.mxu0 0.0
    %3018 = vmatprep.subr.mxu0 0.0
    %3019 = vmatpush1.xpose.msra.mxu0 0.0
    %3020 = vmatprep.subr.mxu0 0.0
    %3021 = vmatpush1.xpose.msra.mxu0 0.0
    %3022 = vmatprep.subr.mxu0 0.0
    %3023 = vmatpush1.xpose.msra.mxu0 0.0
    %3024 = vmatprep.subr.mxu0 0.0
    %3025 = vmatpush1.xpose.msra.mxu0 0.0
    %3026 = vmatprep.subr.mxu0 0.0
    %3027 = vmatpush1.xpose.msra.mxu0 0.0
    %3028 = vmatprep.subr.mxu0 0.0
    %3029 = vmatpush1.xpose.msra.mxu0 0.0
    %3030 = vmatprep.subr.mxu0 0.0
    %3031 = vmatpush1.xpose.msra.mxu0 0.0
    %3032 = vmatprep.subr.mxu0 0.0
    %3033 = vmatpush1.xpose.msra.mxu0 0.0
    %3034 = vmatprep.subr.mxu0 0.0
    %3035 = vmatpush1.xpose.msra.mxu0 0.0
    %3036 = vmatprep.subr.mxu0 0.0
    %3037 = vmatpush1.xpose.msra.mxu0 0.0
    %3038 = vmatprep.subr.mxu0 0.0
    %3039 = vmatpush1.xpose.msra.mxu0 0.0
    %3040 = vmatprep.subr.mxu0 0.0
    %3041 = vmatpush1.xpose.msra.mxu0 0.0
    %3042 = vmatprep.subr.mxu0 0.0
    %3043 = vmatpush1.xpose.msra.mxu0 0.0
    %3044 = vmatprep.subr.mxu0 0.0
    %3045 = vmatpush1.xpose.msra.mxu0 0.0
    %3046 = vmatprep.subr.mxu0 0.0
    %3047 = vmatpush1.xpose.msra.mxu0 0.0
    %3048 = vmatprep.subr.mxu0 0.0
    %3049 = vmatpush1.xpose.msra.mxu0 0.0
    %3050 = vmatprep.subr.mxu0 0.0
    %3051 = vmatpush1.xpose.msra.mxu0 0.0
    %3052 = vmatprep.subr.mxu0 0.0
    %3053 = vmatpush1.xpose.msra.mxu0 0.0
    %3054 = vmatprep.subr.mxu0 0.0
    %3055 = vmatpush1.xpose.msra.mxu0 0.0
    %3056 = vmatprep.subr.mxu0 0.0
    %3057 = vmatpush1.xpose.msra.mxu0 0.0
    %3058 = vmatprep.subr.mxu0 0.0
    %3059 = vmatpush1.xpose.msra.mxu0 0.0
    %3060 = vmatprep.subr.mxu0 0.0
    %3061 = vmatpush1.xpose.msra.mxu0 0.0
    %3062 = vmatprep.subr.mxu0 0.0
    %3063 = vmatpush1.xpose.msra.mxu0 0.0
    %3064 = vmatprep.mubr.f32.mxu0 0.0
    %3065 = vmatmul.mubr.f32.gmra.mrb[0].mxu0 %v2995
    %v3066 = vpop.f32.mrb[0].mxu0
    %v3067 = vadd.f32 0.0, %v3066
    %v3068 = vpop.f32.mrb[0].mxu0
    %3069 = vdwg.mxu0
    %v3071 = vsel %vm1023, %v2273, 0
    %v3074 = vsel %vm1023, %v2556, 0
    %3076 = vmatprep.subr.mxu0 0.0
    %3077 = vmatpush1.xpose.msra.mxu0 %v3074
    %3078 = vmatprep.subr.mxu0 0.0
    %3079 = vmatpush1.xpose.msra.mxu0 0.0
    %3080 = vmatprep.subr.mxu0 0.0
    %3081 = vmatpush1.xpose.msra.mxu0 0.0
    %3082 = vmatprep.subr.mxu0 0.0
    %3083 = vmatpush1.xpose.msra.mxu0 0.0
    %3084 = vmatprep.subr.mxu0 0.0
    %3085 = vmatpush1.xpose.msra.mxu0 0.0
    %3086 = vmatprep.subr.mxu0 0.0
    %3087 = vmatpush1.xpose.msra.mxu0 0.0
    %3088 = vmatprep.subr.mxu0 0.0
    %3089 = vmatpush1.xpose.msra.mxu0 0.0
    %3090 = vmatprep.subr.mxu0 0.0
    %3091 = vmatpush1.xpose.msra.mxu0 0.0
    %3092 = vmatprep.subr.mxu0 0.0
    %3093 = vmatpush1.xpose.msra.mxu0 0.0
    %3094 = vmatprep.subr.mxu0 0.0
    %3095 = vmatpush1.xpose.msra.mxu0 0.0
    %3096 = vmatprep.subr.mxu0 0.0
    %3097 = vmatpush1.xpose.msra.mxu0 0.0
    %3098 = vmatprep.subr.mxu0 0.0
    %3099 = vmatpush1.xpose.msra.mxu0 0.0
    %3100 = vmatprep.subr.mxu0 0.0
    %3101 = vmatpush1.xpose.msra.mxu0 0.0
    %3102 = vmatprep.subr.mxu0 0.0
    %3103 = vmatpush1.xpose.msra.mxu0 0.0
    %3104 = vmatprep.subr.mxu0 0.0
    %3105 = vmatpush1.xpose.msra.mxu0 0.0
    %3106 = vmatprep.subr.mxu0 0.0
    %3107 = vmatpush1.xpose.msra.mxu0 0.0
    %3108 = vmatprep.subr.mxu0 0.0
    %3109 = vmatpush1.xpose.msra.mxu0 0.0
    %3110 = vmatprep.subr.mxu0 0.0
    %3111 = vmatpush1.xpose.msra.mxu0 0.0
    %3112 = vmatprep.subr.mxu0 0.0
    %3113 = vmatpush1.xpose.msra.mxu0 0.0
    %3114 = vmatprep.subr.mxu0 0.0
    %3115 = vmatpush1.xpose.msra.mxu0 0.0
    %3116 = vmatprep.subr.mxu0 0.0
    %3117 = vmatpush1.xpose.msra.mxu0 0.0
    %3118 = vmatprep.subr.mxu0 0.0
    %3119 = vmatpush1.xpose.msra.mxu0 0.0
    %3120 = vmatprep.subr.mxu0 0.0
    %3121 = vmatpush1.xpose.msra.mxu0 0.0
    %3122 = vmatprep.subr.mxu0 0.0
    %3123 = vmatpush1.xpose.msra.mxu0 0.0
    %3124 = vmatprep.subr.mxu0 0.0
    %3125 = vmatpush1.xpose.msra.mxu0 0.0
    %3126 = vmatprep.subr.mxu0 0.0
    %3127 = vmatpush1.xpose.msra.mxu0 0.0
    %3128 = vmatprep.subr.mxu0 0.0
    %3129 = vmatpush1.xpose.msra.mxu0 0.0
    %3130 = vmatprep.subr.mxu0 0.0
    %3131 = vmatpush1.xpose.msra.mxu0 0.0
    %3132 = vmatprep.subr.mxu0 0.0
    %3133 = vmatpush1.xpose.msra.mxu0 0.0
    %3134 = vmatprep.subr.mxu0 0.0
    %3135 = vmatpush1.xpose.msra.mxu0 0.0
    %3136 = vmatprep.subr.mxu0 0.0
    %3137 = vmatpush1.xpose.msra.mxu0 0.0
    %3138 = vmatprep.subr.mxu0 0.0
    %3139 = vmatpush1.xpose.msra.mxu0 0.0
    %3140 = vmatprep.mubr.f32.mxu0 0.0
    %3141 = vmatmul.mubr.f32.gmra.mrb[0].mxu0 %v3071
    %v3142 = vpop.f32.mrb[0].mxu0
    %v3143 = vadd.f32 0.0, %v3142
    %v3144 = vpop.f32.mrb[0].mxu0
    %3145 = vdwg.mxu0
    %s3146 = scalar_lea.vmem %s3, 1
    %v3147 = vld [vmem:[%s3146] sm:$0x1]
    %v3149 = vlaneseq
    %v3150 = vshrl.u32 %v3149, 7
    %v3151 = vsub.s32 0, %v3150
    %v3152 = vrot.slane %v3147, %v3151
    %vm3154 = vcmp.gt.f32.partialorder %v3152, 0.0
    %v3155 = vsel %vm3154, %v2915, -1e+10
    %v3156 = vsel %vm3154, %v2991, -1e+10
    %v3157 = vsel %vm3154, %v3067, -1e+10
    %v3158 = vsel %vm3154, %v3143, -1e+10
    %v3159 = vsel %vm1023, %v3155, -inf
    %3160 = vmax.xlane.f32.xlu0 %v3159
    %v3161 = vpop.xlane.xlu0 %3160
    %v3162 = vsel %vm1023, %v3156, -inf
    %3163 = vmax.xlane.f32.xlu0 %v3162
    %v3164 = vpop.xlane.xlu0 %3163
    %v3165 = vsel %vm1023, %v3157, -inf
    %3166 = vmax.xlane.f32.xlu0 %v3165
    %v3167 = vpop.xlane.xlu0 %3166
    %v3168 = vsel %vm1023, %v3158, -inf
    %3169 = vmax.xlane.f32.xlu0 %v3168
    %v3170 = vpop.xlane.xlu0 %3169
    %v3171 = vsub.f32 %v3155, %v3161
    %v3172 = vsub.f32 %v3156, %v3164
    %v3173 = vsub.f32 %v3157, %v3167
    %v3174 = vsub.f32 %v3158, %v3170
    %v3175 = vmul.f32 %v3171, 1.442695
    %v3176 = vpow.pop %v3175
    %v3177 = vmul.f32 %v3172, 1.442695
    %v3178 = vpow.pop %v3177
    %v3179 = vmul.f32 %v3173, 1.442695
    %v3180 = vpow.pop %v3179
    %v3181 = vmul.f32 %v3174, 1.442695
    %v3182 = vpow.pop %v3181
    %v3183 = vsel %vm1023, %v3176, 0.0
    %3184 = vadd.xlane.f32.xlu0 %v3183
    %v3185 = vpop.xlane.xlu0 %3184
    %v3186 = vsel %vm1023, %v3178, 0.0
    %3187 = vadd.xlane.f32.xlu0 %v3186
    %v3188 = vpop.xlane.xlu0 %3187
    %v3189 = vsel %vm1023, %v3180, 0.0
    %3190 = vadd.xlane.f32.xlu0 %v3189
    %v3191 = vpop.xlane.xlu0 %3190
    %v3192 = vsel %vm1023, %v3182, 0.0
    %3193 = vadd.xlane.f32.xlu0 %v3192
    %v3194 = vpop.xlane.xlu0 %3193
    %v3195 = vrcp.pop %v3185
    %v3196 = vmul.f32 %v3176, %v3195
    %v3197 = vrcp.pop %v3188
    %v3198 = vmul.f32 %v3178, %v3197
    %v3199 = vrcp.pop %v3191
    %v3200 = vmul.f32 %v3180, %v3199
    %v3201 = vrcp.pop %v3194
    %v3202 = vmul.f32 %v3182, %v3201
    %s3203 = scalar_lea.vmem [#allocation4], 32
    %3204 = vst.msk [vmem:[%s3203] sm:$0xff] %vm1023, %v3196
    %3205 = vst.msk [vmem:[%s3203 + $0x8] sm:$0xff] %vm1023, %v3198
    %3206 = vst.msk [vmem:[%s3203 + $0x10] sm:$0xff] %vm1023, %v3200
    %3207 = vst.msk [vmem:[%s3203 + $0x18] sm:$0xff] %vm1023, %v3202
    %v3209 = vsel %vm1023, %v3196, 0
    %3211 = vmatprep.subr.mxu0 0.0
    %3212 = vmatpush1.msra.mxu0 %v2629
    %3213 = vmatprep.subr.mxu0 0.0
    %3214 = vmatpush1.msra.mxu0 0.0
    %3215 = vmatprep.subr.mxu0 0.0
    %3216 = vmatpush1.msra.mxu0 0.0
    %3217 = vmatprep.subr.mxu0 0.0
    %3218 = vmatpush1.msra.mxu0 0.0
    %3219 = vmatprep.subr.mxu0 0.0
    %3220 = vmatpush1.msra.mxu0 0.0
    %3221 = vmatprep.subr.mxu0 0.0
    %3222 = vmatpush1.msra.mxu0 0.0
    %3223 = vmatprep.subr.mxu0 0.0
    %3224 = vmatpush1.msra.mxu0 0.0
    %3225 = vmatprep.subr.mxu0 0.0
    %3226 = vmatpush1.msra.mxu0 0.0
    %3227 = vmatprep.subr.mxu0 0.0
    %3228 = vmatpush1.msra.mxu0 0.0
    %3229 = vmatprep.subr.mxu0 0.0
    %3230 = vmatpush1.msra.mxu0 0.0
    %3231 = vmatprep.subr.mxu0 0.0
    %3232 = vmatpush1.msra.mxu0 0.0
    %3233 = vmatprep.subr.mxu0 0.0
    %3234 = vmatpush1.msra.mxu0 0.0
    %3235 = vmatprep.subr.mxu0 0.0
    %3236 = vmatpush1.msra.mxu0 0.0
    %3237 = vmatprep.subr.mxu0 0.0
    %3238 = vmatpush1.msra.mxu0 0.0
    %3239 = vmatprep.subr.mxu0 0.0
    %3240 = vmatpush1.msra.mxu0 0.0
    %3241 = vmatprep.subr.mxu0 0.0
    %3242 = vmatpush1.msra.mxu0 0.0
    %3243 = vmatprep.subr.mxu0 0.0
    %3244 = vmatpush1.msra.mxu0 0.0
    %3245 = vmatprep.subr.mxu0 0.0
    %3246 = vmatpush1.msra.mxu0 0.0
    %3247 = vmatprep.subr.mxu0 0.0
    %3248 = vmatpush1.msra.mxu0 0.0
    %3249 = vmatprep.subr.mxu0 0.0
    %3250 = vmatpush1.msra.mxu0 0.0
    %3251 = vmatprep.subr.mxu0 0.0
    %3252 = vmatpush1.msra.mxu0 0.0
    %3253 = vmatprep.subr.mxu0 0.0
    %3254 = vmatpush1.msra.mxu0 0.0
    %3255 = vmatprep.subr.mxu0 0.0
    %3256 = vmatpush1.msra.mxu0 0.0
    %3257 = vmatprep.subr.mxu0 0.0
    %3258 = vmatpush1.msra.mxu0 0.0
    %3259 = vmatprep.subr.mxu0 0.0
    %3260 = vmatpush1.msra.mxu0 0.0
    %3261 = vmatprep.subr.mxu0 0.0
    %3262 = vmatpush1.msra.mxu0 0.0
    %3263 = vmatprep.subr.mxu0 0.0
    %3264 = vmatpush1.msra.mxu0 0.0
    %3265 = vmatprep.subr.mxu0 0.0
    %3266 = vmatpush1.msra.mxu0 0.0
    %3267 = vmatprep.subr.mxu0 0.0
    %3268 = vmatpush1.msra.mxu0 0.0
    %3269 = vmatprep.subr.mxu0 0.0
    %3270 = vmatpush1.msra.mxu0 0.0
    %3271 = vmatprep.subr.mxu0 0.0
    %3272 = vmatpush1.msra.mxu0 0.0
    %3273 = vmatprep.subr.mxu0 0.0
    %3274 = vmatpush1.msra.mxu0 0.0
    %3275 = vmatprep.mubr.f32.mxu0 0.0
    %3276 = vmatmul.mubr.f32.gmra.mrb[0].mxu0 %v3209
    %v3277 = vpop.f32.mrb[0].mxu0
    %v3278 = vadd.f32 0.0, %v3277
    %v3279 = vpop.f32.mrb[0].mxu0
    %3280 = vdwg.mxu0
    %v3282 = vsel %vm1023, %v3198, 0
    %3284 = vmatprep.subr.mxu0 0.0
    %3285 = vmatpush1.msra.mxu0 %v2699
    %3286 = vmatprep.subr.mxu0 0.0
    %3287 = vmatpush1.msra.mxu0 0.0
    %3288 = vmatprep.subr.mxu0 0.0
    %3289 = vmatpush1.msra.mxu0 0.0
    %3290 = vmatprep.subr.mxu0 0.0
    %3291 = vmatpush1.msra.mxu0 0.0
    %3292 = vmatprep.subr.mxu0 0.0
    %3293 = vmatpush1.msra.mxu0 0.0
    %3294 = vmatprep.subr.mxu0 0.0
    %3295 = vmatpush1.msra.mxu0 0.0
    %3296 = vmatprep.subr.mxu0 0.0
    %3297 = vmatpush1.msra.mxu0 0.0
    %3298 = vmatprep.subr.mxu0 0.0
    %3299 = vmatpush1.msra.mxu0 0.0
    %3300 = vmatprep.subr.mxu0 0.0
    %3301 = vmatpush1.msra.mxu0 0.0
    %3302 = vmatprep.subr.mxu0 0.0
    %3303 = vmatpush1.msra.mxu0 0.0
    %3304 = vmatprep.subr.mxu0 0.0
    %3305 = vmatpush1.msra.mxu0 0.0
    %3306 = vmatprep.subr.mxu0 0.0
    %3307 = vmatpush1.msra.mxu0 0.0
    %3308 = vmatprep.subr.mxu0 0.0
    %3309 = vmatpush1.msra.mxu0 0.0
    %3310 = vmatprep.subr.mxu0 0.0
    %3311 = vmatpush1.msra.mxu0 0.0
    %3312 = vmatprep.subr.mxu0 0.0
    %3313 = vmatpush1.msra.mxu0 0.0
    %3314 = vmatprep.subr.mxu0 0.0
    %3315 = vmatpush1.msra.mxu0 0.0
    %3316 = vmatprep.subr.mxu0 0.0
    %3317 = vmatpush1.msra.mxu0 0.0
    %3318 = vmatprep.subr.mxu0 0.0
    %3319 = vmatpush1.msra.mxu0 0.0
    %3320 = vmatprep.subr.mxu0 0.0
    %3321 = vmatpush1.msra.mxu0 0.0
    %3322 = vmatprep.subr.mxu0 0.0
    %3323 = vmatpush1.msra.mxu0 0.0
    %3324 = vmatprep.subr.mxu0 0.0
    %3325 = vmatpush1.msra.mxu0 0.0
    %3326 = vmatprep.subr.mxu0 0.0
    %3327 = vmatpush1.msra.mxu0 0.0
    %3328 = vmatprep.subr.mxu0 0.0
    %3329 = vmatpush1.msra.mxu0 0.0
    %3330 = vmatprep.subr.mxu0 0.0
    %3331 = vmatpush1.msra.mxu0 0.0
    %3332 = vmatprep.subr.mxu0 0.0
    %3333 = vmatpush1.msra.mxu0 0.0
    %3334 = vmatprep.subr.mxu0 0.0
    %3335 = vmatpush1.msra.mxu0 0.0
    %3336 = vmatprep.subr.mxu0 0.0
    %3337 = vmatpush1.msra.mxu0 0.0
    %3338 = vmatprep.subr.mxu0 0.0
    %3339 = vmatpush1.msra.mxu0 0.0
    %3340 = vmatprep.subr.mxu0 0.0
    %3341 = vmatpush1.msra.mxu0 0.0
    %3342 = vmatprep.subr.mxu0 0.0
    %3343 = vmatpush1.msra.mxu0 0.0
    %3344 = vmatprep.subr.mxu0 0.0
    %3345 = vmatpush1.msra.mxu0 0.0
    %3346 = vmatprep.subr.mxu0 0.0
    %3347 = vmatpush1.msra.mxu0 0.0
    %3348 = vmatprep.mubr.f32.mxu0 0.0
    %3349 = vmatmul.mubr.f32.gmra.mrb[0].mxu0 %v3282
    %v3350 = vpop.f32.mrb[0].mxu0
    %v3351 = vadd.f32 0.0, %v3350
    %v3352 = vpop.f32.mrb[0].mxu0
    %3353 = vdwg.mxu0
    %v3355 = vsel %vm1023, %v3200, 0
    %3357 = vmatprep.subr.mxu0 0.0
    %3358 = vmatpush1.msra.mxu0 %v2769
    %3359 = vmatprep.subr.mxu0 0.0
    %3360 = vmatpush1.msra.mxu0 0.0
    %3361 = vmatprep.subr.mxu0 0.0
    %3362 = vmatpush1.msra.mxu0 0.0
    %3363 = vmatprep.subr.mxu0 0.0
    %3364 = vmatpush1.msra.mxu0 0.0
    %3365 = vmatprep.subr.mxu0 0.0
    %3366 = vmatpush1.msra.mxu0 0.0
    %3367 = vmatprep.subr.mxu0 0.0
    %3368 = vmatpush1.msra.mxu0 0.0
    %3369 = vmatprep.subr.mxu0 0.0
    %3370 = vmatpush1.msra.mxu0 0.0
    %3371 = vmatprep.subr.mxu0 0.0
    %3372 = vmatpush1.msra.mxu0 0.0
    %3373 = vmatprep.subr.mxu0 0.0
    %3374 = vmatpush1.msra.mxu0 0.0
    %3375 = vmatprep.subr.mxu0 0.0
    %3376 = vmatpush1.msra.mxu0 0.0
    %3377 = vmatprep.subr.mxu0 0.0
    %3378 = vmatpush1.msra.mxu0 0.0
    %3379 = vmatprep.subr.mxu0 0.0
    %3380 = vmatpush1.msra.mxu0 0.0
    %3381 = vmatprep.subr.mxu0 0.0
    %3382 = vmatpush1.msra.mxu0 0.0
    %3383 = vmatprep.subr.mxu0 0.0
    %3384 = vmatpush1.msra.mxu0 0.0
    %3385 = vmatprep.subr.mxu0 0.0
    %3386 = vmatpush1.msra.mxu0 0.0
    %3387 = vmatprep.subr.mxu0 0.0
    %3388 = vmatpush1.msra.mxu0 0.0
    %3389 = vmatprep.subr.mxu0 0.0
    %3390 = vmatpush1.msra.mxu0 0.0
    %3391 = vmatprep.subr.mxu0 0.0
    %3392 = vmatpush1.msra.mxu0 0.0
    %3393 = vmatprep.subr.mxu0 0.0
    %3394 = vmatpush1.msra.mxu0 0.0
    %3395 = vmatprep.subr.mxu0 0.0
    %3396 = vmatpush1.msra.mxu0 0.0
    %3397 = vmatprep.subr.mxu0 0.0
    %3398 = vmatpush1.msra.mxu0 0.0
    %3399 = vmatprep.subr.mxu0 0.0
    %3400 = vmatpush1.msra.mxu0 0.0
    %3401 = vmatprep.subr.mxu0 0.0
    %3402 = vmatpush1.msra.mxu0 0.0
    %3403 = vmatprep.subr.mxu0 0.0
    %3404 = vmatpush1.msra.mxu0 0.0
    %3405 = vmatprep.subr.mxu0 0.0
    %3406 = vmatpush1.msra.mxu0 0.0
    %3407 = vmatprep.subr.mxu0 0.0
    %3408 = vmatpush1.msra.mxu0 0.0
    %3409 = vmatprep.subr.mxu0 0.0
    %3410 = vmatpush1.msra.mxu0 0.0
    %3411 = vmatprep.subr.mxu0 0.0
    %3412 = vmatpush1.msra.mxu0 0.0
    %3413 = vmatprep.subr.mxu0 0.0
    %3414 = vmatpush1.msra.mxu0 0.0
    %3415 = vmatprep.subr.mxu0 0.0
    %3416 = vmatpush1.msra.mxu0 0.0
    %3417 = vmatprep.subr.mxu0 0.0
    %3418 = vmatpush1.msra.mxu0 0.0
    %3419 = vmatprep.subr.mxu0 0.0
    %3420 = vmatpush1.msra.mxu0 0.0
    %3421 = vmatprep.mubr.f32.mxu0 0.0
    %3422 = vmatmul.mubr.f32.gmra.mrb[0].mxu0 %v3355
    %v3423 = vpop.f32.mrb[0].mxu0
    %v3424 = vadd.f32 0.0, %v3423
    %v3425 = vpop.f32.mrb[0].mxu0
    %3426 = vdwg.mxu0
    %v3428 = vsel %vm1023, %v3202, 0
    %3430 = vmatprep.subr.mxu0 0.0
    %3431 = vmatpush1.msra.mxu0 %v2839
    %3432 = vmatprep.subr.mxu0 0.0
    %3433 = vmatpush1.msra.mxu0 0.0
    %3434 = vmatprep.subr.mxu0 0.0
    %3435 = vmatpush1.msra.mxu0 0.0
    %3436 = vmatprep.subr.mxu0 0.0
    %3437 = vmatpush1.msra.mxu0 0.0
    %3438 = vmatprep.subr.mxu0 0.0
    %3439 = vmatpush1.msra.mxu0 0.0
    %3440 = vmatprep.subr.mxu0 0.0
    %3441 = vmatpush1.msra.mxu0 0.0
    %3442 = vmatprep.subr.mxu0 0.0
    %3443 = vmatpush1.msra.mxu0 0.0
    %3444 = vmatprep.subr.mxu0 0.0
    %3445 = vmatpush1.msra.mxu0 0.0
    %3446 = vmatprep.subr.mxu0 0.0
    %3447 = vmatpush1.msra.mxu0 0.0
    %3448 = vmatprep.subr.mxu0 0.0
    %3449 = vmatpush1.msra.mxu0 0.0
    %3450 = vmatprep.subr.mxu0 0.0
    %3451 = vmatpush1.msra.mxu0 0.0
    %3452 = vmatprep.subr.mxu0 0.0
    %3453 = vmatpush1.msra.mxu0 0.0
    %3454 = vmatprep.subr.mxu0 0.0
    %3455 = vmatpush1.msra.mxu0 0.0
    %3456 = vmatprep.subr.mxu0 0.0
    %3457 = vmatpush1.msra.mxu0 0.0
    %3458 = vmatprep.subr.mxu0 0.0
    %3459 = vmatpush1.msra.mxu0 0.0
    %3460 = vmatprep.subr.mxu0 0.0
    %3461 = vmatpush1.msra.mxu0 0.0
    %3462 = vmatprep.subr.mxu0 0.0
    %3463 = vmatpush1.msra.mxu0 0.0
    %3464 = vmatprep.subr.mxu0 0.0
    %3465 = vmatpush1.msra.mxu0 0.0
    %3466 = vmatprep.subr.mxu0 0.0
    %3467 = vmatpush1.msra.mxu0 0.0
    %3468 = vmatprep.subr.mxu0 0.0
    %3469 = vmatpush1.msra.mxu0 0.0
    %3470 = vmatprep.subr.mxu0 0.0
    %3471 = vmatpush1.msra.mxu0 0.0
    %3472 = vmatprep.subr.mxu0 0.0
    %3473 = vmatpush1.msra.mxu0 0.0
    %3474 = vmatprep.subr.mxu0 0.0
    %3475 = vmatpush1.msra.mxu0 0.0
    %3476 = vmatprep.subr.mxu0 0.0
    %3477 = vmatpush1.msra.mxu0 0.0
    %3478 = vmatprep.subr.mxu0 0.0
    %3479 = vmatpush1.msra.mxu0 0.0
    %3480 = vmatprep.subr.mxu0 0.0
    %3481 = vmatpush1.msra.mxu0 0.0
    %3482 = vmatprep.subr.mxu0 0.0
    %3483 = vmatpush1.msra.mxu0 0.0
    %3484 = vmatprep.subr.mxu0 0.0
    %3485 = vmatpush1.msra.mxu0 0.0
    %3486 = vmatprep.subr.mxu0 0.0
    %3487 = vmatpush1.msra.mxu0 0.0
    %3488 = vmatprep.subr.mxu0 0.0
    %3489 = vmatpush1.msra.mxu0 0.0
    %3490 = vmatprep.subr.mxu0 0.0
    %3491 = vmatpush1.msra.mxu0 0.0
    %3492 = vmatprep.subr.mxu0 0.0
    %3493 = vmatpush1.msra.mxu0 0.0
    %3494 = vmatprep.mubr.f32.mxu0 0.0
    %3495 = vmatmul.mubr.f32.gmra.mrb[0].mxu0 %v3428
    %v3496 = vpop.f32.mrb[0].mxu0
    %v3497 = vadd.f32 0.0, %v3496
    %v3498 = vpop.f32.mrb[0].mxu0
    %3499 = vdwg.mxu0
    %v3501 = vsel %vm1023, %v3278, 0
    %3503 = vmatprep.subr.mxu0 0.0
    %3504 = vmatpush1.msra.mxu0 %v93
    %3505 = vmatprep.subr.mxu0 0.0
    %3506 = vmatpush1.msra.mxu0 0.0
    %3507 = vmatprep.subr.mxu0 0.0
    %3508 = vmatpush1.msra.mxu0 0.0
    %3509 = vmatprep.subr.mxu0 0.0
    %3510 = vmatpush1.msra.mxu0 0.0
    %3511 = vmatprep.subr.mxu0 0.0
    %3512 = vmatpush1.msra.mxu0 0.0
    %3513 = vmatprep.subr.mxu0 0.0
    %3514 = vmatpush1.msra.mxu0 0.0
    %3515 = vmatprep.subr.mxu0 0.0
    %3516 = vmatpush1.msra.mxu0 0.0
    %3517 = vmatprep.subr.mxu0 0.0
    %3518 = vmatpush1.msra.mxu0 0.0
    %3519 = vmatprep.subr.mxu0 0.0
    %3520 = vmatpush1.msra.mxu0 0.0
    %3521 = vmatprep.subr.mxu0 0.0
    %3522 = vmatpush1.msra.mxu0 0.0
    %3523 = vmatprep.subr.mxu0 0.0
    %3524 = vmatpush1.msra.mxu0 0.0
    %3525 = vmatprep.subr.mxu0 0.0
    %3526 = vmatpush1.msra.mxu0 0.0
    %3527 = vmatprep.subr.mxu0 0.0
    %3528 = vmatpush1.msra.mxu0 0.0
    %3529 = vmatprep.subr.mxu0 0.0
    %3530 = vmatpush1.msra.mxu0 0.0
    %3531 = vmatprep.subr.mxu0 0.0
    %3532 = vmatpush1.msra.mxu0 0.0
    %3533 = vmatprep.subr.mxu0 0.0
    %3534 = vmatpush1.msra.mxu0 0.0
    %3535 = vmatprep.subr.mxu0 0.0
    %3536 = vmatpush1.msra.mxu0 0.0
    %3537 = vmatprep.subr.mxu0 0.0
    %3538 = vmatpush1.msra.mxu0 0.0
    %3539 = vmatprep.subr.mxu0 0.0
    %3540 = vmatpush1.msra.mxu0 0.0
    %3541 = vmatprep.subr.mxu0 0.0
    %3542 = vmatpush1.msra.mxu0 0.0
    %3543 = vmatprep.subr.mxu0 0.0
    %3544 = vmatpush1.msra.mxu0 0.0
    %3545 = vmatprep.subr.mxu0 0.0
    %3546 = vmatpush1.msra.mxu0 0.0
    %3547 = vmatprep.subr.mxu0 0.0
    %3548 = vmatpush1.msra.mxu0 0.0
    %3549 = vmatprep.subr.mxu0 0.0
    %3550 = vmatpush1.msra.mxu0 0.0
    %3551 = vmatprep.subr.mxu0 0.0
    %3552 = vmatpush1.msra.mxu0 0.0
    %3553 = vmatprep.subr.mxu0 0.0
    %3554 = vmatpush1.msra.mxu0 0.0
    %3555 = vmatprep.subr.mxu0 0.0
    %3556 = vmatpush1.msra.mxu0 0.0
    %3557 = vmatprep.subr.mxu0 0.0
    %3558 = vmatpush1.msra.mxu0 0.0
    %3559 = vmatprep.subr.mxu0 0.0
    %3560 = vmatpush1.msra.mxu0 0.0
    %3561 = vmatprep.subr.mxu0 0.0
    %3562 = vmatpush1.msra.mxu0 0.0
    %3563 = vmatprep.subr.mxu0 0.0
    %3564 = vmatpush1.msra.mxu0 0.0
    %3565 = vmatprep.subr.mxu0 0.0
    %3566 = vmatpush1.msra.mxu0 0.0
    %3567 = vmatprep.mubr.f32.mxu0 0.0
    %3568 = vmatmul.mubr.f32.gmra.mrb[0].mxu0 %v3501
    %v3569 = vpop.f32.mrb[0].mxu0
    %v3570 = vadd.f32 0.0, %v3569
    %v3571 = vpop.f32.mrb[0].mxu0
    %3572 = vdwg.mxu0
    %v3574 = vsel %vm1023, %v3351, 0
    %3576 = vmatprep.subr.mxu0 0.0
    %3577 = vmatpush1.msra.mxu0 %v94
    %3578 = vmatprep.subr.mxu0 0.0
    %3579 = vmatpush1.msra.mxu0 0.0
    %3580 = vmatprep.subr.mxu0 0.0
    %3581 = vmatpush1.msra.mxu0 0.0
    %3582 = vmatprep.subr.mxu0 0.0
    %3583 = vmatpush1.msra.mxu0 0.0
    %3584 = vmatprep.subr.mxu0 0.0
    %3585 = vmatpush1.msra.mxu0 0.0
    %3586 = vmatprep.subr.mxu0 0.0
    %3587 = vmatpush1.msra.mxu0 0.0
    %3588 = vmatprep.subr.mxu0 0.0
    %3589 = vmatpush1.msra.mxu0 0.0
    %3590 = vmatprep.subr.mxu0 0.0
    %3591 = vmatpush1.msra.mxu0 0.0
    %3592 = vmatprep.subr.mxu0 0.0
    %3593 = vmatpush1.msra.mxu0 0.0
    %3594 = vmatprep.subr.mxu0 0.0
    %3595 = vmatpush1.msra.mxu0 0.0
    %3596 = vmatprep.subr.mxu0 0.0
    %3597 = vmatpush1.msra.mxu0 0.0
    %3598 = vmatprep.subr.mxu0 0.0
    %3599 = vmatpush1.msra.mxu0 0.0
    %3600 = vmatprep.subr.mxu0 0.0
    %3601 = vmatpush1.msra.mxu0 0.0
    %3602 = vmatprep.subr.mxu0 0.0
    %3603 = vmatpush1.msra.mxu0 0.0
    %3604 = vmatprep.subr.mxu0 0.0
    %3605 = vmatpush1.msra.mxu0 0.0
    %3606 = vmatprep.subr.mxu0 0.0
    %3607 = vmatpush1.msra.mxu0 0.0
    %3608 = vmatprep.subr.mxu0 0.0
    %3609 = vmatpush1.msra.mxu0 0.0
    %3610 = vmatprep.subr.mxu0 0.0
    %3611 = vmatpush1.msra.mxu0 0.0
    %3612 = vmatprep.subr.mxu0 0.0
    %3613 = vmatpush1.msra.mxu0 0.0
    %3614 = vmatprep.subr.mxu0 0.0
    %3615 = vmatpush1.msra.mxu0 0.0
    %3616 = vmatprep.subr.mxu0 0.0
    %3617 = vmatpush1.msra.mxu0 0.0
    %3618 = vmatprep.subr.mxu0 0.0
    %3619 = vmatpush1.msra.mxu0 0.0
    %3620 = vmatprep.subr.mxu0 0.0
    %3621 = vmatpush1.msra.mxu0 0.0
    %3622 = vmatprep.subr.mxu0 0.0
    %3623 = vmatpush1.msra.mxu0 0.0
    %3624 = vmatprep.subr.mxu0 0.0
    %3625 = vmatpush1.msra.mxu0 0.0
    %3626 = vmatprep.subr.mxu0 0.0
    %3627 = vmatpush1.msra.mxu0 0.0
    %3628 = vmatprep.subr.mxu0 0.0
    %3629 = vmatpush1.msra.mxu0 0.0
    %3630 = vmatprep.subr.mxu0 0.0
    %3631 = vmatpush1.msra.mxu0 0.0
    %3632 = vmatprep.subr.mxu0 0.0
    %3633 = vmatpush1.msra.mxu0 0.0
    %3634 = vmatprep.subr.mxu0 0.0
    %3635 = vmatpush1.msra.mxu0 0.0
    %3636 = vmatprep.subr.mxu0 0.0
    %3637 = vmatpush1.msra.mxu0 0.0
    %3638 = vmatprep.subr.mxu0 0.0
    %3639 = vmatpush1.msra.mxu0 0.0
    %3640 = vmatprep.mubr.f32.mxu0 0.0
    %3641 = vmatmul.mubr.f32.gmra.mrb[0].mxu0 %v3574
    %v3642 = vpop.f32.mrb[0].mxu0
    %v3643 = vadd.f32 0.0, %v3642
    %v3644 = vpop.f32.mrb[0].mxu0
    %3645 = vdwg.mxu0
    %v3647 = vsel %vm1023, %v3424, 0
    %3649 = vmatprep.subr.mxu0 0.0
    %3650 = vmatpush1.msra.mxu0 %v95
    %3651 = vmatprep.subr.mxu0 0.0
    %3652 = vmatpush1.msra.mxu0 0.0
    %3653 = vmatprep.subr.mxu0 0.0
    %3654 = vmatpush1.msra.mxu0 0.0
    %3655 = vmatprep.subr.mxu0 0.0
    %3656 = vmatpush1.msra.mxu0 0.0
    %3657 = vmatprep.subr.mxu0 0.0
    %3658 = vmatpush1.msra.mxu0 0.0
    %3659 = vmatprep.subr.mxu0 0.0
    %3660 = vmatpush1.msra.mxu0 0.0
    %3661 = vmatprep.subr.mxu0 0.0
    %3662 = vmatpush1.msra.mxu0 0.0
    %3663 = vmatprep.subr.mxu0 0.0
    %3664 = vmatpush1.msra.mxu0 0.0
    %3665 = vmatprep.subr.mxu0 0.0
    %3666 = vmatpush1.msra.mxu0 0.0
    %3667 = vmatprep.subr.mxu0 0.0
    %3668 = vmatpush1.msra.mxu0 0.0
    %3669 = vmatprep.subr.mxu0 0.0
    %3670 = vmatpush1.msra.mxu0 0.0
    %3671 = vmatprep.subr.mxu0 0.0
    %3672 = vmatpush1.msra.mxu0 0.0
    %3673 = vmatprep.subr.mxu0 0.0
    %3674 = vmatpush1.msra.mxu0 0.0
    %3675 = vmatprep.subr.mxu0 0.0
    %3676 = vmatpush1.msra.mxu0 0.0
    %3677 = vmatprep.subr.mxu0 0.0
    %3678 = vmatpush1.msra.mxu0 0.0
    %3679 = vmatprep.subr.mxu0 0.0
    %3680 = vmatpush1.msra.mxu0 0.0
    %3681 = vmatprep.subr.mxu0 0.0
    %3682 = vmatpush1.msra.mxu0 0.0
    %3683 = vmatprep.subr.mxu0 0.0
    %3684 = vmatpush1.msra.mxu0 0.0
    %3685 = vmatprep.subr.mxu0 0.0
    %3686 = vmatpush1.msra.mxu0 0.0
    %3687 = vmatprep.subr.mxu0 0.0
    %3688 = vmatpush1.msra.mxu0 0.0
    %3689 = vmatprep.subr.mxu0 0.0
    %3690 = vmatpush1.msra.mxu0 0.0
    %3691 = vmatprep.subr.mxu0 0.0
    %3692 = vmatpush1.msra.mxu0 0.0
    %3693 = vmatprep.subr.mxu0 0.0
    %3694 = vmatpush1.msra.mxu0 0.0
    %3695 = vmatprep.subr.mxu0 0.0
    %3696 = vmatpush1.msra.mxu0 0.0
    %3697 = vmatprep.subr.mxu0 0.0
    %3698 = vmatpush1.msra.mxu0 0.0
    %3699 = vmatprep.subr.mxu0 0.0
    %3700 = vmatpush1.msra.mxu0 0.0
    %3701 = vmatprep.subr.mxu0 0.0
    %3702 = vmatpush1.msra.mxu0 0.0
    %3703 = vmatprep.subr.mxu0 0.0
    %3704 = vmatpush1.msra.mxu0 0.0
    %3705 = vmatprep.subr.mxu0 0.0
    %3706 = vmatpush1.msra.mxu0 0.0
    %3707 = vmatprep.subr.mxu0 0.0
    %3708 = vmatpush1.msra.mxu0 0.0
    %3709 = vmatprep.subr.mxu0 0.0
    %3710 = vmatpush1.msra.mxu0 0.0
    %3711 = vmatprep.subr.mxu0 0.0
    %3712 = vmatpush1.msra.mxu0 0.0
    %3713 = vmatprep.mubr.f32.mxu0 0.0
    %3714 = vmatmul.mubr.f32.gmra.mrb[0].mxu0 %v3647
    %v3715 = vpop.f32.mrb[0].mxu0
    %v3716 = vadd.f32 0.0, %v3715
    %v3717 = vpop.f32.mrb[0].mxu0
    %3718 = vdwg.mxu0
    %v3720 = vsel %vm1023, %v3497, 0
    %3722 = vmatprep.subr.mxu0 0.0
    %3723 = vmatpush1.msra.mxu0 %v96
    %3724 = vmatprep.subr.mxu0 0.0
    %3725 = vmatpush1.msra.mxu0 0.0
    %3726 = vmatprep.subr.mxu0 0.0
    %3727 = vmatpush1.msra.mxu0 0.0
    %3728 = vmatprep.subr.mxu0 0.0
    %3729 = vmatpush1.msra.mxu0 0.0
    %3730 = vmatprep.subr.mxu0 0.0
    %3731 = vmatpush1.msra.mxu0 0.0
    %3732 = vmatprep.subr.mxu0 0.0
    %3733 = vmatpush1.msra.mxu0 0.0
    %3734 = vmatprep.subr.mxu0 0.0
    %3735 = vmatpush1.msra.mxu0 0.0
    %3736 = vmatprep.subr.mxu0 0.0
    %3737 = vmatpush1.msra.mxu0 0.0
    %3738 = vmatprep.subr.mxu0 0.0
    %3739 = vmatpush1.msra.mxu0 0.0
    %3740 = vmatprep.subr.mxu0 0.0
    %3741 = vmatpush1.msra.mxu0 0.0
    %3742 = vmatprep.subr.mxu0 0.0
    %3743 = vmatpush1.msra.mxu0 0.0
    %3744 = vmatprep.subr.mxu0 0.0
    %3745 = vmatpush1.msra.mxu0 0.0
    %3746 = vmatprep.subr.mxu0 0.0
    %3747 = vmatpush1.msra.mxu0 0.0
    %3748 = vmatprep.subr.mxu0 0.0
    %3749 = vmatpush1.msra.mxu0 0.0
    %3750 = vmatprep.subr.mxu0 0.0
    %3751 = vmatpush1.msra.mxu0 0.0
    %3752 = vmatprep.subr.mxu0 0.0
    %3753 = vmatpush1.msra.mxu0 0.0
    %3754 = vmatprep.subr.mxu0 0.0
    %3755 = vmatpush1.msra.mxu0 0.0
    %3756 = vmatprep.subr.mxu0 0.0
    %3757 = vmatpush1.msra.mxu0 0.0
    %3758 = vmatprep.subr.mxu0 0.0
    %3759 = vmatpush1.msra.mxu0 0.0
    %3760 = vmatprep.subr.mxu0 0.0
    %3761 = vmatpush1.msra.mxu0 0.0
    %3762 = vmatprep.subr.mxu0 0.0
    %3763 = vmatpush1.msra.mxu0 0.0
    %3764 = vmatprep.subr.mxu0 0.0
    %3765 = vmatpush1.msra.mxu0 0.0
    %3766 = vmatprep.subr.mxu0 0.0
    %3767 = vmatpush1.msra.mxu0 0.0
    %3768 = vmatprep.subr.mxu0 0.0
    %3769 = vmatpush1.msra.mxu0 0.0
    %3770 = vmatprep.subr.mxu0 0.0
    %3771 = vmatpush1.msra.mxu0 0.0
    %3772 = vmatprep.subr.mxu0 0.0
    %3773 = vmatpush1.msra.mxu0 0.0
    %3774 = vmatprep.subr.mxu0 0.0
    %3775 = vmatpush1.msra.mxu0 0.0
    %3776 = vmatprep.subr.mxu0 0.0
    %3777 = vmatpush1.msra.mxu0 0.0
    %3778 = vmatprep.subr.mxu0 0.0
    %3779 = vmatpush1.msra.mxu0 0.0
    %3780 = vmatprep.subr.mxu0 0.0
    %3781 = vmatpush1.msra.mxu0 0.0
    %3782 = vmatprep.subr.mxu0 0.0
    %3783 = vmatpush1.msra.mxu0 0.0
    %3784 = vmatprep.subr.mxu0 0.0
    %3785 = vmatpush1.msra.mxu0 0.0
    %3786 = vmatprep.mubr.f32.mxu0 0.0
    %3787 = vmatmul.mubr.f32.gmra.mrb[0].mxu0 %v3720
    %v3788 = vpop.f32.mrb[0].mxu0
    %v3789 = vadd.f32 0.0, %v3788
    %v3790 = vpop.f32.mrb[0].mxu0
    %3791 = vdwg.mxu0
    %v3792 = vsel %vm173, %v3570, 0.0
    %v3793 = vsel %vm173, %v3643, 0.0
    %v3794 = vadd.f32 %v3792, %v3793
    %v3795 = vsel %vm173, %v3716, 0.0
    %v3796 = vadd.f32 %v3794, %v3795
    %v3797 = vsel %vm173, %v3789, 0.0
    %v3798 = vadd.f32 %v3796, %v3797
    %v3799 = vadd.f32 %v3798, %v1983
    %s3800 = scalar_lea.vmem [#allocation2], 8
    %3801 = vst.msk [vmem:[%s3800] sm:$0xff] %vm173, %v3799
    // Predicated region
    $region34: #{tpu_custom_call.1} parent=1 // pred_check
      _
    $region35: #{tpu_custom_call.1} parent=1 // pred_check_branch
      %3803 = sbr.rel (0) target = $region37
    $region36: #{tpu_custom_call.1} parent=1 // pred_region
      %s3805 = ssub.s32 256, 256
      %3806 = vsyncadd [#allocation3], %s3805
      %s3807 = sshll.u32 [#allocation2], 4
      %s3808 = int_to_ptr.vmem [resolvable:$true] %s3807
      %3813 = dma.vmem_to_hbm [thread:$0]  %s3808, 256, %s8, [#allocation3], 128, 128, 8
    $region37: #{tpu_custom_call.1} parent=1 // pred_fallthru
      _
    // Predicated region
    $region38: #{tpu_custom_call.1} parent=1 // pred_check
      _
    $region39: #{tpu_custom_call.1} parent=1 // pred_check_branch
      %3815 = sbr.rel (0) target = $region41
    $region40: #{tpu_custom_call.1} parent=1 // pred_region
      %s3817 = ssub.s32 1024, 1024
      %3818 = vsyncadd [#allocation5], %s3817
      %s3819 = sshll.u32 [#allocation4], 4
      %s3820 = int_to_ptr.vmem [resolvable:$true] %s3819
      %3825 = dma.vmem_to_hbm [thread:$0]  %s3820, 1024, %s9, [#allocation5], 128, 128, 8
    $region41: #{tpu_custom_call.1} parent=1 // pred_fallthru
      _
    // Predicated region
    $region42: #{tpu_custom_call.1} parent=1 // pred_check
      _
    $region43: #{tpu_custom_call.1} parent=1 // pred_check_branch
      %3827 = sbr.rel (0) target = $region45
    $region44: #{tpu_custom_call.1} parent=1 // pred_region
      %3828 = dma.done [#allocation3], 256
    $region45: #{tpu_custom_call.1} parent=1 // pred_fallthru
      _
    // Predicated region
    $region46: #{tpu_custom_call.1} parent=1 // pred_check
      _
    $region47: #{tpu_custom_call.1} parent=1 // pred_check_branch
      %3830 = sbr.rel (0) target = $region49
    $region48: #{tpu_custom_call.1} parent=1 // pred_region
      %3831 = dma.done [#allocation5], 1024
    $region49: #{tpu_custom_call.1} parent=1 // pred_fallthru
      _
    %3832 = vsyncpa [#allocation3], 1
    %3833 = vsyncpa [#allocation5], 1

</llo_original>
